<compile_context>
chip_gen: v6e
topology: v6e:2x2x1
jax: 0.10.0
libtpu: 0.0.40
codegen_flags: <defaults>
</compile_context>

<pallas_src>
import functools

import jax
import jax.numpy as jnp
from jax.experimental import pallas as pl
from jax.experimental.pallas import tpu as pltpu

_BF16 = jnp.bfloat16


# ----------------------------------------------------------------------------
# Hardware-aware budgets / capabilities
# ----------------------------------------------------------------------------
@functools.lru_cache(maxsize=None)
def _vmem_limit_bytes():
    """Generation-aware VMEM limit: ~96 MiB on 128-MiB parts (v5e/v6e), 48 MiB on 64-MiB
    parts (v7x).  Falls back to the conservative 48 MiB if the query fails."""
    try:
        cap = int(pltpu.get_tpu_info().vmem_capacity_bytes)
    except Exception:  # pragma: no cover - depends on jax version / backend
        cap = 64 * 1024 * 1024
    return max(32 * 1024 * 1024, min(cap * 3 // 4, cap - 16 * 1024 * 1024))


@functools.lru_cache(maxsize=None)
def _buffered_one_supported():
    """Probe whether pipeline_mode=pl.Buffered(1) is accepted, so grid-invariant weight /
    scale / bias blocks can be single-buffered (saves ~4.5 MiB per 512x512 layer)."""
    def _copy(x_ref, o_ref):
        o_ref[...] = x_ref[...]
    try:
        x = jnp.zeros((8, 128), jnp.float32)
        out = pl.pallas_call(
            _copy,
            out_shape=jax.ShapeDtypeStruct((8, 128), jnp.float32),
            grid=(1,),
            in_specs=[pl.BlockSpec((8, 128), lambda i: (0, 0),
                                   pipeline_mode=pl.Buffered(1))],
            out_specs=pl.BlockSpec((8, 128), lambda i: (0, 0)),
        )(x)
        jax.block_until_ready(out)
        return True
    except Exception:  # pragma: no cover
        return False


def _const_spec(arr):
    """BlockSpec for a grid-invariant (VMEM-resident) operand; single-buffered when the
    runtime supports pl.Buffered(1), since its index_map is constant."""
    nd = arr.ndim
    index_map = lambda *_: (0,) * nd
    if _buffered_one_supported():
        return pl.BlockSpec(arr.shape, index_map, pipeline_mode=pl.Buffered(1))
    return pl.BlockSpec(arr.shape, index_map)


# ----------------------------------------------------------------------------
# In-kernel building blocks (shared by the fused-stage and tiled-layer kernels)
# ----------------------------------------------------------------------------
def _conv_bn_relu_unit(xp, w_ref, scale_ref, bias_ref):
    """3x3 stride-1 conv + folded BN + ReLU on a zero-padded activation value.

    xp       : (nb, H+2, W+2, Cin) bf16 value (padding = 1 already applied)
    w_ref    : (9*Cin, Cout) bf16 ref, tap-major (k = dy*3+dx)
    scale_ref: (1, Cout) f32 ref   gamma / sqrt(var + eps)
    bias_ref : (1, Cout) f32 ref   beta + (conv_b - mean) * scale
    returns  : (nb, H, W, Cout) f32
    """
    nb, hp2, wp2, cin = xp.shape
    h, w = hp2 - 2, wp2 - 2
    cout = w_ref.shape[-1]
    m = nb * h * w

    if cin >= 128:
        # Per-tap accumulating MXU dots: K = Cin is already deep, and this avoids
        # materializing a (M, 9*Cin) cols buffer (store-slot pressure, 2x peak VMEM).
        acc = jnp.zeros((m, cout), jnp.float32)
        for k in range(9):
            dy, dx = divmod(k, 3)
            tap = xp[:, dy:dy + h, dx:dx + w, :].reshape(m, cin)
            acc = acc + jnp.dot(tap, w_ref[k * cin:(k + 1) * cin, :],
                                preferred_element_type=jnp.float32)
    else:
        # Shallow channels (3 / 64): collapse the 9 taps into one deep-K GEMM.
        taps = [xp[:, dy:dy + h, dx:dx + w, :] for dy in range(3) for dx in range(3)]
        cols = jnp.concatenate(taps, axis=-1).reshape(m, 9 * cin)
        acc = jnp.dot(cols, w_ref[...], preferred_element_type=jnp.float32)

    y = jnp.maximum(acc * scale_ref[...] + bias_ref[...], 0.0)   # f32 epilogue
    return y.reshape(nb, h, w, cout)


def _maxpool2x2(y):
    """Fused MaxPool2d(2, 2).  H-direction max uses leading (untiled) dims only; only the
    W direction touches the sublane axis (single split-dim select)."""
    nb, h, w, c = y.shape
    y = y.reshape(nb, h // 2, 2, w, c)
    y = jnp.maximum(y[:, :, 0], y[:, :, 1])            # (nb, h//2, w, c)
    y = y.reshape(nb, h // 2, w // 2, 2, c)
    return jnp.maximum(y[:, :, :, 0, :], y[:, :, :, 1, :])


def _store_out(out_ref, y, flat_out):
    out = y.astype(out_ref.dtype)
    if flat_out:                                        # lane-dense store (W'*Cout lanes)
        nb, ho, wo, co = out.shape
        out = out.reshape(nb, ho, wo * co)
    out_ref[...] = out


# ----------------------------------------------------------------------------
# Kernel 1: fused stage (all convs between two pools) — activations stay in VMEM
# ----------------------------------------------------------------------------
def _fused_stage_kernel(*refs, n_convs, pool, flat_out):
    x_ref = refs[0]
    out_ref = refs[1 + 3 * n_convs]
    pad_bufs = refs[2 + 3 * n_convs:]                   # one padded-activation scratch per
    xp = x_ref[...]                                     # intermediate conv
    y = None
    for li in range(n_convs):
        w_ref, s_ref, b_ref = refs[1 + 3 * li], refs[2 + 3 * li], refs[3 + 3 * li]
        y = _conv_bn_relu_unit(xp, w_ref, s_ref, b_ref)    # (nb, H, W, Cout) f32
        if li + 1 < n_convs:
            # Re-apply zero padding in VMEM for the next fused conv (no HBM round trip).
            nb, h, w, c = y.shape
            pbuf = pad_bufs[li]
            pbuf[...] = jnp.zeros(pbuf.shape, pbuf.dtype)
            pbuf[:, 1:h + 1, 1:w + 1, :] = y.astype(_BF16)
            xp = pbuf[...]
    if pool:
        y = _maxpool2x2(y)
    _store_out(out_ref, y, flat_out)


# ----------------------------------------------------------------------------
# Kernel 2: large-image fallback — one conv, row-slab tiled, manual halo DMA
# ----------------------------------------------------------------------------
def _tiled_layer_kernel(x_hbm, w_ref, s_ref, b_ref, out_ref, xbuf, sem, *,
                        th, pool, flat_out):
    ni = pl.program_id(0)                               # image index
    ti = pl.program_id(1)                               # row-slab index
    # Overlapping (TH+2)-row halo window straight out of HBM: no wrapper-side slab
    # duplication / extra HBM pass.
    # TODO(synk): double-buffer this fetch (prefetch slab ti+1) to hide DMA latency.
    cp = pltpu.make_async_copy(
        x_hbm.at[pl.ds(ni, 1), pl.ds(ti * th, th + 2)], xbuf, sem)
    cp.start()
    cp.wait()
    y = _conv_bn_relu_unit(xbuf[...], w_ref, s_ref, b_ref)
    if pool:
        y = _maxpool2x2(y)
    _store_out(out_ref, y, flat_out)


# ----------------------------------------------------------------------------
# VMEM sizing helpers
# ----------------------------------------------------------------------------
def _pick_nb(n, h, w):
    """Fold the batch into the GEMM M axis for tiny spatial extents (raises MXU occupancy
    on the deep 4x4 / 2x2 layers and keeps M a multiple of 8)."""
    return n if h * w <= 64 else 1


def _chunk_vmem_bytes(h, w, nb, convs, pool):
    """Rough per-grid-step VMEM upper bound for a fused chunk."""
    cin0 = convs[0][0].shape[0] // 9
    total = 2 * nb * (h + 2) * (w + 2) * cin0 * 2            # input block (double buffered)
    peak = 0
    for idx, (w9, sc, bi) in enumerate(convs):
        ci, co = w9.shape[0] // 9, int(w9.shape[1])
        total += int(w9.size) * 2 + (int(sc.size) + int(bi.size)) * 4
        if idx + 1 < len(convs):
            total += nb * (h + 2) * (w + 2) * co * 2          # padded-activation scratch
        act = nb * h * w * co * 4                             # f32 accumulator / epilogue
        act += nb * h * w * (9 * ci if ci < 128 else ci) * 2  # cols (Cin<128) or tap copy
        peak = max(peak, act)
    co_last = int(convs[-1][0].shape[1])
    ho, wo = (h // 2, w // 2) if pool else (h, w)
    total += 2 * nb * ho * wo * co_last * 2                   # output block (double buffered)
    return total + peak


def _tile_vmem_bytes(th, w, cin, cout, pool):
    b = (th + 2) * (w + 2) * cin * 2                          # halo slab scratch
    b += 9 * cin * cout * 2 + cout * 8                        # weights + scale/bias
    b += th * w * (9 * cin if cin < 128 else cin) * 2         # cols / tap copy
    b += th * w * cout * 4                                    # f32 accumulator
    tho, wo = (th // 2, w // 2) if pool else (th, w)
    b += 2 * tho * wo * cout * 2                              # output block (double buffered)
    return b


def _pick_tile_h(h, w, cin, cout, pool, budget):
    best = None
    for t in range(1, h + 1):
        if h % t or (pool and t % 2):
            continue
        if _tile_vmem_bytes(t, w, cin, cout, pool) <= budget // 2:
            best = t
    # Divisor search guarantees no dropped rows; smallest legal slab as a last resort.
    return best if best is not None else (2 if pool else 1)


# ----------------------------------------------------------------------------
# Wrappers
# ----------------------------------------------------------------------------
def _run_fused_chunk(x, convs, pool, nb):
    n, h, w, cin = x.shape
    cout = int(convs[-1][0].shape[-1])
    if pool:
        assert h % 2 == 0 and w % 2 == 0
    assert n % nb == 0
    xp = jnp.pad(x.astype(_BF16), ((0, 0), (1, 1), (1, 1), (0, 0)))
    ho, wo = (h // 2, w // 2) if pool else (h, w)
    flat_out = cout < 128                                     # lane-dense store for Cout=64
    if flat_out:
        out_shape = jax.ShapeDtypeStruct((n, ho, wo * cout), _BF16)
        out_spec = pl.BlockSpec((nb, ho, wo * cout), lambda i: (i, 0, 0))
    else:
        out_shape = jax.ShapeDtypeStruct((n, ho, wo, cout), _BF16)
        out_spec = pl.BlockSpec((nb, ho, wo, cout), lambda i: (i, 0, 0, 0))

    in_specs = [pl.BlockSpec((nb, h + 2, w + 2, cin), lambda i: (i, 0, 0, 0))]
    args = [xp]
    for w9, sc, bi in convs:
        in_specs += [_const_spec(w9), _const_spec(sc), _const_spec(bi)]
        args += [w9, sc, bi]
    scratch_shapes = [pltpu.VMEM((nb, h + 2, w + 2, int(convs[i][0].shape[1])), _BF16)
                      for i in range(len(convs) - 1)]

    out = pl.pallas_call(
        functools.partial(_fused_stage_kernel, n_convs=len(convs),
                          pool=pool, flat_out=flat_out),
        out_shape=out_shape,
        grid=(n // nb,),
        in_specs=in_specs,
        out_specs=out_spec,
        scratch_shapes=scratch_shapes,
        compiler_params=pltpu.CompilerParams(
            dimension_semantics=("parallel",),
            vmem_limit_bytes=_vmem_limit_bytes()),
    )(*args)
    if flat_out:
        out = out.reshape(n, ho, wo, cout)
    return out


def _run_tiled_layer(x, conv, pool, force_th=None):
    """Large-image fallback: single conv, grid over (image, row-slab), overlapping halo
    windows DMA'd manually out of HBM."""
    w9, sc, bi = conv
    n, h, w, cin = x.shape
    cout = int(w9.shape[-1])
    if pool:
        assert h % 2 == 0 and w % 2 == 0
    budget = _vmem_limit_bytes()
    th = force_th if force_th is not None else _pick_tile_h(h, w, cin, cout, pool, budget)
    assert h % th == 0 and (not pool or th % 2 == 0)
    n_tiles = h // th
    tho, wo = (th // 2, w // 2) if pool else (th, w)
    ho = n_tiles * tho
    # Lane-dense output only when the flattened block keeps sublane alignment.
    flat_out = cout < 128 and (n_tiles == 1 or tho % 8 == 0)
    xp = jnp.pad(x.astype(_BF16), ((0, 0), (1, 1), (1, 1), (0, 0)))
    if flat_out:
        out_shape = jax.ShapeDtypeStruct((n, ho, wo * cout), _BF16)
        out_spec = pl.BlockSpec((1, tho, wo * cout), lambda ni, ti: (ni, ti, 0))
    else:
        out_shape = jax.ShapeDtypeStruct((n, ho, wo, cout), _BF16)
        out_spec = pl.BlockSpec((1, tho, wo, cout), lambda ni, ti: (ni, ti, 0, 0))

    out = pl.pallas_call(
        functools.partial(_tiled_layer_kernel, th=th, pool=pool, flat_out=flat_out),
        out_shape=out_shape,
        grid=(n, n_tiles),
        in_specs=[pl.BlockSpec(memory_space=pl.ANY),          # stays in HBM; manual halo DMA
                  _const_spec(w9), _const_spec(sc), _const_spec(bi)],
        out_specs=out_spec,
        scratch_shapes=[pltpu.VMEM((1, th + 2, w + 2, cin), _BF16),
                        pltpu.SemaphoreType.DMA(())],
        compiler_params=pltpu.CompilerParams(
            dimension_semantics=("parallel", "arbitrary"),
            vmem_limit_bytes=budget),
    )(xp, w9, sc, bi)
    if flat_out:
        out = out.reshape(n, ho, wo, cout)
    return out


def _run_stage(x, convs, pool):
    """Run one backbone stage (convs between two pools).  The whole stage is fused into one
    pallas_call when it fits the VMEM budget; otherwise it is split into smaller fused
    chunks, and a single conv that still does not fit falls back to the row-slab kernel."""
    budget = int(_vmem_limit_bytes() * 0.6)
    n, h, w, _ = x.shape
    i = 0
    while i < len(convs):
        j = len(convs)
        while j > i + 1 and _chunk_vmem_bytes(
                h, w, _pick_nb(n, h, w), convs[i:j], pool and j == len(convs)) > budget:
            j -= 1
        chunk = convs[i:j]
        do_pool = pool and j == len(convs)
        nb = _pick_nb(n, h, w)
        if nb > 1 and _chunk_vmem_bytes(h, w, nb, chunk, do_pool) > budget:
            nb = 1
        if len(chunk) == 1 and _chunk_vmem_bytes(h, w, nb, chunk, do_pool) > budget:
            x = _run_tiled_layer(x, chunk[0], do_pool)
        else:
            x = _run_fused_chunk(x, chunk, do_pool, nb)
        i = j
    return x


# ----------------------------------------------------------------------------
# Parameters (deterministic synthetic init, BatchNorm folded into scale/bias)
# ----------------------------------------------------------------------------
NODE_CFG = [64, 64, 'M', 128, 128, 'M', 256, 256, 256, 'M', 512, 512]   # ..relu4_2
EDGE_CFG = [512, 'M', 512]                                               # ..relu5_1


def _cfg_to_stages(cfg):
    stages, cur = [], []
    for v in cfg:
        if v == 'M':
            assert cur, "a stage must not start with 'M'"
            stages.append((cur, True))
            cur = []
        else:
            cur.append(v)
    if cur:
        stages.append((cur, False))
    return stages


def init_conv_bn(key, cin, cout):
    k1, k2, k3, k4, k5, k6 = jax.random.split(key, 6)
    w = jax.random.normal(k1, (3, 3, cin, cout), jnp.float32) * jnp.sqrt(2.0 / (9 * cin))
    b = jax.random.normal(k2, (cout,), jnp.float32) * 0.01
    gamma = 1.0 + 0.1 * jax.random.normal(k3, (cout,), jnp.float32)
    beta = 0.1 * jax.random.normal(k4, (cout,), jnp.float32)
    mean = 0.1 * jax.random.normal(k5, (cout,), jnp.float32)
    var = jnp.abs(1.0 + 0.1 * jax.random.normal(k6, (cout,), jnp.float32))
    scale = gamma / jnp.sqrt(var + 1e-5)                 # BN folded (eval mode)
    bias = beta + (b - mean) * scale
    w9 = w.reshape(9 * cin, cout).astype(_BF16)          # tap-major (k = dy*3 + dx)
    return (w9, scale.reshape(1, cout), bias.reshape(1, cout))


def build_stage_params(key, cin, stage_cfgs):
    stages = []
    for chans, pool in stage_cfgs:
        convs = []
        for c in chans:
            key, sub = jax.random.split(key)
            convs.append(init_conv_bn(sub, cin, c))
            cin = c
        stages.append((convs, pool))
    return stages, cin, key


# ----------------------------------------------------------------------------
# bf16-matched XLA reference (guards numerics of the fused bf16 MXU path)
# ----------------------------------------------------------------------------
def _ref_conv_bn_relu(x, w9, scale, bias):
    cin, cout = w9.shape[0] // 9, w9.shape[1]
    w4 = w9.astype(jnp.float32).reshape(3, 3, cin, cout)
    y = jax.lax.conv_general_dilated(
        x.astype(jnp.float32), w4, window_strides=(1, 1), padding='SAME',
        dimension_numbers=('NHWC', 'HWIO', 'NHWC'))
    return jnp.maximum(y * scale.reshape(1, 1, 1, -1) + bias.reshape(1, 1, 1, -1), 0.0)


def _ref_stage(x_bf16, convs, pool):
    x = x_bf16
    y = None
    for i, (w9, sc, bi) in enumerate(convs):
        y = _ref_conv_bn_relu(x, w9, sc, bi)
        if i + 1 < len(convs):
            x = y.astype(_BF16)
    if pool:
        n, h, w, c = y.shape
        y = y.reshape(n, h // 2, 2, w // 2, 2, c).max(axis=(2, 4))
    return y.astype(_BF16)


def _check_close(got_bf16, ref_bf16, rel, what):
    g = got_bf16.astype(jnp.float32)
    r = ref_bf16.astype(jnp.float32)
    err = float(jnp.max(jnp.abs(g - r)))
    tol = rel * (float(jnp.max(jnp.abs(r))) + 1.0)
    assert err <= tol, (what, err, tol)


def _self_test(key):
    k1, k2, k3, k4 = jax.random.split(key, 4)
    # 1) Fused 2-conv stage + pool, batch folded into M.  Exercises both the deep-K concat
    #    path (Cin=64) and the per-tap accumulating path (Cin=128).
    x = jax.random.normal(k1, (2, 8, 8, 64), jnp.float32).astype(_BF16)
    convs = [init_conv_bn(k2, 64, 128), init_conv_bn(k3, 128, 128)]
    got = _run_fused_chunk(x, convs, True, _pick_nb(2, 8, 8))
    _check_close(got, _ref_stage(x, convs, True), 2e-2, "fused stage")
    # 2) Row-slab fallback with manual halo DMA (forced to 2 slabs).
    x2 = jax.random.normal(k4, (1, 8, 8, 16), jnp.float32).astype(_BF16)
    conv2 = init_conv_bn(jax.random.fold_in(key, 7), 16, 64)
    got2 = _run_tiled_layer(x2, conv2, True, force_th=4)
    _check_close(got2, _ref_stage(x2, [conv2], True), 2e-2, "tiled layer")


# ----------------------------------------------------------------------------
# Main
# ----------------------------------------------------------------------------
if __name__ == "__main__":
    key = jax.random.PRNGKey(0)
    kx, kt, kp = jax.random.split(key, 3)

    _self_test(kt)

    node_stage_cfgs = _cfg_to_stages(NODE_CFG)
    edge_stage_cfgs = _cfg_to_stages(EDGE_CFG)
    node_stages, c_node, kp = build_stage_params(kp, 3, node_stage_cfgs)
    edge_stages, _, kp = build_stage_params(kp, c_node, edge_stage_cfgs)

    # Small ImageNet-style input: N=2, C=3, H=W=32 (PyTorch NCHW convention).
    x_nchw = jax.random.normal(kx, (2, 3, 32, 32), dtype=jnp.float32)
    x = jnp.transpose(x_nchw, (0, 2, 3, 1)).astype(_BF16)     # NCHW -> NHWC

    feat = x
    for convs, pool in node_stages:
        feat = _run_stage(feat, convs, pool)
    node_feat = feat                                          # relu4_2 features
    for convs, pool in edge_stages:
        feat = _run_stage(feat, convs, pool)
    edge_feat = feat                                          # relu5_1 features

    node_feat, edge_feat = jax.block_until_ready((node_feat, edge_feat))

    # NHWC shapes; equivalent NCHW: node (2,512,4,4), edge (2,512,2,2).
    assert node_feat.shape == (2, 4, 4, 512), node_feat.shape
    assert edge_feat.shape == (2, 2, 2, 512), edge_feat.shape

    # End-to-end drift check vs a bf16-matched XLA reference (review correctness concern).
    ref = x
    for convs, pool in node_stages:
        ref = _ref_stage(ref, convs, pool)
    ref_node = ref
    for convs, pool in edge_stages:
        ref = _ref_stage(ref, convs, pool)
    ref_edge = ref
    _check_close(node_feat, ref_node, 1e-1, "node_feat end-to-end")
    _check_close(edge_feat, ref_edge, 1e-1, "edge_feat end-to-end")
    assert bool(jnp.all(jnp.isfinite(node_feat.astype(jnp.float32))))
    assert bool(jnp.all(jnp.isfinite(edge_feat.astype(jnp.float32))))

    print("KERNEL_OK")
</pallas_src>

<mosaic_0001>
module attributes {stable_mosaic.version = 11 : i64} {
  func.func @_copy(%arg0: i32, %arg1: memref<8x128xf32, #tpu.memory_space<vmem>>, %arg2: memref<8x128xf32, #tpu.memory_space<vmem>>) attributes {dimension_semantics = [#tpu.dimension_semantics<arbitrary>], iteration_bounds = array<i64: 1>, scalar_prefetch = 0 : i64, scratch_operands = 0 : i64, tpu.core_type = #tpu.core_type<tc>, window_params = [{pipeline_mode = #tpu.pipeline_mode<synchronous>, transform_indices = @transform_0, window_bounds = array<i64: 8, 128>}, {pipeline_mode = #tpu.pipeline_mode<synchronous>, transform_indices = @transform_1, window_bounds = array<i64: 8, 128>}]} {
    %c0 = arith.constant 0 : index
    %c0_0 = arith.constant 0 : index
    %0 = vector.load %arg1[%c0, %c0_0] : memref<8x128xf32, #tpu.memory_space<vmem>>, vector<8x128xf32>
    %c0_1 = arith.constant 0 : index
    %c0_2 = arith.constant 0 : index
    %1 = vector.load %arg2[%c0_1, %c0_2] : memref<8x128xf32, #tpu.memory_space<vmem>>, vector<8x128xf32>
    tpu.vector_store %arg2[%c0_1, %c0_2], %0 {strides = array<i32>} : memref<8x128xf32, #tpu.memory_space<vmem>>, vector<8x128xf32>,
    return
  }
  func.func @transform_0(%arg0: i32) -> (i32, i32) {
    %c0_i32 = arith.constant 0 : i32
    %c0_i32_0 = arith.constant 0 : i32
    %c0_i32_1 = arith.constant 0 : i32
    return %c0_i32, %c0_i32_0 : i32, i32
  }
  func.func @transform_1(%arg0: i32) -> (i32, i32) {
    %c0_i32 = arith.constant 0 : i32
    %c0_i32_0 = arith.constant 0 : i32
    %c0_i32_1 = arith.constant 0 : i32
    return %c0_i32, %c0_i32_0 : i32, i32
  }
}

module attributes {stable_mosaic.version = 11 : i64} {
  func.func @_fused_stage_kernel(%arg0: i32, %arg1: memref<2x10x10x64xbf16, #tpu.memory_space<vmem>>, %arg2: memref<576x128xbf16, #tpu.memory_space<vmem>>, %arg3: memref<1x128xf32, #tpu.memory_space<vmem>>, %arg4: memref<1x128xf32, #tpu.memory_space<vmem>>, %arg5: memref<1152x128xbf16, #tpu.memory_space<vmem>>, %arg6: memref<1x128xf32, #tpu.memory_space<vmem>>, %arg7: memref<1x128xf32, #tpu.memory_space<vmem>>, %arg8: memref<2x4x4x128xbf16, #tpu.memory_space<vmem>>, %arg9: memref<2x10x10x128xbf16, #tpu.memory_space<vmem>>) attributes {dimension_semantics = [#tpu.dimension_semantics<parallel>], iteration_bounds = array<i64: 1>, scalar_prefetch = 0 : i64, scratch_operands = 1 : i64, tpu.core_type = #tpu.core_type<tc>, window_params = [{transform_indices = @transform_0, window_bounds = array<i64: 2, 10, 10, 64>}, {pipeline_mode = #tpu.pipeline_mode<synchronous>, transform_indices = @transform_1, window_bounds = array<i64: 576, 128>}, {pipeline_mode = #tpu.pipeline_mode<synchronous>, transform_indices = @transform_2, window_bounds = array<i64: 1, 128>}, {pipeline_mode = #tpu.pipeline_mode<synchronous>, transform_indices = @transform_3, window_bounds = array<i64: 1, 128>}, {pipeline_mode = #tpu.pipeline_mode<synchronous>, transform_indices = @transform_4, window_bounds = array<i64: 1152, 128>}, {pipeline_mode = #tpu.pipeline_mode<synchronous>, transform_indices = @transform_5, window_bounds = array<i64: 1, 128>}, {pipeline_mode = #tpu.pipeline_mode<synchronous>, transform_indices = @transform_6, window_bounds = array<i64: 1, 128>}, {transform_indices = @transform_7, window_bounds = array<i64: 2, 4, 4, 128>}]} {
    %c0 = arith.constant 0 : index
    %c0_0 = arith.constant 0 : index
    %c0_1 = arith.constant 0 : index
    %c0_2 = arith.constant 0 : index
    %0 = vector.load %arg1[%c0, %c0_0, %c0_1, %c0_2] : memref<2x10x10x64xbf16, #tpu.memory_space<vmem>>, vector<2x10x10x64xbf16>
    %1 = vector.extract_strided_slice %0 {offsets = [0, 0, 0, 0], sizes = [2, 8, 8, 64], strides = [1, 1, 1, 1]} : vector<2x10x10x64xbf16> to vector<2x8x8x64xbf16>
    %2 = vector.extract_strided_slice %0 {offsets = [0, 0, 1, 0], sizes = [2, 8, 8, 64], strides = [1, 1, 1, 1]} : vector<2x10x10x64xbf16> to vector<2x8x8x64xbf16>
    %3 = vector.extract_strided_slice %0 {offsets = [0, 0, 2, 0], sizes = [2, 8, 8, 64], strides = [1, 1, 1, 1]} : vector<2x10x10x64xbf16> to vector<2x8x8x64xbf16>
    %4 = vector.extract_strided_slice %0 {offsets = [0, 1, 0, 0], sizes = [2, 8, 8, 64], strides = [1, 1, 1, 1]} : vector<2x10x10x64xbf16> to vector<2x8x8x64xbf16>
    %5 = vector.extract_strided_slice %0 {offsets = [0, 1, 1, 0], sizes = [2, 8, 8, 64], strides = [1, 1, 1, 1]} : vector<2x10x10x64xbf16> to vector<2x8x8x64xbf16>
    %6 = vector.extract_strided_slice %0 {offsets = [0, 1, 2, 0], sizes = [2, 8, 8, 64], strides = [1, 1, 1, 1]} : vector<2x10x10x64xbf16> to vector<2x8x8x64xbf16>
    %7 = vector.extract_strided_slice %0 {offsets = [0, 2, 0, 0], sizes = [2, 8, 8, 64], strides = [1, 1, 1, 1]} : vector<2x10x10x64xbf16> to vector<2x8x8x64xbf16>
    %8 = vector.extract_strided_slice %0 {offsets = [0, 2, 1, 0], sizes = [2, 8, 8, 64], strides = [1, 1, 1, 1]} : vector<2x10x10x64xbf16> to vector<2x8x8x64xbf16>
    %9 = vector.extract_strided_slice %0 {offsets = [0, 2, 2, 0], sizes = [2, 8, 8, 64], strides = [1, 1, 1, 1]} : vector<2x10x10x64xbf16> to vector<2x8x8x64xbf16>
    %10 = tpu.concatenate %1, %2, %3, %4, %5, %6, %7, %8, %9 in 3 : vector<2x8x8x64xbf16>, vector<2x8x8x64xbf16>, vector<2x8x8x64xbf16>, vector<2x8x8x64xbf16>, vector<2x8x8x64xbf16>, vector<2x8x8x64xbf16>, vector<2x8x8x64xbf16>, vector<2x8x8x64xbf16>, vector<2x8x8x64xbf16> -> vector<2x8x8x576xbf16>
    %11 = vector.shape_cast %10 : vector<2x8x8x576xbf16> to vector<128x576xbf16>
    %c0_3 = arith.constant 0 : index
    %c0_4 = arith.constant 0 : index
    %12 = vector.load %arg2[%c0_3, %c0_4] : memref<576x128xbf16, #tpu.memory_space<vmem>>, vector<576x128xbf16>
    %cst = arith.constant dense<0.000000e+00> : vector<128x128xf32>
    %13 = tpu.matmul %11, %12, %cst {dimension_numbers = #tpu.dot_dimension_numbers<[1], [0], [0], [1], [0, 0, 1, 1], [], []>} : vector<128x576xbf16>, vector<576x128xbf16>, vector<128x128xf32> -> vector<128x128xf32>
    %c0_5 = arith.constant 0 : index
    %c0_6 = arith.constant 0 : index
    %14 = vector.load %arg3[%c0_5, %c0_6] : memref<1x128xf32, #tpu.memory_space<vmem>>, vector<1x128xf32>
    %15 = vector.broadcast %14 : vector<1x128xf32> to vector<128x128xf32>
    %16 = arith.mulf %13, %15 : vector<128x128xf32>
    %c0_7 = arith.constant 0 : index
    %c0_8 = arith.constant 0 : index
    %17 = vector.load %arg4[%c0_7, %c0_8] : memref<1x128xf32, #tpu.memory_space<vmem>>, vector<1x128xf32>
    %18 = vector.broadcast %17 : vector<1x128xf32> to vector<128x128xf32>
    %19 = arith.addf %16, %18 : vector<128x128xf32>
    %cst_9 = arith.constant 0.000000e+00 : f32
    %20 = vector.broadcast %cst_9 : f32 to vector<128x128xf32>
    %21 = arith.maximumf %19, %20 : vector<128x128xf32>
    %22 = vector.shape_cast %21 : vector<128x128xf32> to vector<2x8x8x128xf32>
    %cst_10 = arith.constant 0.000000e+00 : bf16
    %23 = vector.broadcast %cst_10 : bf16 to vector<2x10x10x128xbf16>
    %c0_11 = arith.constant 0 : index
    %c0_12 = arith.constant 0 : index
    %c0_13 = arith.constant 0 : index
    %c0_14 = arith.constant 0 : index
    %24 = vector.load %arg9[%c0_11, %c0_12, %c0_13, %c0_14] : memref<2x10x10x128xbf16, #tpu.memory_space<vmem>>, vector<2x10x10x128xbf16>
    tpu.vector_store %arg9[%c0_11, %c0_12, %c0_13, %c0_14], %23 {strides = array<i32>} : memref<2x10x10x128xbf16, #tpu.memory_space<vmem>>, vector<2x10x10x128xbf16>,
    %25 = arith.truncf %22 : vector<2x8x8x128xf32> to vector<2x8x8x128xbf16>
    %c0_15 = arith.constant 0 : index
    %c1 = arith.constant 1 : index
    %c1_16 = arith.constant 1 : index
    %c0_17 = arith.constant 0 : index
    %26 = vector.load %arg9[%c0_15, %c1, %c1_16, %c0_17] : memref<2x10x10x128xbf16, #tpu.memory_space<vmem>>, vector<2x8x8x128xbf16>
    tpu.vector_store %arg9[%c0_15, %c1, %c1_16, %c0_17], %25 {strides = array<i32>} : memref<2x10x10x128xbf16, #tpu.memory_space<vmem>>, vector<2x8x8x128xbf16>,
    %c0_18 = arith.constant 0 : index
    %c0_19 = arith.constant 0 : index
    %c0_20 = arith.constant 0 : index
    %c0_21 = arith.constant 0 : index
    %27 = vector.load %arg9[%c0_18, %c0_19, %c0_20, %c0_21] : memref<2x10x10x128xbf16, #tpu.memory_space<vmem>>, vector<2x10x10x128xbf16>
    %cst_22 = arith.constant 0.000000e+00 : f32
    %28 = vector.broadcast %cst_22 : f32 to vector<128x128xf32>
    %29 = vector.extract_strided_slice %27 {offsets = [0, 0, 0, 0], sizes = [2, 8, 8, 128], strides = [1, 1, 1, 1]} : vector<2x10x10x128xbf16> to vector<2x8x8x128xbf16>
    %30 = vector.shape_cast %29 : vector<2x8x8x128xbf16> to vector<128x128xbf16>
    %c0_23 = arith.constant 0 : index
    %c0_24 = arith.constant 0 : index
    %31 = vector.load %arg5[%c0_23, %c0_24] : memref<1152x128xbf16, #tpu.memory_space<vmem>>, vector<128x128xbf16>
    %cst_25 = arith.constant dense<0.000000e+00> : vector<128x128xf32>
    %32 = tpu.matmul %30, %31, %cst_25 {dimension_numbers = #tpu.dot_dimension_numbers<[1], [0], [0], [1], [0, 0, 1, 1], [], []>} : vector<128x128xbf16>, vector<128x128xbf16>, vector<128x128xf32> -> vector<128x128xf32>
    %33 = arith.addf %28, %32 : vector<128x128xf32>
    %34 = vector.extract_strided_slice %27 {offsets = [0, 0, 1, 0], sizes = [2, 8, 8, 128], strides = [1, 1, 1, 1]} : vector<2x10x10x128xbf16> to vector<2x8x8x128xbf16>
    %35 = vector.shape_cast %34 : vector<2x8x8x128xbf16> to vector<128x128xbf16>
    %c128 = arith.constant 128 : index
    %c0_26 = arith.constant 0 : index
    %36 = vector.load %arg5[%c128, %c0_26] : memref<1152x128xbf16, #tpu.memory_space<vmem>>, vector<128x128xbf16>
    %cst_27 = arith.constant dense<0.000000e+00> : vector<128x128xf32>
    %37 = tpu.matmul %35, %36, %cst_27 {dimension_numbers = #tpu.dot_dimension_numbers<[1], [0], [0], [1], [0, 0, 1, 1], [], []>} : vector<128x128xbf16>, vector<128x128xbf16>, vector<128x128xf32> -> vector<128x128xf32>
    %38 = arith.addf %33, %37 : vector<128x128xf32>
    %39 = vector.extract_strided_slice %27 {offsets = [0, 0, 2, 0], sizes = [2, 8, 8, 128], strides = [1, 1, 1, 1]} : vector<2x10x10x128xbf16> to vector<2x8x8x128xbf16>
    %40 = vector.shape_cast %39 : vector<2x8x8x128xbf16> to vector<128x128xbf16>
    %c256 = arith.constant 256 : index
    %c0_28 = arith.constant 0 : index
    %41 = vector.load %arg5[%c256, %c0_28] : memref<1152x128xbf16, #tpu.memory_space<vmem>>, vector<128x128xbf16>
    %cst_29 = arith.constant dense<0.000000e+00> : vector<128x128xf32>
    %42 = tpu.matmul %40, %41, %cst_29 {dimension_numbers = #tpu.dot_dimension_numbers<[1], [0], [0], [1], [0, 0, 1, 1], [], []>} : vector<128x128xbf16>, vector<128x128xbf16>, vector<128x128xf32> -> vector<128x128xf32>
    %43 = arith.addf %38, %42 : vector<128x128xf32>
    %44 = vector.extract_strided_slice %27 {offsets = [0, 1, 0, 0], sizes = [2, 8, 8, 128], strides = [1, 1, 1, 1]} : vector<2x10x10x128xbf16> to vector<2x8x8x128xbf16>
    %45 = vector.shape_cast %44 : vector<2x8x8x128xbf16> to vector<128x128xbf16>
    %c384 = arith.constant 384 : index
    %c0_30 = arith.constant 0 : index
    %46 = vector.load %arg5[%c384, %c0_30] : memref<1152x128xbf16, #tpu.memory_space<vmem>>, vector<128x128xbf16>
    %cst_31 = arith.constant dense<0.000000e+00> : vector<128x128xf32>
    %47 = tpu.matmul %45, %46, %cst_31 {dimension_numbers = #tpu.dot_dimension_numbers<[1], [0], [0], [1], [0, 0, 1, 1], [], []>} : vector<128x128xbf16>, vector<128x128xbf16>, vector<128x128xf32> -> vector<128x128xf32>
    %48 = arith.addf %43, %47 : vector<128x128xf32>
    %49 = vector.extract_strided_slice %27 {offsets = [0, 1, 1, 0], sizes = [2, 8, 8, 128], strides = [1, 1, 1, 1]} : vector<2x10x10x128xbf16> to vector<2x8x8x128xbf16>
    %50 = vector.shape_cast %49 : vector<2x8x8x128xbf16> to vector<128x128xbf16>
    %c512 = arith.constant 512 : index
    %c0_32 = arith.constant 0 : index
    %51 = vector.load %arg5[%c512, %c0_32] : memref<1152x128xbf16, #tpu.memory_space<vmem>>, vector<128x128xbf16>
    %cst_33 = arith.constant dense<0.000000e+00> : vector<128x128xf32>
    %52 = tpu.matmul %50, %51, %cst_33 {dimension_numbers = #tpu.dot_dimension_numbers<[1], [0], [0], [1], [0, 0, 1, 1], [], []>} : vector<128x128xbf16>, vector<128x128xbf16>, vector<128x128xf32> -> vector<128x128xf32>
    %53 = arith.addf %48, %52 : vector<128x128xf32>
    %54 = vector.extract_strided_slice %27 {offsets = [0, 1, 2, 0], sizes = [2, 8, 8, 128], strides = [1, 1, 1, 1]} : vector<2x10x10x128xbf16> to vector<2x8x8x128xbf16>
    %55 = vector.shape_cast %54 : vector<2x8x8x128xbf16> to vector<128x128xbf16>
    %c640 = arith.constant 640 : index
    %c0_34 = arith.constant 0 : index
    %56 = vector.load %arg5[%c640, %c0_34] : memref<1152x128xbf16, #tpu.memory_space<vmem>>, vector<128x128xbf16>
    %cst_35 = arith.constant dense<0.000000e+00> : vector<128x128xf32>
    %57 = tpu.matmul %55, %56, %cst_35 {dimension_numbers = #tpu.dot_dimension_numbers<[1], [0], [0], [1], [0, 0, 1, 1], [], []>} : vector<128x128xbf16>, vector<128x128xbf16>, vector<128x128xf32> -> vector<128x128xf32>
    %58 = arith.addf %53, %57 : vector<128x128xf32>
    %59 = vector.extract_strided_slice %27 {offsets = [0, 2, 0, 0], sizes = [2, 8, 8, 128], strides = [1, 1, 1, 1]} : vector<2x10x10x128xbf16> to vector<2x8x8x128xbf16>
    %60 = vector.shape_cast %59 : vector<2x8x8x128xbf16> to vector<128x128xbf16>
    %c768 = arith.constant 768 : index
    %c0_36 = arith.constant 0 : index
    %61 = vector.load %arg5[%c768, %c0_36] : memref<1152x128xbf16, #tpu.memory_space<vmem>>, vector<128x128xbf16>
    %cst_37 = arith.constant dense<0.000000e+00> : vector<128x128xf32>
    %62 = tpu.matmul %60, %61, %cst_37 {dimension_numbers = #tpu.dot_dimension_numbers<[1], [0], [0], [1], [0, 0, 1, 1], [], []>} : vector<128x128xbf16>, vector<128x128xbf16>, vector<128x128xf32> -> vector<128x128xf32>
    %63 = arith.addf %58, %62 : vector<128x128xf32>
    %64 = vector.extract_strided_slice %27 {offsets = [0, 2, 1, 0], sizes = [2, 8, 8, 128], strides = [1, 1, 1, 1]} : vector<2x10x10x128xbf16> to vector<2x8x8x128xbf16>
    %65 = vector.shape_cast %64 : vector<2x8x8x128xbf16> to vector<128x128xbf16>
    %c896 = arith.constant 896 : index
    %c0_38 = arith.constant 0 : index
    %66 = vector.load %arg5[%c896, %c0_38] : memref<1152x128xbf16, #tpu.memory_space<vmem>>, vector<128x128xbf16>
    %cst_39 = arith.constant dense<0.000000e+00> : vector<128x128xf32>
    %67 = tpu.matmul %65, %66, %cst_39 {dimension_numbers = #tpu.dot_dimension_numbers<[1], [0], [0], [1], [0, 0, 1, 1], [], []>} : vector<128x128xbf16>, vector<128x128xbf16>, vector<128x128xf32> -> vector<128x128xf32>
    %68 = arith.addf %63, %67 : vector<128x128xf32>
    %69 = vector.extract_strided_slice %27 {offsets = [0, 2, 2, 0], sizes = [2, 8, 8, 128], strides = [1, 1, 1, 1]} : vector<2x10x10x128xbf16> to vector<2x8x8x128xbf16>
    %70 = vector.shape_cast %69 : vector<2x8x8x128xbf16> to vector<128x128xbf16>
    %c1024 = arith.constant 1024 : index
    %c0_40 = arith.constant 0 : index
    %71 = vector.load %arg5[%c1024, %c0_40] : memref<1152x128xbf16, #tpu.memory_space<vmem>>, vector<128x128xbf16>
    %cst_41 = arith.constant dense<0.000000e+00> : vector<128x128xf32>
    %72 = tpu.matmul %70, %71, %cst_41 {dimension_numbers = #tpu.dot_dimension_numbers<[1], [0], [0], [1], [0, 0, 1, 1], [], []>} : vector<128x128xbf16>, vector<128x128xbf16>, vector<128x128xf32> -> vector<128x128xf32>
    %73 = arith.addf %68, %72 : vector<128x128xf32>
    %c0_42 = arith.constant 0 : index
    %c0_43 = arith.constant 0 : index
    %74 = vector.load %arg6[%c0_42, %c0_43] : memref<1x128xf32, #tpu.memory_space<vmem>>, vector<1x128xf32>
    %75 = vector.broadcast %74 : vector<1x128xf32> to vector<128x128xf32>
    %76 = arith.mulf %73, %75 : vector<128x128xf32>
    %c0_44 = arith.constant 0 : index
    %c0_45 = arith.constant 0 : index
    %77 = vector.load %arg7[%c0_44, %c0_45] : memref<1x128xf32, #tpu.memory_space<vmem>>, vector<1x128xf32>
    %78 = vector.broadcast %77 : vector<1x128xf32> to vector<128x128xf32>
    %79 = arith.addf %76, %78 : vector<128x128xf32>
    %cst_46 = arith.constant 0.000000e+00 : f32
    %80 = vector.broadcast %cst_46 : f32 to vector<128x128xf32>
    %81 = arith.maximumf %79, %80 : vector<128x128xf32>
    %82 = vector.shape_cast %81 : vector<128x128xf32> to vector<2x8x8x128xf32>
    %83 = vector.shape_cast %82 : vector<2x8x8x128xf32> to vector<2x4x2x8x128xf32>
    %84 = vector.extract_strided_slice %83 {offsets = [0, 0, 0, 0, 0], sizes = [2, 4, 1, 8, 128], strides = [1, 1, 1, 1, 1]} : vector<2x4x2x8x128xf32> to vector<2x4x1x8x128xf32>
    %85 = vector.shape_cast %84 : vector<2x4x1x8x128xf32> to vector<2x4x8x128xf32>
    %86 = vector.extract_strided_slice %83 {offsets = [0, 0, 1, 0, 0], sizes = [2, 4, 1, 8, 128], strides = [1, 1, 1, 1, 1]} : vector<2x4x2x8x128xf32> to vector<2x4x1x8x128xf32>
    %87 = vector.shape_cast %86 : vector<2x4x1x8x128xf32> to vector<2x4x8x128xf32>
    %88 = arith.maximumf %85, %87 : vector<2x4x8x128xf32>
    %89 = vector.shape_cast %88 : vector<2x4x8x128xf32> to vector<2x4x4x2x128xf32>
    %90 = vector.extract_strided_slice %89 {offsets = [0, 0, 0, 0, 0], sizes = [2, 4, 4, 1, 128], strides = [1, 1, 1, 1, 1]} : vector<2x4x4x2x128xf32> to vector<2x4x4x1x128xf32>
    %91 = vector.shape_cast %90 : vector<2x4x4x1x128xf32> to vector<2x4x4x128xf32>
    %92 = vector.extract_strided_slice %89 {offsets = [0, 0, 0, 1, 0], sizes = [2, 4, 4, 1, 128], strides = [1, 1, 1, 1, 1]} : vector<2x4x4x2x128xf32> to vector<2x4x4x1x128xf32>
    %93 = vector.shape_cast %92 : vector<2x4x4x1x128xf32> to vector<2x4x4x128xf32>
    %94 = arith.maximumf %91, %93 : vector<2x4x4x128xf32>
    %95 = arith.truncf %94 : vector<2x4x4x128xf32> to vector<2x4x4x128xbf16>
    %c0_47 = arith.constant 0 : index
    %c0_48 = arith.constant 0 : index
    %c0_49 = arith.constant 0 : index
    %c0_50 = arith.constant 0 : index
    %96 = vector.load %arg8[%c0_47, %c0_48, %c0_49, %c0_50] : memref<2x4x4x128xbf16, #tpu.memory_space<vmem>>, vector<2x4x4x128xbf16>
    tpu.vector_store %arg8[%c0_47, %c0_48, %c0_49, %c0_50], %95 {strides = array<i32>} : memref<2x4x4x128xbf16, #tpu.memory_space<vmem>>, vector<2x4x4x128xbf16>,
    return
  }
  func.func @transform_0(%arg0: i32) -> (i32, i32, i32, i32) {
    %c0_i32 = arith.constant 0 : i32
    %c0_i32_0 = arith.constant 0 : i32
    %c0_i32_1 = arith.constant 0 : i32
    %c0_i32_2 = arith.constant 0 : i32
    return %arg0, %c0_i32, %c0_i32_0, %c0_i32_1 : i32, i32, i32, i32
  }
  func.func @transform_1(%arg0: i32) -> (i32, i32) {
    %c0_i32 = arith.constant 0 : i32
    %c0_i32_0 = arith.constant 0 : i32
    %c0_i32_1 = arith.constant 0 : i32
    return %c0_i32, %c0_i32_0 : i32, i32
  }
  func.func @transform_2(%arg0: i32) -> (i32, i32) {
    %c0_i32 = arith.constant 0 : i32
    %c0_i32_0 = arith.constant 0 : i32
    %c0_i32_1 = arith.constant 0 : i32
    return %c0_i32, %c0_i32_0 : i32, i32
  }
  func.func @transform_3(%arg0: i32) -> (i32, i32) {
    %c0_i32 = arith.constant 0 : i32
    %c0_i32_0 = arith.constant 0 : i32
    %c0_i32_1 = arith.constant 0 : i32
    return %c0_i32, %c0_i32_0 : i32, i32
  }
  func.func @transform_4(%arg0: i32) -> (i32, i32) {
    %c0_i32 = arith.constant 0 : i32
    %c0_i32_0 = arith.constant 0 : i32
    %c0_i32_1 = arith.constant 0 : i32
    return %c0_i32, %c0_i32_0 : i32, i32
  }
  func.func @transform_5(%arg0: i32) -> (i32, i32) {
    %c0_i32 = arith.constant 0 : i32
    %c0_i32_0 = arith.constant 0 : i32
    %c0_i32_1 = arith.constant 0 : i32
    return %c0_i32, %c0_i32_0 : i32, i32
  }
  func.func @transform_6(%arg0: i32) -> (i32, i32) {
    %c0_i32 = arith.constant 0 : i32
    %c0_i32_0 = arith.constant 0 : i32
    %c0_i32_1 = arith.constant 0 : i32
    return %c0_i32, %c0_i32_0 : i32, i32
  }
  func.func @transform_7(%arg0: i32) -> (i32, i32, i32, i32) {
    %c0_i32 = arith.constant 0 : i32
    %c0_i32_0 = arith.constant 0 : i32
    %c0_i32_1 = arith.constant 0 : i32
    %c0_i32_2 = arith.constant 0 : i32
    return %arg0, %c0_i32, %c0_i32_0, %c0_i32_1 : i32, i32, i32, i32
  }
}

</mosaic_0001>

<llo_original>
// kernel: tpu_custom_call.1
$region0: #{tpu_custom_call.1}
  #allocation0 [shape = 'u32[]', space=smem, size = 0x4, offset = 0x4, fixed_abs, tag = 'smem constant byte address 0x4 - core index']
  #allocation1 [shape = 'u32[144,128]{1,0:T(1,128)}', space=vmem, size = 0x12000, scoped, tag = 'internal scratch']
  %s0 = inlined_call_operand.hbm [shape: f32[8,128], index: 0, kind: input, shape index: {}]
  %s1 = inlined_call_operand.hbm [shape: f32[8,128], index: 1, kind: output, shape index: {}]
  %s2 = sld [smem:[#allocation0]]
  $region18: #{tpu_custom_call.1} parent=0
    _
  %s4 = ssub.s32 1, %s2
  %s5 = scalar_select 0, %s4, %s2
  $region1: #{tpu_custom_call.1} parent=0
    #allocation2 [shape = 'u8[4096]{0}', space=vmem, size = 0x1000, scoped, tag = 'input window, operand 0, single buffered']
    #allocation3 [shape = 's32[1]{0}', space=sflag, size = 0x4, scoped, tag = 'scoped memory for tpu_custom_call.1']
    #allocation4 [shape = 's32[1]{0}', space=sflag, size = 0x4, scoped, tag = 'scoped memory for tpu_custom_call.1']
    #allocation5 [shape = 'u8[4096]{0}', space=vmem, size = 0x1000, scoped, tag = 'output window, operand 0, single buffered']
    %6 = vsyncpa [#allocation3], 0
    %7 = vsyncpa [#allocation4], 0
    // Predicated region
    $region2: #{tpu_custom_call.1} parent=1 // pred_check
      _
    $region3: #{tpu_custom_call.1} parent=1 // pred_check_branch
      %9 = sbr.rel (0) target = $region5
    $region4: #{tpu_custom_call.1} parent=1 // pred_region
      %s11 = ssub.s32 128, 128
      %12 = vsyncadd [#allocation3], %s11
      %s14 = sshll.u32 [#allocation2], 4
      %s15 = int_to_ptr.vmem [resolvable:$true] %s14
      %17 = dma.hbm_to_vmem [thread:$0]  %s0, 128, %s15, [#allocation3]
    $region5: #{tpu_custom_call.1} parent=1 // pred_fallthru
      _
    // Predicated region
    $region6: #{tpu_custom_call.1} parent=1 // pred_check
      _
    $region7: #{tpu_custom_call.1} parent=1 // pred_check_branch
      %19 = sbr.rel (0) target = $region9
    $region8: #{tpu_custom_call.1} parent=1 // pred_region
      %20 = dma.done [#allocation3], 128
    $region9: #{tpu_custom_call.1} parent=1 // pred_fallthru
      _
    %v21 = vld [vmem:[#allocation2] sm:$0xff]
    %22 = vst [vmem:[#allocation5] sm:$0xff] %v21
    // Predicated region
    $region10: #{tpu_custom_call.1} parent=1 // pred_check
      _
    $region11: #{tpu_custom_call.1} parent=1 // pred_check_branch
      %24 = sbr.rel (0) target = $region13
    $region12: #{tpu_custom_call.1} parent=1 // pred_region
      %s26 = ssub.s32 128, 128
      %27 = vsyncadd [#allocation4], %s26
      %s29 = sshll.u32 [#allocation5], 4
      %s30 = int_to_ptr.vmem [resolvable:$true] %s29
      %32 = dma.vmem_to_hbm [thread:$0]  %s30, 128, %s1, [#allocation4]
    $region13: #{tpu_custom_call.1} parent=1 // pred_fallthru
      _
    // Predicated region
    $region14: #{tpu_custom_call.1} parent=1 // pred_check
      _
    $region15: #{tpu_custom_call.1} parent=1 // pred_check_branch
      %34 = sbr.rel (0) target = $region17
    $region16: #{tpu_custom_call.1} parent=1 // pred_region
      %35 = dma.done [#allocation4], 128
    $region17: #{tpu_custom_call.1} parent=1 // pred_fallthru
      _
    %36 = vsyncpa [#allocation3], 1
    %37 = vsyncpa [#allocation4], 1

// kernel: tpu_custom_call.1
$region0: #{tpu_custom_call.1}
  #allocation0 [shape = 'u32[]', space=smem, size = 0x4, offset = 0x4, fixed_abs, tag = 'smem constant byte address 0x4 - core index']
  #allocation1 [shape = 'u32[144,128]{1,0:T(1,128)}', space=vmem, size = 0x12000, scoped, tag = 'internal scratch']
  #allocation2 [shape = 'bf16[2,10,10,128]{3,2,1,0:T(8,128)(2,1)}', space=vmem, size = 0x14000, scoped, tag = 'scratch operand']
  %s0 = inlined_call_operand.vmem [shape: bf16[2,10,10,64], index: 0, kind: input, shape index: {}]
  %s1 = inlined_call_operand.hbm [shape: bf16[576,128], index: 1, kind: input, shape index: {}]
  %s2 = inlined_call_operand.vmem [shape: f32[1,128], index: 2, kind: input, shape index: {}]
  %s3 = inlined_call_operand.vmem [shape: f32[1,128], index: 3, kind: input, shape index: {}]
  %s4 = inlined_call_operand.hbm [shape: bf16[1152,128], index: 4, kind: input, shape index: {}]
  %s5 = inlined_call_operand.vmem [shape: f32[1,128], index: 5, kind: input, shape index: {}]
  %s6 = inlined_call_operand.vmem [shape: f32[1,128], index: 6, kind: input, shape index: {}]
  %s7 = inlined_call_operand.hbm [shape: bf16[2,4,4,128], index: 7, kind: output, shape index: {}]
  %s8 = sld [smem:[#allocation0]]
  $region46: #{tpu_custom_call.1} parent=0
    _
  %s10 = ssub.s32 1, %s8
  %s11 = scalar_select 0, %s10, %s8
  $region1: #{tpu_custom_call.1} parent=0
    #allocation3 [shape = 'u8[147456]{0}', space=vmem, size = 0x24000, scoped, tag = 'input window, operand 1, single buffered']
    #allocation4 [shape = 's32[1]{0}', space=sflag, size = 0x4, scoped, tag = 'scoped memory for tpu_custom_call.1']
    #allocation5 [shape = 's32[1]{0}', space=sflag, size = 0x4, scoped, tag = 'scoped memory for tpu_custom_call.1']
    #allocation6 [shape = 'u8[294912]{0}', space=vmem, size = 0x48000, scoped, tag = 'input window, operand 4, single buffered']
    #allocation7 [shape = 's32[1]{0}', space=sflag, size = 0x4, scoped, tag = 'scoped memory for tpu_custom_call.1']
    #allocation8 [shape = 'u8[8192]{0}', space=vmem, size = 0x2000, scoped, tag = 'output window, operand 0, single buffered']
    %12 = vsyncpa [#allocation4], 0
    %13 = vsyncpa [#allocation7], 0
    %14 = vsyncpa [#allocation5], 0
    // Predicated region
    $region2: #{tpu_custom_call.1} parent=1 // pred_check
      _
    $region3: #{tpu_custom_call.1} parent=1 // pred_check_branch
      %16 = sbr.rel (0) target = $region5
    $region4: #{tpu_custom_call.1} parent=1 // pred_region
      _
    $region5: #{tpu_custom_call.1} parent=1 // pred_fallthru
      _
    // Predicated region
    $region6: #{tpu_custom_call.1} parent=1 // pred_check
      _
    $region7: #{tpu_custom_call.1} parent=1 // pred_check_branch
      %18 = sbr.rel (0) target = $region9
    $region8: #{tpu_custom_call.1} parent=1 // pred_region
      %s20 = ssub.s32 4608, 4608
      %21 = vsyncadd [#allocation4], %s20
      %s22 = sshll.u32 [#allocation3], 4
      %s23 = int_to_ptr.vmem [resolvable:$true] %s22
      %28 = dma.hbm_to_vmem [thread:$0]  %s1, 4608, %s23, [#allocation4], 64, 64, 4
    $region9: #{tpu_custom_call.1} parent=1 // pred_fallthru
      _
    // Predicated region
    $region10: #{tpu_custom_call.1} parent=1 // pred_check
      _
    $region11: #{tpu_custom_call.1} parent=1 // pred_check_branch
      %30 = sbr.rel (0) target = $region13
    $region12: #{tpu_custom_call.1} parent=1 // pred_region
      _
    $region13: #{tpu_custom_call.1} parent=1 // pred_fallthru
      _
    // Predicated region
    $region14: #{tpu_custom_call.1} parent=1 // pred_check
      _
    $region15: #{tpu_custom_call.1} parent=1 // pred_check_branch
      %32 = sbr.rel (0) target = $region17
    $region16: #{tpu_custom_call.1} parent=1 // pred_region
      _
    $region17: #{tpu_custom_call.1} parent=1 // pred_fallthru
      _
    // Predicated region
    $region18: #{tpu_custom_call.1} parent=1 // pred_check
      _
    $region19: #{tpu_custom_call.1} parent=1 // pred_check_branch
      %34 = sbr.rel (0) target = $region21
    $region20: #{tpu_custom_call.1} parent=1 // pred_region
      %s36 = ssub.s32 9216, 9216
      %37 = vsyncadd [#allocation7], %s36
      %s38 = sshll.u32 [#allocation6], 4
      %s39 = int_to_ptr.vmem [resolvable:$true] %s38
      %44 = dma.hbm_to_vmem [thread:$0]  %s4, 9216, %s39, [#allocation7], 64, 64, 4
    $region21: #{tpu_custom_call.1} parent=1 // pred_fallthru
      _
    // Predicated region
    $region22: #{tpu_custom_call.1} parent=1 // pred_check
      _
    $region23: #{tpu_custom_call.1} parent=1 // pred_check_branch
      %46 = sbr.rel (0) target = $region25
    $region24: #{tpu_custom_call.1} parent=1 // pred_region
      _
    $region25: #{tpu_custom_call.1} parent=1 // pred_fallthru
      _
    // Predicated region
    $region26: #{tpu_custom_call.1} parent=1 // pred_check
      _
    $region27: #{tpu_custom_call.1} parent=1 // pred_check_branch
      %48 = sbr.rel (0) target = $region29
    $region28: #{tpu_custom_call.1} parent=1 // pred_region
      _
    $region29: #{tpu_custom_call.1} parent=1 // pred_fallthru
      _
    // Predicated region
    $region30: #{tpu_custom_call.1} parent=1 // pred_check
      _
    $region31: #{tpu_custom_call.1} parent=1 // pred_check_branch
      %50 = sbr.rel (0) target = $region33
    $region32: #{tpu_custom_call.1} parent=1 // pred_region
      %51 = dma.done [#allocation4], 4608
    $region33: #{tpu_custom_call.1} parent=1 // pred_fallthru
      _
    // Predicated region
    $region34: #{tpu_custom_call.1} parent=1 // pred_check
      _
    $region35: #{tpu_custom_call.1} parent=1 // pred_check_branch
      %53 = sbr.rel (0) target = $region37
    $region36: #{tpu_custom_call.1} parent=1 // pred_region
      %54 = dma.done [#allocation7], 9216
    $region37: #{tpu_custom_call.1} parent=1 // pred_fallthru
      _
    %v56 = vld [vmem:[%s0] sm:$0xf]
    %v57 = vld [vmem:[%s0 + $0x4] sm:$0x1]
    %v58 = vld [vmem:[%s0 + $0x8] sm:$0xf]
    %v59 = vld [vmem:[%s0 + $0xc] sm:$0x1]
    %v60 = vld [vmem:[%s0 + $0x10] sm:$0xf]
    %v61 = vld [vmem:[%s0 + $0x14] sm:$0x1]
    %v62 = vld [vmem:[%s0 + $0x18] sm:$0xf]
    %v63 = vld [vmem:[%s0 + $0x1c] sm:$0x1]
    %v64 = vld [vmem:[%s0 + $0x20] sm:$0xf]
    %v65 = vld [vmem:[%s0 + $0x24] sm:$0x1]
    %v66 = vld [vmem:[%s0 + $0x28] sm:$0xf]
    %v67 = vld [vmem:[%s0 + $0x2c] sm:$0x1]
    %v68 = vld [vmem:[%s0 + $0x30] sm:$0xf]
    %v69 = vld [vmem:[%s0 + $0x34] sm:$0x1]
    %v70 = vld [vmem:[%s0 + $0x38] sm:$0xf]
    %v71 = vld [vmem:[%s0 + $0x3c] sm:$0x1]
    %v72 = vld [vmem:[%s0 + $0x40] sm:$0xf]
    %v73 = vld [vmem:[%s0 + $0x44] sm:$0x1]
    %v74 = vld [vmem:[%s0 + $0x48] sm:$0xf]
    %v75 = vld [vmem:[%s0 + $0x4c] sm:$0x1]
    %v76 = vld [vmem:[%s0 + $0x50] sm:$0xf]
    %v77 = vld [vmem:[%s0 + $0x54] sm:$0x1]
    %v78 = vld [vmem:[%s0 + $0x58] sm:$0xf]
    %v79 = vld [vmem:[%s0 + $0x5c] sm:$0x1]
    %v80 = vld [vmem:[%s0 + $0x60] sm:$0xf]
    %v81 = vld [vmem:[%s0 + $0x64] sm:$0x1]
    %v82 = vld [vmem:[%s0 + $0x68] sm:$0xf]
    %v83 = vld [vmem:[%s0 + $0x6c] sm:$0x1]
    %v84 = vld [vmem:[%s0 + $0x70] sm:$0xf]
    %v85 = vld [vmem:[%s0 + $0x74] sm:$0x1]
    %v86 = vld [vmem:[%s0 + $0x78] sm:$0xf]
    %v87 = vld [vmem:[%s0 + $0x7c] sm:$0x1]
    %v88 = vld [vmem:[%s0 + $0x80] sm:$0xf]
    %v89 = vld [vmem:[%s0 + $0x84] sm:$0x1]
    %v90 = vld [vmem:[%s0 + $0x88] sm:$0xf]
    %v91 = vld [vmem:[%s0 + $0x8c] sm:$0x1]
    %v92 = vld [vmem:[%s0 + $0x90] sm:$0xf]
    %v93 = vld [vmem:[%s0 + $0x94] sm:$0x1]
    %v94 = vld [vmem:[%s0 + $0x98] sm:$0xf]
    %v95 = vld [vmem:[%s0 + $0x9c] sm:$0x1]
    %v128 = vunpack.c.l.b16 %v56
    %v129 = vunpack.c.l.b16 %v57
    %v130 = vunpack.c.l.b16 %v58
    %v131 = vunpack.c.l.b16 %v59
    %v132 = vunpack.c.l.b16 %v60
    %v133 = vunpack.c.l.b16 %v61
    %v134 = vunpack.c.l.b16 %v62
    %v135 = vunpack.c.l.b16 %v63
    %v136 = vunpack.c.l.b16 %v64
    %v137 = vunpack.c.l.b16 %v65
    %v138 = vunpack.c.l.b16 %v66
    %v139 = vunpack.c.l.b16 %v67
    %v140 = vunpack.c.l.b16 %v68
    %v141 = vunpack.c.l.b16 %v69
    %v142 = vunpack.c.l.b16 %v70
    %v143 = vunpack.c.l.b16 %v71
    %v144 = vunpack.c.l.b16 %v76
    %v145 = vunpack.c.l.b16 %v77
    %v146 = vunpack.c.l.b16 %v78
    %v147 = vunpack.c.l.b16 %v79
    %v148 = vunpack.c.l.b16 %v80
    %v149 = vunpack.c.l.b16 %v81
    %v150 = vunpack.c.l.b16 %v82
    %v151 = vunpack.c.l.b16 %v83
    %v152 = vunpack.c.l.b16 %v84
    %v153 = vunpack.c.l.b16 %v85
    %v154 = vunpack.c.l.b16 %v86
    %v155 = vunpack.c.l.b16 %v87
    %v156 = vunpack.c.l.b16 %v88
    %v157 = vunpack.c.l.b16 %v89
    %v158 = vunpack.c.l.b16 %v90
    %v159 = vunpack.c.l.b16 %v91
    %v160 = vpack.c.b16 %v129, %v128
    %v161 = vpack.c.b16 %v131, %v130
    %v162 = vpack.c.b16 %v133, %v132
    %v163 = vpack.c.b16 %v135, %v134
    %v164 = vpack.c.b16 %v137, %v136
    %v165 = vpack.c.b16 %v139, %v138
    %v166 = vpack.c.b16 %v141, %v140
    %v167 = vpack.c.b16 %v143, %v142
    %v168 = vpack.c.b16 %v145, %v144
    %v169 = vpack.c.b16 %v147, %v146
    %v170 = vpack.c.b16 %v149, %v148
    %v171 = vpack.c.b16 %v151, %v150
    %v172 = vpack.c.b16 %v153, %v152
    %v173 = vpack.c.b16 %v155, %v154
    %v174 = vpack.c.b16 %v157, %v156
    %v175 = vpack.c.b16 %v159, %v158
    %v177 = vshrl.u32 %v160, 16
    %v179 = vshll.u32 %v160, 16
    %v181 = vrot.slane %v179, 1
    %v182 = vor.u32 %v177, %v181
    %v184 = vshrl.u32 %v161, 16
    %v186 = vshll.u32 %v161, 16
    %v188 = vrot.slane %v186, 1
    %v189 = vor.u32 %v184, %v188
    %v191 = vshrl.u32 %v162, 16
    %v193 = vshll.u32 %v162, 16
    %v195 = vrot.slane %v193, 1
    %v196 = vor.u32 %v191, %v195
    %v198 = vshrl.u32 %v163, 16
    %v200 = vshll.u32 %v163, 16
    %v202 = vrot.slane %v200, 1
    %v203 = vor.u32 %v198, %v202
    %v205 = vshrl.u32 %v164, 16
    %v207 = vshll.u32 %v164, 16
    %v209 = vrot.slane %v207, 1
    %v210 = vor.u32 %v205, %v209
    %v212 = vshrl.u32 %v165, 16
    %v214 = vshll.u32 %v165, 16
    %v216 = vrot.slane %v214, 1
    %v217 = vor.u32 %v212, %v216
    %v219 = vshrl.u32 %v166, 16
    %v221 = vshll.u32 %v166, 16
    %v223 = vrot.slane %v221, 1
    %v224 = vor.u32 %v219, %v223
    %v226 = vshrl.u32 %v167, 16
    %v228 = vshll.u32 %v167, 16
    %v230 = vrot.slane %v228, 1
    %v231 = vor.u32 %v226, %v230
    %v233 = vshrl.u32 %v168, 16
    %v235 = vshll.u32 %v168, 16
    %v237 = vrot.slane %v235, 1
    %v238 = vor.u32 %v233, %v237
    %v240 = vshrl.u32 %v169, 16
    %v242 = vshll.u32 %v169, 16
    %v244 = vrot.slane %v242, 1
    %v245 = vor.u32 %v240, %v244
    %v247 = vshrl.u32 %v170, 16
    %v249 = vshll.u32 %v170, 16
    %v251 = vrot.slane %v249, 1
    %v252 = vor.u32 %v247, %v251
    %v254 = vshrl.u32 %v171, 16
    %v256 = vshll.u32 %v171, 16
    %v258 = vrot.slane %v256, 1
    %v259 = vor.u32 %v254, %v258
    %v261 = vshrl.u32 %v172, 16
    %v263 = vshll.u32 %v172, 16
    %v265 = vrot.slane %v263, 1
    %v266 = vor.u32 %v261, %v265
    %v268 = vshrl.u32 %v173, 16
    %v270 = vshll.u32 %v173, 16
    %v272 = vrot.slane %v270, 1
    %v273 = vor.u32 %v268, %v272
    %v275 = vshrl.u32 %v174, 16
    %v277 = vshll.u32 %v174, 16
    %v279 = vrot.slane %v277, 1
    %v280 = vor.u32 %v275, %v279
    %v282 = vshrl.u32 %v175, 16
    %v284 = vshll.u32 %v175, 16
    %v286 = vrot.slane %v284, 1
    %v287 = vor.u32 %v282, %v286
    %288 = vrot.lane.b32.xlu0 %v182, 64
    %v289 = vpop.permute.xlu0 %288
    %290 = vrot.lane.b32.xlu0 %v189, 64
    %v291 = vpop.permute.xlu0 %290
    %292 = vrot.lane.b32.xlu0 %v196, 64
    %v293 = vpop.permute.xlu0 %292
    %294 = vrot.lane.b32.xlu0 %v203, 64
    %v295 = vpop.permute.xlu0 %294
    %296 = vrot.lane.b32.xlu0 %v210, 64
    %v297 = vpop.permute.xlu0 %296
    %298 = vrot.lane.b32.xlu0 %v217, 64
    %v299 = vpop.permute.xlu0 %298
    %300 = vrot.lane.b32.xlu0 %v224, 64
    %v301 = vpop.permute.xlu0 %300
    %302 = vrot.lane.b32.xlu0 %v231, 64
    %v303 = vpop.permute.xlu0 %302
    %304 = vrot.lane.b32.xlu0 %v238, 64
    %v305 = vpop.permute.xlu0 %304
    %306 = vrot.lane.b32.xlu0 %v245, 64
    %v307 = vpop.permute.xlu0 %306
    %308 = vrot.lane.b32.xlu0 %v252, 64
    %v309 = vpop.permute.xlu0 %308
    %310 = vrot.lane.b32.xlu0 %v259, 64
    %v311 = vpop.permute.xlu0 %310
    %312 = vrot.lane.b32.xlu0 %v266, 64
    %v313 = vpop.permute.xlu0 %312
    %314 = vrot.lane.b32.xlu0 %v273, 64
    %v315 = vpop.permute.xlu0 %314
    %316 = vrot.lane.b32.xlu0 %v280, 64
    %v317 = vpop.permute.xlu0 %316
    %318 = vrot.lane.b32.xlu0 %v287, 64
    %v319 = vpop.permute.xlu0 %318
    %v320 = vrot.slane %v160, 1
    %v321 = vrot.slane %v161, 1
    %v322 = vrot.slane %v162, 1
    %v323 = vrot.slane %v163, 1
    %v324 = vrot.slane %v164, 1
    %v325 = vrot.slane %v165, 1
    %v326 = vrot.slane %v166, 1
    %v327 = vrot.slane %v167, 1
    %v328 = vrot.slane %v168, 1
    %v329 = vrot.slane %v169, 1
    %v330 = vrot.slane %v170, 1
    %v331 = vrot.slane %v171, 1
    %v332 = vrot.slane %v172, 1
    %v333 = vrot.slane %v173, 1
    %v334 = vrot.slane %v174, 1
    %v335 = vrot.slane %v175, 1
    %v338 = vunpack.c.l.b16 %v72
    %v339 = vunpack.c.l.b16 %v92
    %v340 = vpack.c.b16 %v130, %v130
    %v341 = vpack.c.b16 %v132, %v132
    %v342 = vpack.c.b16 %v134, %v134
    %v343 = vpack.c.b16 %v136, %v136
    %v344 = vpack.c.b16 %v138, %v138
    %v345 = vpack.c.b16 %v140, %v140
    %v346 = vpack.c.b16 %v142, %v142
    %v347 = vpack.c.b16 %v338, %v338
    %v348 = vpack.c.b16 %v146, %v146
    %v349 = vpack.c.b16 %v148, %v148
    %v350 = vpack.c.b16 %v150, %v150
    %v351 = vpack.c.b16 %v152, %v152
    %v352 = vpack.c.b16 %v154, %v154
    %v353 = vpack.c.b16 %v156, %v156
    %v354 = vpack.c.b16 %v158, %v158
    %v355 = vpack.c.b16 %v339, %v339
    %356 = vrot.lane.b32.xlu0 %v340, 64
    %v357 = vpop.permute.xlu0 %356
    %358 = vrot.lane.b32.xlu0 %v341, 64
    %v359 = vpop.permute.xlu0 %358
    %360 = vrot.lane.b32.xlu0 %v342, 64
    %v361 = vpop.permute.xlu0 %360
    %362 = vrot.lane.b32.xlu0 %v343, 64
    %v363 = vpop.permute.xlu0 %362
    %364 = vrot.lane.b32.xlu0 %v344, 64
    %v365 = vpop.permute.xlu0 %364
    %366 = vrot.lane.b32.xlu0 %v345, 64
    %v367 = vpop.permute.xlu0 %366
    %368 = vrot.lane.b32.xlu0 %v346, 64
    %v369 = vpop.permute.xlu0 %368
    %370 = vrot.lane.b32.xlu0 %v347, 64
    %v371 = vpop.permute.xlu0 %370
    %372 = vrot.lane.b32.xlu0 %v348, 64
    %v373 = vpop.permute.xlu0 %372
    %374 = vrot.lane.b32.xlu0 %v349, 64
    %v375 = vpop.permute.xlu0 %374
    %376 = vrot.lane.b32.xlu0 %v350, 64
    %v377 = vpop.permute.xlu0 %376
    %378 = vrot.lane.b32.xlu0 %v351, 64
    %v379 = vpop.permute.xlu0 %378
    %380 = vrot.lane.b32.xlu0 %v352, 64
    %v381 = vpop.permute.xlu0 %380
    %382 = vrot.lane.b32.xlu0 %v353, 64
    %v383 = vpop.permute.xlu0 %382
    %384 = vrot.lane.b32.xlu0 %v354, 64
    %v385 = vpop.permute.xlu0 %384
    %386 = vrot.lane.b32.xlu0 %v355, 64
    %v387 = vpop.permute.xlu0 %386
    %v390 = vunpack.c.l.b16 %v73
    %v391 = vunpack.c.l.b16 %v93
    %v392 = vpack.c.b16 %v390, %v338
    %v393 = vpack.c.b16 %v391, %v339
    %v395 = vshrl.u32 %v392, 16
    %v397 = vshll.u32 %v392, 16
    %v399 = vrot.slane %v397, 1
    %v400 = vor.u32 %v395, %v399
    %v402 = vshrl.u32 %v393, 16
    %v404 = vshll.u32 %v393, 16
    %v406 = vrot.slane %v404, 1
    %v407 = vor.u32 %v402, %v406
    %v408 = vrot.slane %v392, 1
    %v409 = vrot.slane %v393, 1
    %410 = vrot.lane.b32.xlu0 %v321, 64
    %v411 = vpop.permute.xlu0 %410
    %412 = vrot.lane.b32.xlu0 %v322, 64
    %v413 = vpop.permute.xlu0 %412
    %414 = vrot.lane.b32.xlu0 %v323, 64
    %v415 = vpop.permute.xlu0 %414
    %416 = vrot.lane.b32.xlu0 %v324, 64
    %v417 = vpop.permute.xlu0 %416
    %418 = vrot.lane.b32.xlu0 %v325, 64
    %v419 = vpop.permute.xlu0 %418
    %420 = vrot.lane.b32.xlu0 %v326, 64
    %v421 = vpop.permute.xlu0 %420
    %422 = vrot.lane.b32.xlu0 %v327, 64
    %v423 = vpop.permute.xlu0 %422
    %424 = vrot.lane.b32.xlu0 %v408, 64
    %v425 = vpop.permute.xlu0 %424
    %426 = vrot.lane.b32.xlu0 %v329, 64
    %v427 = vpop.permute.xlu0 %426
    %428 = vrot.lane.b32.xlu0 %v330, 64
    %v429 = vpop.permute.xlu0 %428
    %430 = vrot.lane.b32.xlu0 %v331, 64
    %v431 = vpop.permute.xlu0 %430
    %432 = vrot.lane.b32.xlu0 %v332, 64
    %v433 = vpop.permute.xlu0 %432
    %434 = vrot.lane.b32.xlu0 %v333, 64
    %v435 = vpop.permute.xlu0 %434
    %436 = vrot.lane.b32.xlu0 %v334, 64
    %v437 = vpop.permute.xlu0 %436
    %438 = vrot.lane.b32.xlu0 %v335, 64
    %v439 = vpop.permute.xlu0 %438
    %440 = vrot.lane.b32.xlu0 %v409, 64
    %v441 = vpop.permute.xlu0 %440
    %v446 = vunpack.c.l.b16 %v74
    %v447 = vunpack.c.l.b16 %v75
    %v448 = vunpack.c.l.b16 %v94
    %v449 = vunpack.c.l.b16 %v95
    %v450 = vpack.c.b16 %v447, %v446
    %v451 = vpack.c.b16 %v449, %v448
    %v453 = vshrl.u32 %v450, 16
    %v455 = vshll.u32 %v450, 16
    %v457 = vrot.slane %v455, 1
    %v458 = vor.u32 %v453, %v457
    %v460 = vshrl.u32 %v451, 16
    %v462 = vshll.u32 %v451, 16
    %v464 = vrot.slane %v462, 1
    %v465 = vor.u32 %v460, %v464
    %466 = vrot.lane.b32.xlu0 %v400, 64
    %v467 = vpop.permute.xlu0 %466
    %468 = vrot.lane.b32.xlu0 %v458, 64
    %v469 = vpop.permute.xlu0 %468
    %470 = vrot.lane.b32.xlu0 %v407, 64
    %v471 = vpop.permute.xlu0 %470
    %472 = vrot.lane.b32.xlu0 %v465, 64
    %v473 = vpop.permute.xlu0 %472
    %v474 = vrot.slane %v450, 1
    %v475 = vrot.slane %v451, 1
    %vm476 = vcmask 523264
    %v479 = vsel %vm476, %v56, %v289
    %v482 = vsel %vm476, %v58, %v291
    %v485 = vsel %vm476, %v60, %v293
    %v488 = vsel %vm476, %v62, %v295
    %v491 = vsel %vm476, %v64, %v297
    %v494 = vsel %vm476, %v66, %v299
    %v497 = vsel %vm476, %v68, %v301
    %v500 = vsel %vm476, %v70, %v303
    %v503 = vsel %vm476, %v76, %v305
    %v506 = vsel %vm476, %v78, %v307
    %v509 = vsel %vm476, %v80, %v309
    %v512 = vsel %vm476, %v82, %v311
    %v515 = vsel %vm476, %v84, %v313
    %v518 = vsel %vm476, %v86, %v315
    %v521 = vsel %vm476, %v88, %v317
    %v524 = vsel %vm476, %v90, %v319
    %v527 = vsel %vm476, %v320, %v357
    %v530 = vsel %vm476, %v321, %v359
    %v533 = vsel %vm476, %v322, %v361
    %v536 = vsel %vm476, %v323, %v363
    %v539 = vsel %vm476, %v324, %v365
    %v542 = vsel %vm476, %v325, %v367
    %v545 = vsel %vm476, %v326, %v369
    %v548 = vsel %vm476, %v327, %v371
    %v551 = vsel %vm476, %v328, %v373
    %v554 = vsel %vm476, %v329, %v375
    %v557 = vsel %vm476, %v330, %v377
    %v560 = vsel %vm476, %v331, %v379
    %v563 = vsel %vm476, %v332, %v381
    %v566 = vsel %vm476, %v333, %v383
    %v569 = vsel %vm476, %v334, %v385
    %v572 = vsel %vm476, %v335, %v387
    %v575 = vsel %vm476, %v189, %v411
    %v578 = vsel %vm476, %v196, %v413
    %v581 = vsel %vm476, %v203, %v415
    %v584 = vsel %vm476, %v210, %v417
    %v587 = vsel %vm476, %v217, %v419
    %v590 = vsel %vm476, %v224, %v421
    %v593 = vsel %vm476, %v231, %v423
    %v596 = vsel %vm476, %v400, %v425
    %v599 = vsel %vm476, %v245, %v427
    %v602 = vsel %vm476, %v252, %v429
    %v605 = vsel %vm476, %v259, %v431
    %v608 = vsel %vm476, %v266, %v433
    %v611 = vsel %vm476, %v273, %v435
    %v614 = vsel %vm476, %v280, %v437
    %v617 = vsel %vm476, %v287, %v439
    %v620 = vsel %vm476, %v407, %v441
    %v623 = vsel %vm476, %v72, %v467
    %v626 = vsel %vm476, %v74, %v469
    %v629 = vsel %vm476, %v92, %v471
    %v632 = vsel %vm476, %v94, %v473
    %v685 = vunpack.c.l.b16 %v479
    %v686 = vunpack.c.l.b16 %v527
    %v687 = vunpack.c.l.b16 %v575
    %v688 = vunpack.c.l.b16 %v485
    %v689 = vunpack.c.l.b16 %v322
    %v690 = vunpack.c.l.b16 %v482
    %v691 = vunpack.c.l.b16 %v530
    %v692 = vunpack.c.l.b16 %v578
    %v693 = vunpack.c.l.b16 %v488
    %v694 = vunpack.c.l.b16 %v323
    %v695 = vunpack.c.l.b16 %v533
    %v696 = vunpack.c.l.b16 %v581
    %v697 = vunpack.c.l.b16 %v491
    %v698 = vunpack.c.l.b16 %v324
    %v699 = vunpack.c.l.b16 %v536
    %v700 = vunpack.c.l.b16 %v584
    %v701 = vunpack.c.l.b16 %v494
    %v702 = vunpack.c.l.b16 %v325
    %v703 = vunpack.c.l.b16 %v539
    %v704 = vunpack.c.l.b16 %v587
    %v705 = vunpack.c.l.b16 %v497
    %v706 = vunpack.c.l.b16 %v326
    %v707 = vunpack.c.l.b16 %v542
    %v708 = vunpack.c.l.b16 %v590
    %v709 = vunpack.c.l.b16 %v500
    %v710 = vunpack.c.l.b16 %v327
    %v711 = vunpack.c.l.b16 %v545
    %v712 = vunpack.c.l.b16 %v593
    %v713 = vunpack.c.l.b16 %v623
    %v714 = vunpack.c.l.b16 %v408
    %v715 = vunpack.c.l.b16 %v548
    %v716 = vunpack.c.l.b16 %v596
    %v717 = vunpack.c.l.b16 %v626
    %v718 = vunpack.c.l.b16 %v474
    %v719 = vunpack.c.l.b16 %v503
    %v720 = vunpack.c.l.b16 %v551
    %v721 = vunpack.c.l.b16 %v599
    %v722 = vunpack.c.l.b16 %v509
    %v723 = vunpack.c.l.b16 %v330
    %v724 = vunpack.c.l.b16 %v506
    %v725 = vunpack.c.l.b16 %v554
    %v726 = vunpack.c.l.b16 %v602
    %v727 = vunpack.c.l.b16 %v512
    %v728 = vunpack.c.l.b16 %v331
    %v729 = vunpack.c.l.b16 %v557
    %v730 = vunpack.c.l.b16 %v605
    %v731 = vunpack.c.l.b16 %v515
    %v732 = vunpack.c.l.b16 %v332
    %v733 = vunpack.c.l.b16 %v560
    %v734 = vunpack.c.l.b16 %v608
    %v735 = vunpack.c.l.b16 %v518
    %v736 = vunpack.c.l.b16 %v333
    %v737 = vunpack.c.l.b16 %v563
    %v738 = vunpack.c.l.b16 %v611
    %v739 = vunpack.c.l.b16 %v521
    %v740 = vunpack.c.l.b16 %v334
    %v741 = vunpack.c.l.b16 %v566
    %v742 = vunpack.c.l.b16 %v614
    %v743 = vunpack.c.l.b16 %v524
    %v744 = vunpack.c.l.b16 %v335
    %v745 = vunpack.c.l.b16 %v569
    %v746 = vunpack.c.l.b16 %v617
    %v747 = vunpack.c.l.b16 %v629
    %v748 = vunpack.c.l.b16 %v409
    %v749 = vunpack.c.l.b16 %v572
    %v750 = vunpack.c.l.b16 %v620
    %v751 = vunpack.c.l.b16 %v632
    %v752 = vunpack.c.l.b16 %v475
    %v753 = vld [vmem:[#allocation3] sm:$0xf]
    %v754 = vld [vmem:[#allocation3 + $0x4] sm:$0xf]
    %v755 = vld [vmem:[#allocation3 + $0x8] sm:$0xf]
    %v756 = vld [vmem:[#allocation3 + $0xc] sm:$0xf]
    %v757 = vld [vmem:[#allocation3 + $0x10] sm:$0xf]
    %v758 = vld [vmem:[#allocation3 + $0x14] sm:$0xf]
    %v759 = vld [vmem:[#allocation3 + $0x18] sm:$0xf]
    %v760 = vld [vmem:[#allocation3 + $0x1c] sm:$0xf]
    %v761 = vld [vmem:[#allocation3 + $0x20] sm:$0xf]
    %v762 = vld [vmem:[#allocation3 + $0x24] sm:$0xf]
    %v763 = vld [vmem:[#allocation3 + $0x28] sm:$0xf]
    %v764 = vld [vmem:[#allocation3 + $0x2c] sm:$0xf]
    %v765 = vld [vmem:[#allocation3 + $0x30] sm:$0xf]
    %v766 = vld [vmem:[#allocation3 + $0x34] sm:$0xf]
    %v767 = vld [vmem:[#allocation3 + $0x38] sm:$0xf]
    %v768 = vld [vmem:[#allocation3 + $0x3c] sm:$0xf]
    %v769 = vld [vmem:[#allocation3 + $0x40] sm:$0xf]
    %v770 = vld [vmem:[#allocation3 + $0x44] sm:$0xf]
    %v771 = vld [vmem:[#allocation3 + $0x48] sm:$0xf]
    %v772 = vld [vmem:[#allocation3 + $0x4c] sm:$0xf]
    %v773 = vld [vmem:[#allocation3 + $0x50] sm:$0xf]
    %v774 = vld [vmem:[#allocation3 + $0x54] sm:$0xf]
    %v775 = vld [vmem:[#allocation3 + $0x58] sm:$0xf]
    %v776 = vld [vmem:[#allocation3 + $0x5c] sm:$0xf]
    %v777 = vld [vmem:[#allocation3 + $0x60] sm:$0xf]
    %v778 = vld [vmem:[#allocation3 + $0x64] sm:$0xf]
    %v779 = vld [vmem:[#allocation3 + $0x68] sm:$0xf]
    %v780 = vld [vmem:[#allocation3 + $0x6c] sm:$0xf]
    %v781 = vld [vmem:[#allocation3 + $0x70] sm:$0xf]
    %v782 = vld [vmem:[#allocation3 + $0x74] sm:$0xf]
    %v783 = vld [vmem:[#allocation3 + $0x78] sm:$0xf]
    %v784 = vld [vmem:[#allocation3 + $0x7c] sm:$0xf]
    %v785 = vld [vmem:[#allocation3 + $0x80] sm:$0xf]
    %v786 = vld [vmem:[#allocation3 + $0x84] sm:$0xf]
    %v787 = vld [vmem:[#allocation3 + $0x88] sm:$0xf]
    %v788 = vld [vmem:[#allocation3 + $0x8c] sm:$0xf]
    %v789 = vld [vmem:[#allocation3 + $0x90] sm:$0xf]
    %v790 = vld [vmem:[#allocation3 + $0x94] sm:$0xf]
    %v791 = vld [vmem:[#allocation3 + $0x98] sm:$0xf]
    %v792 = vld [vmem:[#allocation3 + $0x9c] sm:$0xf]
    %v793 = vld [vmem:[#allocation3 + $0xa0] sm:$0xf]
    %v794 = vld [vmem:[#allocation3 + $0xa4] sm:$0xf]
    %v795 = vld [vmem:[#allocation3 + $0xa8] sm:$0xf]
    %v796 = vld [vmem:[#allocation3 + $0xac] sm:$0xf]
    %v797 = vld [vmem:[#allocation3 + $0xb0] sm:$0xf]
    %v798 = vld [vmem:[#allocation3 + $0xb4] sm:$0xf]
    %v799 = vld [vmem:[#allocation3 + $0xb8] sm:$0xf]
    %v800 = vld [vmem:[#allocation3 + $0xbc] sm:$0xf]
    %v801 = vld [vmem:[#allocation3 + $0xc0] sm:$0xf]
    %v802 = vld [vmem:[#allocation3 + $0xc4] sm:$0xf]
    %v803 = vld [vmem:[#allocation3 + $0xc8] sm:$0xf]
    %v804 = vld [vmem:[#allocation3 + $0xcc] sm:$0xf]
    %v805 = vld [vmem:[#allocation3 + $0xd0] sm:$0xf]
    %v806 = vld [vmem:[#allocation3 + $0xd4] sm:$0xf]
    %v807 = vld [vmem:[#allocation3 + $0xd8] sm:$0xf]
    %v808 = vld [vmem:[#allocation3 + $0xdc] sm:$0xf]
    %v809 = vld [vmem:[#allocation3 + $0xe0] sm:$0xf]
    %v810 = vld [vmem:[#allocation3 + $0xe4] sm:$0xf]
    %v811 = vld [vmem:[#allocation3 + $0xe8] sm:$0xf]
    %v812 = vld [vmem:[#allocation3 + $0xec] sm:$0xf]
    %v813 = vld [vmem:[#allocation3 + $0xf0] sm:$0xf]
    %v814 = vld [vmem:[#allocation3 + $0xf4] sm:$0xf]
    %v815 = vld [vmem:[#allocation3 + $0xf8] sm:$0xf]
    %v816 = vld [vmem:[#allocation3 + $0xfc] sm:$0xf]
    %v817 = vld [vmem:[#allocation3 + $0x100] sm:$0xf]
    %v818 = vld [vmem:[#allocation3 + $0x104] sm:$0xf]
    %v819 = vld [vmem:[#allocation3 + $0x108] sm:$0xf]
    %v820 = vld [vmem:[#allocation3 + $0x10c] sm:$0xf]
    %v821 = vld [vmem:[#allocation3 + $0x110] sm:$0xf]
    %v822 = vld [vmem:[#allocation3 + $0x114] sm:$0xf]
    %v823 = vld [vmem:[#allocation3 + $0x118] sm:$0xf]
    %v824 = vld [vmem:[#allocation3 + $0x11c] sm:$0xf]
    %v825 = vpack.c.b16 %v690, %v685
    %v826 = vpack.c.b16 %v691, %v686
    %v827 = vpack.c.b16 %v692, %v687
    %v828 = vpack.c.b16 %v693, %v688
    %v829 = vpack.c.b16 %v694, %v689
    %v830 = vpack.c.b16 %v699, %v695
    %v831 = vpack.c.b16 %v700, %v696
    %v832 = vpack.c.b16 %v701, %v697
    %v833 = vpack.c.b16 %v702, %v698
    %v834 = vpack.c.b16 %v707, %v703
    %v835 = vpack.c.b16 %v708, %v704
    %v836 = vpack.c.b16 %v709, %v705
    %v837 = vpack.c.b16 %v710, %v706
    %v838 = vpack.c.b16 %v715, %v711
    %v839 = vpack.c.b16 %v716, %v712
    %v840 = vpack.c.b16 %v717, %v713
    %v841 = vpack.c.b16 %v718, %v714
    %v842 = vpack.c.b16 %v724, %v719
    %v843 = vpack.c.b16 %v725, %v720
    %v844 = vpack.c.b16 %v726, %v721
    %v845 = vpack.c.b16 %v727, %v722
    %v846 = vpack.c.b16 %v728, %v723
    %v847 = vpack.c.b16 %v733, %v729
    %v848 = vpack.c.b16 %v734, %v730
    %v849 = vpack.c.b16 %v735, %v731
    %v850 = vpack.c.b16 %v736, %v732
    %v851 = vpack.c.b16 %v741, %v737
    %v852 = vpack.c.b16 %v742, %v738
    %v853 = vpack.c.b16 %v743, %v739
    %v854 = vpack.c.b16 %v744, %v740
    %v855 = vpack.c.b16 %v749, %v745
    %v856 = vpack.c.b16 %v750, %v746
    %v857 = vpack.c.b16 %v751, %v747
    %v858 = vpack.c.b16 %v752, %v748
    %v957 = vunpack.c.l.b16 %v753
    %v958 = vunpack.c.l.b16 %v754
    %v959 = vunpack.c.l.b16 %v755
    %v960 = vunpack.c.l.b16 %v756
    %v961 = vunpack.c.l.b16 %v757
    %v962 = vunpack.c.l.b16 %v758
    %v963 = vunpack.c.l.b16 %v759
    %v964 = vunpack.c.l.b16 %v760
    %v965 = vunpack.c.l.b16 %v761
    %v966 = vunpack.c.l.b16 %v762
    %v967 = vunpack.c.l.b16 %v763
    %v968 = vunpack.c.l.b16 %v764
    %v969 = vunpack.c.l.b16 %v765
    %v970 = vunpack.c.l.b16 %v766
    %v971 = vunpack.c.l.b16 %v767
    %v972 = vunpack.c.l.b16 %v768
    %v973 = vunpack.c.l.b16 %v769
    %v974 = vunpack.c.l.b16 %v770
    %v975 = vunpack.c.l.b16 %v771
    %v976 = vunpack.c.l.b16 %v772
    %v977 = vunpack.c.l.b16 %v773
    %v978 = vunpack.c.l.b16 %v774
    %v979 = vunpack.c.l.b16 %v775
    %v980 = vunpack.c.l.b16 %v776
    %v981 = vunpack.c.l.b16 %v777
    %v982 = vunpack.c.l.b16 %v778
    %v983 = vunpack.c.l.b16 %v779
    %v984 = vunpack.c.l.b16 %v780
    %v985 = vunpack.c.l.b16 %v781
    %v986 = vunpack.c.l.b16 %v782
    %v987 = vunpack.c.l.b16 %v783
    %v988 = vunpack.c.l.b16 %v784
    %v989 = vunpack.c.l.b16 %v785
    %v990 = vunpack.c.l.b16 %v786
    %v991 = vunpack.c.l.b16 %v787
    %v992 = vunpack.c.l.b16 %v788
    %v993 = vunpack.c.l.b16 %v789
    %v994 = vunpack.c.l.b16 %v790
    %v995 = vunpack.c.l.b16 %v791
    %v996 = vunpack.c.l.b16 %v792
    %v997 = vunpack.c.l.b16 %v793
    %v998 = vunpack.c.l.b16 %v794
    %v999 = vunpack.c.l.b16 %v795
    %v1000 = vunpack.c.l.b16 %v796
    %v1001 = vunpack.c.l.b16 %v797
    %v1002 = vunpack.c.l.b16 %v798
    %v1003 = vunpack.c.l.b16 %v799
    %v1004 = vunpack.c.l.b16 %v800
    %v1005 = vunpack.c.l.b16 %v801
    %v1006 = vunpack.c.l.b16 %v802
    %v1007 = vunpack.c.l.b16 %v803
    %v1008 = vunpack.c.l.b16 %v804
    %v1009 = vunpack.c.l.b16 %v805
    %v1010 = vunpack.c.l.b16 %v806
    %v1011 = vunpack.c.l.b16 %v807
    %v1012 = vunpack.c.l.b16 %v808
    %v1013 = vunpack.c.l.b16 %v809
    %v1014 = vunpack.c.l.b16 %v810
    %v1015 = vunpack.c.l.b16 %v811
    %v1016 = vunpack.c.l.b16 %v812
    %v1017 = vunpack.c.l.b16 %v813
    %v1018 = vunpack.c.l.b16 %v814
    %v1019 = vunpack.c.l.b16 %v815
    %v1020 = vunpack.c.l.b16 %v816
    %v1021 = vunpack.c.l.b16 %v817
    %v1022 = vunpack.c.l.b16 %v818
    %v1023 = vunpack.c.l.b16 %v819
    %v1024 = vunpack.c.l.b16 %v820
    %v1025 = vunpack.c.l.b16 %v821
    %v1026 = vunpack.c.l.b16 %v822
    %v1027 = vunpack.c.l.b16 %v823
    %v1028 = vunpack.c.l.b16 %v824
    %v1029 = vpack.c.b16 %v958, %v957
    %v1030 = vpack.c.b16 %v960, %v959
    %v1031 = vpack.c.b16 %v962, %v961
    %v1032 = vpack.c.b16 %v964, %v963
    %v1033 = vpack.c.b16 %v966, %v965
    %v1034 = vpack.c.b16 %v968, %v967
    %v1035 = vpack.c.b16 %v970, %v969
    %v1036 = vpack.c.b16 %v972, %v971
    %v1037 = vpack.c.b16 %v974, %v973
    %v1038 = vpack.c.b16 %v976, %v975
    %v1039 = vpack.c.b16 %v978, %v977
    %v1040 = vpack.c.b16 %v980, %v979
    %v1041 = vpack.c.b16 %v982, %v981
    %v1042 = vpack.c.b16 %v984, %v983
    %v1043 = vpack.c.b16 %v986, %v985
    %v1044 = vpack.c.b16 %v988, %v987
    %v1045 = vpack.c.b16 %v990, %v989
    %v1046 = vpack.c.b16 %v992, %v991
    %v1047 = vpack.c.b16 %v994, %v993
    %v1048 = vpack.c.b16 %v996, %v995
    %v1049 = vpack.c.b16 %v998, %v997
    %v1050 = vpack.c.b16 %v1000, %v999
    %v1051 = vpack.c.b16 %v1002, %v1001
    %v1052 = vpack.c.b16 %v1004, %v1003
    %v1053 = vpack.c.b16 %v1006, %v1005
    %v1054 = vpack.c.b16 %v1008, %v1007
    %v1055 = vpack.c.b16 %v1010, %v1009
    %v1056 = vpack.c.b16 %v1012, %v1011
    %v1057 = vpack.c.b16 %v1014, %v1013
    %v1058 = vpack.c.b16 %v1016, %v1015
    %v1059 = vpack.c.b16 %v1018, %v1017
    %v1060 = vpack.c.b16 %v1020, %v1019
    %v1061 = vpack.c.b16 %v1022, %v1021
    %v1062 = vpack.c.b16 %v1024, %v1023
    %v1063 = vpack.c.b16 %v1026, %v1025
    %v1064 = vpack.c.b16 %v1028, %v1027
    %v1102 = vsel %vm476, %v829, 0
    %v1105 = vsel %vm476, %v833, 0
    %v1108 = vsel %vm476, %v837, 0
    %v1111 = vsel %vm476, %v841, 0
    %v1114 = vsel %vm476, %v846, 0
    %v1117 = vsel %vm476, %v850, 0
    %v1120 = vsel %vm476, %v854, 0
    %v1123 = vsel %vm476, %v858, 0
    %1125 = vmatprep.subr.bf16.mxu0 0
    %1126 = vmatpush1.bf16.msra.mxu0 %v1036
    %1127 = vmatprep.subr.bf16.mxu0 0
    %1128 = vmatpush1.bf16.msra.mxu0 %v1035
    %1129 = vmatprep.subr.bf16.mxu0 0
    %1130 = vmatpush1.bf16.msra.mxu0 %v1034
    %1131 = vmatprep.subr.bf16.mxu0 0
    %1132 = vmatpush1.bf16.msra.mxu0 %v1033
    %1133 = vmatprep.subr.bf16.mxu0 0
    %1134 = vmatpush1.bf16.msra.mxu0 %v1032
    %1135 = vmatprep.subr.bf16.mxu0 0
    %1136 = vmatpush1.bf16.msra.mxu0 %v1031
    %1137 = vmatprep.subr.bf16.mxu0 0
    %1138 = vmatpush1.bf16.msra.mxu0 %v1030
    %1139 = vmatprep.subr.bf16.mxu0 0
    %1140 = vmatpush1.bf16.msra.mxu0 %v1029
    %1141 = vmatprep.subr.bf16.mxu0 0
    %1142 = vmatpush2.bf16.msra.mxu0 %v1044
    %1143 = vmatprep.subr.bf16.mxu0 0
    %1144 = vmatpush2.bf16.msra.mxu0 %v1043
    %1145 = vmatprep.subr.bf16.mxu0 0
    %1146 = vmatpush2.bf16.msra.mxu0 %v1042
    %1147 = vmatprep.subr.bf16.mxu0 0
    %1148 = vmatpush2.bf16.msra.mxu0 %v1041
    %1149 = vmatprep.subr.bf16.mxu0 0
    %1150 = vmatpush2.bf16.msra.mxu0 %v1040
    %1151 = vmatprep.subr.bf16.mxu0 0
    %1152 = vmatpush2.bf16.msra.mxu0 %v1039
    %1153 = vmatprep.subr.bf16.mxu0 0
    %1154 = vmatpush2.bf16.msra.mxu0 %v1038
    %1155 = vmatprep.subr.bf16.mxu0 0
    %1156 = vmatpush2.bf16.msra.mxu0 %v1037
    %1157 = vmatprep.mubr.bf16.mxu0 %v826
    %1158 = vmatmul.mubr.bf16.gmra.mxu0 %v825
    %v1159 = vpop.f32.mrf.mxu0
    %v1160 = vadd.f32 0.0, %v1159
    %v1161 = vpop.f32.mrf.mxu0
    %v1162 = vpop.f32.mrf.mxu0
    %v1163 = vadd.f32 0.0, %v1162
    %v1164 = vpop.f32.mrf.mxu0
    %1165 = vmatprep.mubr.bf16.mxu0 %v830
    %1166 = vmatmul.mubr.bf16.gmra.mxu0 %v828
    %v1167 = vpop.f32.mrf.mxu0
    %v1168 = vadd.f32 0.0, %v1167
    %v1169 = vpop.f32.mrf.mxu0
    %v1170 = vpop.f32.mrf.mxu0
    %v1171 = vadd.f32 0.0, %v1170
    %v1172 = vpop.f32.mrf.mxu0
    %1173 = vmatprep.mubr.bf16.mxu0 %v834
    %1174 = vmatmul.mubr.bf16.gmra.mxu0 %v832
    %v1175 = vpop.f32.mrf.mxu0
    %v1176 = vadd.f32 0.0, %v1175
    %v1177 = vpop.f32.mrf.mxu0
    %v1178 = vpop.f32.mrf.mxu0
    %v1179 = vadd.f32 0.0, %v1178
    %v1180 = vpop.f32.mrf.mxu0
    %1181 = vmatprep.mubr.bf16.mxu0 %v838
    %1182 = vmatmul.mubr.bf16.gmra.mxu0 %v836
    %v1183 = vpop.f32.mrf.mxu0
    %v1184 = vadd.f32 0.0, %v1183
    %v1185 = vpop.f32.mrf.mxu0
    %v1186 = vpop.f32.mrf.mxu0
    %v1187 = vadd.f32 0.0, %v1186
    %v1188 = vpop.f32.mrf.mxu0
    %1189 = vmatprep.mubr.bf16.mxu0 %v843
    %1190 = vmatmul.mubr.bf16.gmra.mxu0 %v842
    %v1191 = vpop.f32.mrf.mxu0
    %v1192 = vadd.f32 0.0, %v1191
    %v1193 = vpop.f32.mrf.mxu0
    %v1194 = vpop.f32.mrf.mxu0
    %v1195 = vadd.f32 0.0, %v1194
    %v1196 = vpop.f32.mrf.mxu0
    %1197 = vmatprep.mubr.bf16.mxu0 %v847
    %1198 = vmatmul.mubr.bf16.gmra.mxu0 %v845
    %v1199 = vpop.f32.mrf.mxu0
    %v1200 = vadd.f32 0.0, %v1199
    %v1201 = vpop.f32.mrf.mxu0
    %v1202 = vpop.f32.mrf.mxu0
    %v1203 = vadd.f32 0.0, %v1202
    %v1204 = vpop.f32.mrf.mxu0
    %1205 = vmatprep.mubr.bf16.mxu0 %v851
    %1206 = vmatmul.mubr.bf16.gmra.mxu0 %v849
    %v1207 = vpop.f32.mrf.mxu0
    %v1208 = vadd.f32 0.0, %v1207
    %v1209 = vpop.f32.mrf.mxu0
    %v1210 = vpop.f32.mrf.mxu0
    %v1211 = vadd.f32 0.0, %v1210
    %v1212 = vpop.f32.mrf.mxu0
    %1213 = vmatprep.mubr.bf16.mxu0 %v855
    %1214 = vmatmul.mubr.bf16.gmra.mxu0 %v853
    %v1215 = vpop.f32.mrf.mxu0
    %v1216 = vadd.f32 0.0, %v1215
    %v1217 = vpop.f32.mrf.mxu0
    %v1218 = vpop.f32.mrf.mxu0
    %v1219 = vadd.f32 0.0, %v1218
    %v1220 = vpop.f32.mrf.mxu0
    %1221 = vdwg.mxu0
    %1222 = vmatprep.subr.bf16.mxu0 0
    %1223 = vmatpush1.bf16.msra.mxu0 %v1052
    %1224 = vmatprep.subr.bf16.mxu0 0
    %1225 = vmatpush1.bf16.msra.mxu0 %v1051
    %1226 = vmatprep.subr.bf16.mxu0 0
    %1227 = vmatpush1.bf16.msra.mxu0 %v1050
    %1228 = vmatprep.subr.bf16.mxu0 0
    %1229 = vmatpush1.bf16.msra.mxu0 %v1049
    %1230 = vmatprep.subr.bf16.mxu0 0
    %1231 = vmatpush1.bf16.msra.mxu0 %v1048
    %1232 = vmatprep.subr.bf16.mxu0 0
    %1233 = vmatpush1.bf16.msra.mxu0 %v1047
    %1234 = vmatprep.subr.bf16.mxu0 0
    %1235 = vmatpush1.bf16.msra.mxu0 %v1046
    %1236 = vmatprep.subr.bf16.mxu0 0
    %1237 = vmatpush1.bf16.msra.mxu0 %v1045
    %1238 = vmatprep.subr.bf16.mxu0 0
    %1239 = vmatpush2.bf16.msra.mxu0 %v1060
    %1240 = vmatprep.subr.bf16.mxu0 0
    %1241 = vmatpush2.bf16.msra.mxu0 %v1059
    %1242 = vmatprep.subr.bf16.mxu0 0
    %1243 = vmatpush2.bf16.msra.mxu0 %v1058
    %1244 = vmatprep.subr.bf16.mxu0 0
    %1245 = vmatpush2.bf16.msra.mxu0 %v1057
    %1246 = vmatprep.subr.bf16.mxu0 0
    %1247 = vmatpush2.bf16.msra.mxu0 %v1056
    %1248 = vmatprep.subr.bf16.mxu0 0
    %1249 = vmatpush2.bf16.msra.mxu0 %v1055
    %1250 = vmatprep.subr.bf16.mxu0 0
    %1251 = vmatpush2.bf16.msra.mxu0 %v1054
    %1252 = vmatprep.subr.bf16.mxu0 0
    %1253 = vmatpush2.bf16.msra.mxu0 %v1053
    %1254 = vmatprep.mubr.bf16.mxu0 %v828
    %1255 = vmatmul.mubr.bf16.gmra.mxu0 %v827
    %v1256 = vpop.f32.mrf.mxu0
    %v1257 = vadd.f32 %v1160, %v1256
    %v1258 = vpop.f32.mrf.mxu0
    %v1259 = vpop.f32.mrf.mxu0
    %v1260 = vadd.f32 %v1163, %v1259
    %v1261 = vpop.f32.mrf.mxu0
    %1262 = vmatprep.mubr.bf16.mxu0 %v832
    %1263 = vmatmul.mubr.bf16.gmra.mxu0 %v831
    %v1264 = vpop.f32.mrf.mxu0
    %v1265 = vadd.f32 %v1168, %v1264
    %v1266 = vpop.f32.mrf.mxu0
    %v1267 = vpop.f32.mrf.mxu0
    %v1268 = vadd.f32 %v1171, %v1267
    %v1269 = vpop.f32.mrf.mxu0
    %1270 = vmatprep.mubr.bf16.mxu0 %v836
    %1271 = vmatmul.mubr.bf16.gmra.mxu0 %v835
    %v1272 = vpop.f32.mrf.mxu0
    %v1273 = vadd.f32 %v1176, %v1272
    %v1274 = vpop.f32.mrf.mxu0
    %v1275 = vpop.f32.mrf.mxu0
    %v1276 = vadd.f32 %v1179, %v1275
    %v1277 = vpop.f32.mrf.mxu0
    %1278 = vmatprep.mubr.bf16.mxu0 %v840
    %1279 = vmatmul.mubr.bf16.gmra.mxu0 %v839
    %v1280 = vpop.f32.mrf.mxu0
    %v1281 = vadd.f32 %v1184, %v1280
    %v1282 = vpop.f32.mrf.mxu0
    %v1283 = vpop.f32.mrf.mxu0
    %v1284 = vadd.f32 %v1187, %v1283
    %v1285 = vpop.f32.mrf.mxu0
    %1286 = vmatprep.mubr.bf16.mxu0 %v845
    %1287 = vmatmul.mubr.bf16.gmra.mxu0 %v844
    %v1288 = vpop.f32.mrf.mxu0
    %v1289 = vadd.f32 %v1192, %v1288
    %v1290 = vpop.f32.mrf.mxu0
    %v1291 = vpop.f32.mrf.mxu0
    %v1292 = vadd.f32 %v1195, %v1291
    %v1293 = vpop.f32.mrf.mxu0
    %1294 = vmatprep.mubr.bf16.mxu0 %v849
    %1295 = vmatmul.mubr.bf16.gmra.mxu0 %v848
    %v1296 = vpop.f32.mrf.mxu0
    %v1297 = vadd.f32 %v1200, %v1296
    %v1298 = vpop.f32.mrf.mxu0
    %v1299 = vpop.f32.mrf.mxu0
    %v1300 = vadd.f32 %v1203, %v1299
    %v1301 = vpop.f32.mrf.mxu0
    %1302 = vmatprep.mubr.bf16.mxu0 %v853
    %1303 = vmatmul.mubr.bf16.gmra.mxu0 %v852
    %v1304 = vpop.f32.mrf.mxu0
    %v1305 = vadd.f32 %v1208, %v1304
    %v1306 = vpop.f32.mrf.mxu0
    %v1307 = vpop.f32.mrf.mxu0
    %v1308 = vadd.f32 %v1211, %v1307
    %v1309 = vpop.f32.mrf.mxu0
    %1310 = vmatprep.mubr.bf16.mxu0 %v857
    %1311 = vmatmul.mubr.bf16.gmra.mxu0 %v856
    %v1312 = vpop.f32.mrf.mxu0
    %v1313 = vadd.f32 %v1216, %v1312
    %v1314 = vpop.f32.mrf.mxu0
    %v1315 = vpop.f32.mrf.mxu0
    %v1316 = vadd.f32 %v1219, %v1315
    %v1317 = vpop.f32.mrf.mxu0
    %1318 = vdwg.mxu0
    %1319 = vmatprep.subr.bf16.mxu0 0
    %1320 = vmatpush1.bf16.msra.mxu0 0
    %1321 = vmatprep.subr.bf16.mxu0 0
    %1322 = vmatpush1.bf16.msra.mxu0 0
    %1323 = vmatprep.subr.bf16.mxu0 0
    %1324 = vmatpush1.bf16.msra.mxu0 0
    %1325 = vmatprep.subr.bf16.mxu0 0
    %1326 = vmatpush1.bf16.msra.mxu0 0
    %1327 = vmatprep.subr.bf16.mxu0 0
    %1328 = vmatpush1.bf16.msra.mxu0 %v1064
    %1329 = vmatprep.subr.bf16.mxu0 0
    %1330 = vmatpush1.bf16.msra.mxu0 %v1063
    %1331 = vmatprep.subr.bf16.mxu0 0
    %1332 = vmatpush1.bf16.msra.mxu0 %v1062
    %1333 = vmatprep.subr.bf16.mxu0 0
    %1334 = vmatpush1.bf16.msra.mxu0 %v1061
    %1335 = vmatprep.subr.bf16.mxu0 0
    %1336 = vmatpush2.bf16.msra.mxu0 0
    %1337 = vmatprep.subr.bf16.mxu0 0
    %1338 = vmatpush2.bf16.msra.mxu0 0
    %1339 = vmatprep.subr.bf16.mxu0 0
    %1340 = vmatpush2.bf16.msra.mxu0 0
    %1341 = vmatprep.subr.bf16.mxu0 0
    %1342 = vmatpush2.bf16.msra.mxu0 0
    %1343 = vmatprep.subr.bf16.mxu0 0
    %1344 = vmatpush2.bf16.msra.mxu0 0
    %1345 = vmatprep.subr.bf16.mxu0 0
    %1346 = vmatpush2.bf16.msra.mxu0 0
    %1347 = vmatprep.subr.bf16.mxu0 0
    %1348 = vmatpush2.bf16.msra.mxu0 0
    %1349 = vmatprep.subr.bf16.mxu0 0
    %1350 = vmatpush2.bf16.msra.mxu0 0
    %1351 = vmatprep.mubr.bf16.mxu0 0
    %1352 = vmatmul.mubr.bf16.gmra.mxu0 %v1102
    %v1353 = vpop.f32.mrf.mxu0
    %v1354 = vadd.f32 %v1257, %v1353
    %v1355 = vpop.f32.mrf.mxu0
    %v1356 = vpop.f32.mrf.mxu0
    %v1357 = vadd.f32 %v1260, %v1356
    %v1358 = vpop.f32.mrf.mxu0
    %1359 = vmatprep.mubr.bf16.mxu0 0
    %1360 = vmatmul.mubr.bf16.gmra.mxu0 %v1105
    %v1361 = vpop.f32.mrf.mxu0
    %v1362 = vadd.f32 %v1265, %v1361
    %v1363 = vpop.f32.mrf.mxu0
    %v1364 = vpop.f32.mrf.mxu0
    %v1365 = vadd.f32 %v1268, %v1364
    %v1366 = vpop.f32.mrf.mxu0
    %1367 = vmatprep.mubr.bf16.mxu0 0
    %1368 = vmatmul.mubr.bf16.gmra.mxu0 %v1108
    %v1369 = vpop.f32.mrf.mxu0
    %v1370 = vadd.f32 %v1273, %v1369
    %v1371 = vpop.f32.mrf.mxu0
    %v1372 = vpop.f32.mrf.mxu0
    %v1373 = vadd.f32 %v1276, %v1372
    %v1374 = vpop.f32.mrf.mxu0
    %1375 = vmatprep.mubr.bf16.mxu0 0
    %1376 = vmatmul.mubr.bf16.gmra.mxu0 %v1111
    %v1377 = vpop.f32.mrf.mxu0
    %v1378 = vadd.f32 %v1281, %v1377
    %v1379 = vpop.f32.mrf.mxu0
    %v1380 = vpop.f32.mrf.mxu0
    %v1381 = vadd.f32 %v1284, %v1380
    %v1382 = vpop.f32.mrf.mxu0
    %1383 = vmatprep.mubr.bf16.mxu0 0
    %1384 = vmatmul.mubr.bf16.gmra.mxu0 %v1114
    %v1385 = vpop.f32.mrf.mxu0
    %v1386 = vadd.f32 %v1289, %v1385
    %v1387 = vpop.f32.mrf.mxu0
    %v1388 = vpop.f32.mrf.mxu0
    %v1389 = vadd.f32 %v1292, %v1388
    %v1390 = vpop.f32.mrf.mxu0
    %1391 = vmatprep.mubr.bf16.mxu0 0
    %1392 = vmatmul.mubr.bf16.gmra.mxu0 %v1117
    %v1393 = vpop.f32.mrf.mxu0
    %v1394 = vadd.f32 %v1297, %v1393
    %v1395 = vpop.f32.mrf.mxu0
    %v1396 = vpop.f32.mrf.mxu0
    %v1397 = vadd.f32 %v1300, %v1396
    %v1398 = vpop.f32.mrf.mxu0
    %1399 = vmatprep.mubr.bf16.mxu0 0
    %1400 = vmatmul.mubr.bf16.gmra.mxu0 %v1120
    %v1401 = vpop.f32.mrf.mxu0
    %v1402 = vadd.f32 %v1305, %v1401
    %v1403 = vpop.f32.mrf.mxu0
    %v1404 = vpop.f32.mrf.mxu0
    %v1405 = vadd.f32 %v1308, %v1404
    %v1406 = vpop.f32.mrf.mxu0
    %1407 = vmatprep.mubr.bf16.mxu0 0
    %1408 = vmatmul.mubr.bf16.gmra.mxu0 %v1123
    %v1409 = vpop.f32.mrf.mxu0
    %v1410 = vadd.f32 %v1313, %v1409
    %v1411 = vpop.f32.mrf.mxu0
    %v1412 = vpop.f32.mrf.mxu0
    %v1413 = vadd.f32 %v1316, %v1412
    %v1414 = vpop.f32.mrf.mxu0
    %1415 = vdwg.mxu0
    %v1416 = vld [vmem:[%s2] sm:$0x1]
    %v1418 = vlaneseq
    %v1419 = vshrl.u32 %v1418, 7
    %v1420 = vsub.s32 0, %v1419
    %v1421 = vrot.slane %v1416, %v1420
    %v1423 = vmul.f32 %v1354, %v1421
    %v1424 = vmul.f32 %v1357, %v1421
    %v1425 = vmul.f32 %v1362, %v1421
    %v1426 = vmul.f32 %v1365, %v1421
    %v1427 = vmul.f32 %v1370, %v1421
    %v1428 = vmul.f32 %v1373, %v1421
    %v1429 = vmul.f32 %v1378, %v1421
    %v1430 = vmul.f32 %v1381, %v1421
    %v1431 = vmul.f32 %v1386, %v1421
    %v1432 = vmul.f32 %v1389, %v1421
    %v1433 = vmul.f32 %v1394, %v1421
    %v1434 = vmul.f32 %v1397, %v1421
    %v1435 = vmul.f32 %v1402, %v1421
    %v1436 = vmul.f32 %v1405, %v1421
    %v1437 = vmul.f32 %v1410, %v1421
    %v1438 = vmul.f32 %v1413, %v1421
    %v1439 = vld [vmem:[%s3] sm:$0x1]
    %v1441 = vlaneseq
    %v1442 = vshrl.u32 %v1441, 7
    %v1443 = vsub.s32 0, %v1442
    %v1444 = vrot.slane %v1439, %v1443
    %v1446 = vadd.f32 %v1423, %v1444
    %v1447 = vadd.f32 %v1424, %v1444
    %v1448 = vadd.f32 %v1425, %v1444
    %v1449 = vadd.f32 %v1426, %v1444
    %v1450 = vadd.f32 %v1427, %v1444
    %v1451 = vadd.f32 %v1428, %v1444
    %v1452 = vadd.f32 %v1429, %v1444
    %v1453 = vadd.f32 %v1430, %v1444
    %v1454 = vadd.f32 %v1431, %v1444
    %v1455 = vadd.f32 %v1432, %v1444
    %v1456 = vadd.f32 %v1433, %v1444
    %v1457 = vadd.f32 %v1434, %v1444
    %v1458 = vadd.f32 %v1435, %v1444
    %v1459 = vadd.f32 %v1436, %v1444
    %v1460 = vadd.f32 %v1437, %v1444
    %v1461 = vadd.f32 %v1438, %v1444
    %v1462 = vmax.f32 %v1446, 0.0
    %v1463 = vmax.f32 %v1447, 0.0
    %v1464 = vmax.f32 %v1448, 0.0
    %v1465 = vmax.f32 %v1449, 0.0
    %v1466 = vmax.f32 %v1450, 0.0
    %v1467 = vmax.f32 %v1451, 0.0
    %v1468 = vmax.f32 %v1452, 0.0
    %v1469 = vmax.f32 %v1453, 0.0
    %v1470 = vmax.f32 %v1454, 0.0
    %v1471 = vmax.f32 %v1455, 0.0
    %v1472 = vmax.f32 %v1456, 0.0
    %v1473 = vmax.f32 %v1457, 0.0
    %v1474 = vmax.f32 %v1458, 0.0
    %v1475 = vmax.f32 %v1459, 0.0
    %v1476 = vmax.f32 %v1460, 0.0
    %v1477 = vmax.f32 %v1461, 0.0
    %1478 = vst [vmem:[#allocation2] sm:$0xf] 0
    %1479 = vst [vmem:[#allocation2 + $0x4] sm:$0x1] 0
    %1480 = vst [vmem:[#allocation2 + $0x8] sm:$0xf] 0
    %1481 = vst [vmem:[#allocation2 + $0xc] sm:$0x1] 0
    %1482 = vst [vmem:[#allocation2 + $0x10] sm:$0xf] 0
    %1483 = vst [vmem:[#allocation2 + $0x14] sm:$0x1] 0
    %1484 = vst [vmem:[#allocation2 + $0x18] sm:$0xf] 0
    %1485 = vst [vmem:[#allocation2 + $0x1c] sm:$0x1] 0
    %1486 = vst [vmem:[#allocation2 + $0x20] sm:$0xf] 0
    %1487 = vst [vmem:[#allocation2 + $0x24] sm:$0x1] 0
    %1488 = vst [vmem:[#allocation2 + $0x28] sm:$0xf] 0
    %1489 = vst [vmem:[#allocation2 + $0x2c] sm:$0x1] 0
    %1490 = vst [vmem:[#allocation2 + $0x30] sm:$0xf] 0
    %1491 = vst [vmem:[#allocation2 + $0x34] sm:$0x1] 0
    %1492 = vst [vmem:[#allocation2 + $0x38] sm:$0xf] 0
    %1493 = vst [vmem:[#allocation2 + $0x3c] sm:$0x1] 0
    %1494 = vst [vmem:[#allocation2 + $0x40] sm:$0xf] 0
    %1495 = vst [vmem:[#allocation2 + $0x44] sm:$0x1] 0
    %1496 = vst [vmem:[#allocation2 + $0x48] sm:$0xf] 0
    %1497 = vst [vmem:[#allocation2 + $0x4c] sm:$0x1] 0
    %1498 = vst [vmem:[#allocation2 + $0x50] sm:$0xf] 0
    %1499 = vst [vmem:[#allocation2 + $0x54] sm:$0x1] 0
    %1500 = vst [vmem:[#allocation2 + $0x58] sm:$0xf] 0
    %1501 = vst [vmem:[#allocation2 + $0x5c] sm:$0x1] 0
    %1502 = vst [vmem:[#allocation2 + $0x60] sm:$0xf] 0
    %1503 = vst [vmem:[#allocation2 + $0x64] sm:$0x1] 0
    %1504 = vst [vmem:[#allocation2 + $0x68] sm:$0xf] 0
    %1505 = vst [vmem:[#allocation2 + $0x6c] sm:$0x1] 0
    %1506 = vst [vmem:[#allocation2 + $0x70] sm:$0xf] 0
    %1507 = vst [vmem:[#allocation2 + $0x74] sm:$0x1] 0
    %1508 = vst [vmem:[#allocation2 + $0x78] sm:$0xf] 0
    %1509 = vst [vmem:[#allocation2 + $0x7c] sm:$0x1] 0
    %1510 = vst [vmem:[#allocation2 + $0x80] sm:$0xf] 0
    %1511 = vst [vmem:[#allocation2 + $0x84] sm:$0x1] 0
    %1512 = vst [vmem:[#allocation2 + $0x88] sm:$0xf] 0
    %1513 = vst [vmem:[#allocation2 + $0x8c] sm:$0x1] 0
    %1514 = vst [vmem:[#allocation2 + $0x90] sm:$0xf] 0
    %1515 = vst [vmem:[#allocation2 + $0x94] sm:$0x1] 0
    %1516 = vst [vmem:[#allocation2 + $0x98] sm:$0xf] 0
    %1517 = vst [vmem:[#allocation2 + $0x9c] sm:$0x1] 0
    %v1518 = vpack.c.bf16 %v1462, %v1462
    %v1519 = vpack.c.bf16 %v1463, %v1463
    %v1520 = vpack.c.bf16 %v1464, %v1464
    %v1521 = vpack.c.bf16 %v1465, %v1465
    %v1522 = vpack.c.bf16 %v1466, %v1466
    %v1523 = vpack.c.bf16 %v1467, %v1467
    %v1524 = vpack.c.bf16 %v1468, %v1468
    %v1525 = vpack.c.bf16 %v1469, %v1469
    %v1526 = vpack.c.bf16 %v1470, %v1470
    %v1527 = vpack.c.bf16 %v1471, %v1471
    %v1528 = vpack.c.bf16 %v1472, %v1472
    %v1529 = vpack.c.bf16 %v1473, %v1473
    %v1530 = vpack.c.bf16 %v1474, %v1474
    %v1531 = vpack.c.bf16 %v1475, %v1475
    %v1532 = vpack.c.bf16 %v1476, %v1476
    %v1533 = vpack.c.bf16 %v1477, %v1477
    %v1550 = vunpack.c.l.b16 %v1518
    %v1551 = vunpack.c.l.b16 %v1519
    %v1552 = vunpack.c.l.b16 %v1520
    %v1553 = vunpack.c.l.b16 %v1521
    %v1554 = vunpack.c.l.b16 %v1522
    %v1555 = vunpack.c.l.b16 %v1523
    %v1556 = vunpack.c.l.b16 %v1524
    %v1557 = vunpack.c.l.b16 %v1525
    %v1558 = vunpack.c.l.b16 %v1526
    %v1559 = vunpack.c.l.b16 %v1527
    %v1560 = vunpack.c.l.b16 %v1528
    %v1561 = vunpack.c.l.b16 %v1529
    %v1562 = vunpack.c.l.b16 %v1530
    %v1563 = vunpack.c.l.b16 %v1531
    %v1564 = vunpack.c.l.b16 %v1532
    %v1565 = vunpack.c.l.b16 %v1533
    %v1566 = vpack.c.b16 %v1550, %v1550
    %v1567 = vpack.c.b16 %v1551, %v1551
    %v1568 = vpack.c.b16 %v1552, %v1552
    %v1569 = vpack.c.b16 %v1553, %v1553
    %v1570 = vpack.c.b16 %v1554, %v1554
    %v1571 = vpack.c.b16 %v1555, %v1555
    %v1572 = vpack.c.b16 %v1556, %v1556
    %v1573 = vpack.c.b16 %v1557, %v1557
    %v1574 = vpack.c.b16 %v1558, %v1558
    %v1575 = vpack.c.b16 %v1559, %v1559
    %v1576 = vpack.c.b16 %v1560, %v1560
    %v1577 = vpack.c.b16 %v1561, %v1561
    %v1578 = vpack.c.b16 %v1562, %v1562
    %v1579 = vpack.c.b16 %v1563, %v1563
    %v1580 = vpack.c.b16 %v1564, %v1564
    %v1581 = vpack.c.b16 %v1565, %v1565
    %v1583 = vshrl.u32 %v1566, 16
    %v1585 = vrot.slane %v1583, 7
    %v1586 = vshll.u32 %v1566, 16
    %v1588 = vor.u32 %v1585, %v1586
    %v1589 = vrot.slane %v1585, 4
    %v1591 = vshrl.u32 %v1567, 16
    %v1593 = vrot.slane %v1591, 7
    %v1594 = vshll.u32 %v1567, 16
    %v1596 = vor.u32 %v1593, %v1594
    %v1597 = vrot.slane %v1593, 4
    %v1599 = vshrl.u32 %v1568, 16
    %v1601 = vrot.slane %v1599, 7
    %v1602 = vshll.u32 %v1568, 16
    %v1604 = vor.u32 %v1601, %v1602
    %v1605 = vrot.slane %v1601, 4
    %v1607 = vshrl.u32 %v1569, 16
    %v1609 = vrot.slane %v1607, 7
    %v1610 = vshll.u32 %v1569, 16
    %v1612 = vor.u32 %v1609, %v1610
    %v1613 = vrot.slane %v1609, 4
    %v1615 = vshrl.u32 %v1570, 16
    %v1617 = vrot.slane %v1615, 7
    %v1618 = vshll.u32 %v1570, 16
    %v1620 = vor.u32 %v1617, %v1618
    %v1621 = vrot.slane %v1617, 4
    %v1623 = vshrl.u32 %v1571, 16
    %v1625 = vrot.slane %v1623, 7
    %v1626 = vshll.u32 %v1571, 16
    %v1628 = vor.u32 %v1625, %v1626
    %v1629 = vrot.slane %v1625, 4
    %v1631 = vshrl.u32 %v1572, 16
    %v1633 = vrot.slane %v1631, 7
    %v1634 = vshll.u32 %v1572, 16
    %v1636 = vor.u32 %v1633, %v1634
    %v1637 = vrot.slane %v1633, 4
    %v1639 = vshrl.u32 %v1573, 16
    %v1641 = vrot.slane %v1639, 7
    %v1642 = vshll.u32 %v1573, 16
    %v1644 = vor.u32 %v1641, %v1642
    %v1645 = vrot.slane %v1641, 4
    %v1647 = vshrl.u32 %v1574, 16
    %v1649 = vrot.slane %v1647, 7
    %v1650 = vshll.u32 %v1574, 16
    %v1652 = vor.u32 %v1649, %v1650
    %v1653 = vrot.slane %v1649, 4
    %v1655 = vshrl.u32 %v1575, 16
    %v1657 = vrot.slane %v1655, 7
    %v1658 = vshll.u32 %v1575, 16
    %v1660 = vor.u32 %v1657, %v1658
    %v1661 = vrot.slane %v1657, 4
    %v1663 = vshrl.u32 %v1576, 16
    %v1665 = vrot.slane %v1663, 7
    %v1666 = vshll.u32 %v1576, 16
    %v1668 = vor.u32 %v1665, %v1666
    %v1669 = vrot.slane %v1665, 4
    %v1671 = vshrl.u32 %v1577, 16
    %v1673 = vrot.slane %v1671, 7
    %v1674 = vshll.u32 %v1577, 16
    %v1676 = vor.u32 %v1673, %v1674
    %v1677 = vrot.slane %v1673, 4
    %v1679 = vshrl.u32 %v1578, 16
    %v1681 = vrot.slane %v1679, 7
    %v1682 = vshll.u32 %v1578, 16
    %v1684 = vor.u32 %v1681, %v1682
    %v1685 = vrot.slane %v1681, 4
    %v1687 = vshrl.u32 %v1579, 16
    %v1689 = vrot.slane %v1687, 7
    %v1690 = vshll.u32 %v1579, 16
    %v1692 = vor.u32 %v1689, %v1690
    %v1693 = vrot.slane %v1689, 4
    %v1695 = vshrl.u32 %v1580, 16
    %v1697 = vrot.slane %v1695, 7
    %v1698 = vshll.u32 %v1580, 16
    %v1700 = vor.u32 %v1697, %v1698
    %v1701 = vrot.slane %v1697, 4
    %v1703 = vshrl.u32 %v1581, 16
    %v1705 = vrot.slane %v1703, 7
    %v1706 = vshll.u32 %v1581, 16
    %v1708 = vor.u32 %v1705, %v1706
    %v1709 = vrot.slane %v1705, 4
    %s1742 = scalar_lea.vmem [#allocation2], 8
    %vm1743 = vcmask 1043456
    %vm1744 = vsmask.f32 7938
    %vm1745 = vmand %vm1743, %vm1744
    %v1746 = vld [vmem:[%s1742] sm:$0xf]
    %v1747 = vsel %vm1745, %v1588, %v1746
    %1748 = vst [vmem:[%s1742] sm:$0xf] %v1747
    %vm1749 = vcmask 1040384
    %vm1750 = vsmask.f32 256
    %vm1751 = vmand %vm1749, %vm1750
    %v1752 = vld [vmem:[%s1742 + $0x4] sm:$0x1]
    %v1753 = vsel %vm1751, %v1589, %v1752
    %1754 = vst [vmem:[%s1742 + $0x4] sm:$0x1] %v1753
    %v1755 = vld [vmem:[%s1742 + $0x8] sm:$0xf]
    %v1756 = vsel %vm1745, %v1596, %v1755
    %1757 = vst [vmem:[%s1742 + $0x8] sm:$0xf] %v1756
    %v1758 = vld [vmem:[%s1742 + $0xc] sm:$0x1]
    %v1759 = vsel %vm1751, %v1597, %v1758
    %1760 = vst [vmem:[%s1742 + $0xc] sm:$0x1] %v1759
    %v1761 = vld [vmem:[%s1742 + $0x10] sm:$0xf]
    %v1762 = vsel %vm1745, %v1604, %v1761
    %1763 = vst [vmem:[%s1742 + $0x10] sm:$0xf] %v1762
    %v1764 = vld [vmem:[%s1742 + $0x14] sm:$0x1]
    %v1765 = vsel %vm1751, %v1605, %v1764
    %1766 = vst [vmem:[%s1742 + $0x14] sm:$0x1] %v1765
    %v1767 = vld [vmem:[%s1742 + $0x18] sm:$0xf]
    %v1768 = vsel %vm1745, %v1612, %v1767
    %1769 = vst [vmem:[%s1742 + $0x18] sm:$0xf] %v1768
    %v1770 = vld [vmem:[%s1742 + $0x1c] sm:$0x1]
    %v1771 = vsel %vm1751, %v1613, %v1770
    %1772 = vst [vmem:[%s1742 + $0x1c] sm:$0x1] %v1771
    %v1773 = vld [vmem:[%s1742 + $0x20] sm:$0xf]
    %v1774 = vsel %vm1745, %v1620, %v1773
    %1775 = vst [vmem:[%s1742 + $0x20] sm:$0xf] %v1774
    %v1776 = vld [vmem:[%s1742 + $0x24] sm:$0x1]
    %v1777 = vsel %vm1751, %v1621, %v1776
    %1778 = vst [vmem:[%s1742 + $0x24] sm:$0x1] %v1777
    %v1779 = vld [vmem:[%s1742 + $0x28] sm:$0xf]
    %v1780 = vsel %vm1745, %v1628, %v1779
    %1781 = vst [vmem:[%s1742 + $0x28] sm:$0xf] %v1780
    %v1782 = vld [vmem:[%s1742 + $0x2c] sm:$0x1]
    %v1783 = vsel %vm1751, %v1629, %v1782
    %1784 = vst [vmem:[%s1742 + $0x2c] sm:$0x1] %v1783
    %v1785 = vld [vmem:[%s1742 + $0x30] sm:$0xf]
    %v1786 = vsel %vm1745, %v1636, %v1785
    %1787 = vst [vmem:[%s1742 + $0x30] sm:$0xf] %v1786
    %v1788 = vld [vmem:[%s1742 + $0x34] sm:$0x1]
    %v1789 = vsel %vm1751, %v1637, %v1788
    %1790 = vst [vmem:[%s1742 + $0x34] sm:$0x1] %v1789
    %v1791 = vld [vmem:[%s1742 + $0x38] sm:$0xf]
    %v1792 = vsel %vm1745, %v1644, %v1791
    %1793 = vst [vmem:[%s1742 + $0x38] sm:$0xf] %v1792
    %v1794 = vld [vmem:[%s1742 + $0x3c] sm:$0x1]
    %v1795 = vsel %vm1751, %v1645, %v1794
    %1796 = vst [vmem:[%s1742 + $0x3c] sm:$0x1] %v1795
    %v1797 = vld [vmem:[%s1742 + $0x50] sm:$0xf]
    %v1798 = vsel %vm1745, %v1652, %v1797
    %1799 = vst [vmem:[%s1742 + $0x50] sm:$0xf] %v1798
    %v1800 = vld [vmem:[%s1742 + $0x54] sm:$0x1]
    %v1801 = vsel %vm1751, %v1653, %v1800
    %1802 = vst [vmem:[%s1742 + $0x54] sm:$0x1] %v1801
    %v1803 = vld [vmem:[%s1742 + $0x58] sm:$0xf]
    %v1804 = vsel %vm1745, %v1660, %v1803
    %1805 = vst [vmem:[%s1742 + $0x58] sm:$0xf] %v1804
    %v1806 = vld [vmem:[%s1742 + $0x5c] sm:$0x1]
    %v1807 = vsel %vm1751, %v1661, %v1806
    %1808 = vst [vmem:[%s1742 + $0x5c] sm:$0x1] %v1807
    %v1809 = vld [vmem:[%s1742 + $0x60] sm:$0xf]
    %v1810 = vsel %vm1745, %v1668, %v1809
    %1811 = vst [vmem:[%s1742 + $0x60] sm:$0xf] %v1810
    %v1812 = vld [vmem:[%s1742 + $0x64] sm:$0x1]
    %v1813 = vsel %vm1751, %v1669, %v1812
    %1814 = vst [vmem:[%s1742 + $0x64] sm:$0x1] %v1813
    %v1815 = vld [vmem:[%s1742 + $0x68] sm:$0xf]
    %v1816 = vsel %vm1745, %v1676, %v1815
    %1817 = vst [vmem:[%s1742 + $0x68] sm:$0xf] %v1816
    %v1818 = vld [vmem:[%s1742 + $0x6c] sm:$0x1]
    %v1819 = vsel %vm1751, %v1677, %v1818
    %1820 = vst [vmem:[%s1742 + $0x6c] sm:$0x1] %v1819
    %v1821 = vld [vmem:[%s1742 + $0x70] sm:$0xf]
    %v1822 = vsel %vm1745, %v1684, %v1821
    %1823 = vst [vmem:[%s1742 + $0x70] sm:$0xf] %v1822
    %v1824 = vld [vmem:[%s1742 + $0x74] sm:$0x1]
    %v1825 = vsel %vm1751, %v1685, %v1824
    %1826 = vst [vmem:[%s1742 + $0x74] sm:$0x1] %v1825
    %v1827 = vld [vmem:[%s1742 + $0x78] sm:$0xf]
    %v1828 = vsel %vm1745, %v1692, %v1827
    %1829 = vst [vmem:[%s1742 + $0x78] sm:$0xf] %v1828
    %v1830 = vld [vmem:[%s1742 + $0x7c] sm:$0x1]
    %v1831 = vsel %vm1751, %v1693, %v1830
    %1832 = vst [vmem:[%s1742 + $0x7c] sm:$0x1] %v1831
    %v1833 = vld [vmem:[%s1742 + $0x80] sm:$0xf]
    %v1834 = vsel %vm1745, %v1700, %v1833
    %1835 = vst [vmem:[%s1742 + $0x80] sm:$0xf] %v1834
    %v1836 = vld [vmem:[%s1742 + $0x84] sm:$0x1]
    %v1837 = vsel %vm1751, %v1701, %v1836
    %1838 = vst [vmem:[%s1742 + $0x84] sm:$0x1] %v1837
    %v1839 = vld [vmem:[%s1742 + $0x88] sm:$0xf]
    %v1840 = vsel %vm1745, %v1708, %v1839
    %1841 = vst [vmem:[%s1742 + $0x88] sm:$0xf] %v1840
    %v1842 = vld [vmem:[%s1742 + $0x8c] sm:$0x1]
    %v1843 = vsel %vm1751, %v1709, %v1842
    %1844 = vst [vmem:[%s1742 + $0x8c] sm:$0x1] %v1843
    %v1845 = vld [vmem:[#allocation2] sm:$0xf]
    %v1846 = vld [vmem:[#allocation2 + $0x4] sm:$0x1]
    %v1847 = vld [vmem:[#allocation2 + $0x8] sm:$0xf]
    %v1848 = vld [vmem:[#allocation2 + $0xc] sm:$0x1]
    %v1849 = vld [vmem:[#allocation2 + $0x10] sm:$0xf]
    %v1850 = vld [vmem:[#allocation2 + $0x14] sm:$0x1]
    %v1851 = vld [vmem:[#allocation2 + $0x18] sm:$0xf]
    %v1852 = vld [vmem:[#allocation2 + $0x1c] sm:$0x1]
    %v1853 = vld [vmem:[#allocation2 + $0x20] sm:$0xf]
    %v1854 = vld [vmem:[#allocation2 + $0x24] sm:$0x1]
    %v1855 = vld [vmem:[#allocation2 + $0x28] sm:$0xf]
    %v1856 = vld [vmem:[#allocation2 + $0x2c] sm:$0x1]
    %v1857 = vld [vmem:[#allocation2 + $0x30] sm:$0xf]
    %v1858 = vld [vmem:[#allocation2 + $0x34] sm:$0x1]
    %v1859 = vld [vmem:[#allocation2 + $0x38] sm:$0xf]
    %v1860 = vld [vmem:[#allocation2 + $0x3c] sm:$0x1]
    %v1861 = vld [vmem:[#allocation2 + $0x40] sm:$0xf]
    %v1862 = vld [vmem:[#allocation2 + $0x44] sm:$0x1]
    %v1863 = vld [vmem:[#allocation2 + $0x48] sm:$0xf]
    %v1864 = vld [vmem:[#allocation2 + $0x4c] sm:$0x1]
    %v1865 = vld [vmem:[#allocation2 + $0x50] sm:$0xf]
    %v1866 = vld [vmem:[#allocation2 + $0x54] sm:$0x1]
    %v1867 = vld [vmem:[#allocation2 + $0x58] sm:$0xf]
    %v1868 = vld [vmem:[#allocation2 + $0x5c] sm:$0x1]
    %v1869 = vld [vmem:[#allocation2 + $0x60] sm:$0xf]
    %v1870 = vld [vmem:[#allocation2 + $0x64] sm:$0x1]
    %v1871 = vld [vmem:[#allocation2 + $0x68] sm:$0xf]
    %v1872 = vld [vmem:[#allocation2 + $0x6c] sm:$0x1]
    %v1873 = vld [vmem:[#allocation2 + $0x70] sm:$0xf]
    %v1874 = vld [vmem:[#allocation2 + $0x74] sm:$0x1]
    %v1875 = vld [vmem:[#allocation2 + $0x78] sm:$0xf]
    %v1876 = vld [vmem:[#allocation2 + $0x7c] sm:$0x1]
    %v1877 = vld [vmem:[#allocation2 + $0x80] sm:$0xf]
    %v1878 = vld [vmem:[#allocation2 + $0x84] sm:$0x1]
    %v1879 = vld [vmem:[#allocation2 + $0x88] sm:$0xf]
    %v1880 = vld [vmem:[#allocation2 + $0x8c] sm:$0x1]
    %v1881 = vld [vmem:[#allocation2 + $0x90] sm:$0xf]
    %v1882 = vld [vmem:[#allocation2 + $0x94] sm:$0x1]
    %v1883 = vld [vmem:[#allocation2 + $0x98] sm:$0xf]
    %v1884 = vld [vmem:[#allocation2 + $0x9c] sm:$0x1]
    %v1885 = vld [vmem:[#allocation6] sm:$0xf]
    %v1886 = vld [vmem:[#allocation6 + $0x4] sm:$0xf]
    %v1887 = vld [vmem:[#allocation6 + $0x8] sm:$0xf]
    %v1888 = vld [vmem:[#allocation6 + $0xc] sm:$0xf]
    %v1889 = vld [vmem:[#allocation6 + $0x10] sm:$0xf]
    %v1890 = vld [vmem:[#allocation6 + $0x14] sm:$0xf]
    %v1891 = vld [vmem:[#allocation6 + $0x18] sm:$0xf]
    %v1892 = vld [vmem:[#allocation6 + $0x1c] sm:$0xf]
    %v1893 = vld [vmem:[#allocation6 + $0x20] sm:$0xf]
    %v1894 = vld [vmem:[#allocation6 + $0x24] sm:$0xf]
    %v1895 = vld [vmem:[#allocation6 + $0x28] sm:$0xf]
    %v1896 = vld [vmem:[#allocation6 + $0x2c] sm:$0xf]
    %v1897 = vld [vmem:[#allocation6 + $0x30] sm:$0xf]
    %v1898 = vld [vmem:[#allocation6 + $0x34] sm:$0xf]
    %v1899 = vld [vmem:[#allocation6 + $0x38] sm:$0xf]
    %v1900 = vld [vmem:[#allocation6 + $0x3c] sm:$0xf]
    %vm1901 = vsmask.f32 3328
    %vm1902 = vsmask.f32 7440
    %vm1903 = vmor %vm1901, %vm1902
    %v1905 = vshrl.u32 %v1845, 16
    %v1907 = vrot.slane %v1905, 4
    %v1908 = vshll.u32 %v1845, 16
    %v1910 = vrot.slane %v1908, 5
    %v1911 = vor.u32 %v1907, %v1910
    %v1912 = vrot.slane %v1911, 4
    %v1914 = vshll.u32 %v1846, 16
    %v1916 = vrot.slane %v1914, 5
    %v1917 = vsel %vm1903, %v1912, %v1916
    %v1919 = vshrl.u32 %v1847, 16
    %v1921 = vrot.slane %v1919, 4
    %v1922 = vshll.u32 %v1847, 16
    %v1924 = vrot.slane %v1922, 5
    %v1925 = vor.u32 %v1921, %v1924
    %v1926 = vrot.slane %v1925, 4
    %v1928 = vshll.u32 %v1848, 16
    %v1930 = vrot.slane %v1928, 5
    %v1931 = vsel %vm1903, %v1926, %v1930
    %v1933 = vshrl.u32 %v1849, 16
    %v1935 = vrot.slane %v1933, 4
    %v1936 = vshll.u32 %v1849, 16
    %v1938 = vrot.slane %v1936, 5
    %v1939 = vor.u32 %v1935, %v1938
    %v1940 = vrot.slane %v1939, 4
    %v1942 = vshll.u32 %v1850, 16
    %v1944 = vrot.slane %v1942, 5
    %v1945 = vsel %vm1903, %v1940, %v1944
    %v1947 = vshrl.u32 %v1851, 16
    %v1949 = vrot.slane %v1947, 4
    %v1950 = vshll.u32 %v1851, 16
    %v1952 = vrot.slane %v1950, 5
    %v1953 = vor.u32 %v1949, %v1952
    %v1954 = vrot.slane %v1953, 4
    %v1956 = vshll.u32 %v1852, 16
    %v1958 = vrot.slane %v1956, 5
    %v1959 = vsel %vm1903, %v1954, %v1958
    %v1961 = vshrl.u32 %v1853, 16
    %v1963 = vrot.slane %v1961, 4
    %v1964 = vshll.u32 %v1853, 16
    %v1966 = vrot.slane %v1964, 5
    %v1967 = vor.u32 %v1963, %v1966
    %v1968 = vrot.slane %v1967, 4
    %v1970 = vshll.u32 %v1854, 16
    %v1972 = vrot.slane %v1970, 5
    %v1973 = vsel %vm1903, %v1968, %v1972
    %v1975 = vshrl.u32 %v1855, 16
    %v1977 = vrot.slane %v1975, 4
    %v1978 = vshll.u32 %v1855, 16
    %v1980 = vrot.slane %v1978, 5
    %v1981 = vor.u32 %v1977, %v1980
    %v1982 = vrot.slane %v1981, 4
    %v1984 = vshll.u32 %v1856, 16
    %v1986 = vrot.slane %v1984, 5
    %v1987 = vsel %vm1903, %v1982, %v1986
    %v1989 = vshrl.u32 %v1857, 16
    %v1991 = vrot.slane %v1989, 4
    %v1992 = vshll.u32 %v1857, 16
    %v1994 = vrot.slane %v1992, 5
    %v1995 = vor.u32 %v1991, %v1994
    %v1996 = vrot.slane %v1995, 4
    %v1998 = vshll.u32 %v1858, 16
    %v2000 = vrot.slane %v1998, 5
    %v2001 = vsel %vm1903, %v1996, %v2000
    %v2003 = vshrl.u32 %v1859, 16
    %v2005 = vrot.slane %v2003, 4
    %v2006 = vshll.u32 %v1859, 16
    %v2008 = vrot.slane %v2006, 5
    %v2009 = vor.u32 %v2005, %v2008
    %v2010 = vrot.slane %v2009, 4
    %v2012 = vshll.u32 %v1860, 16
    %v2014 = vrot.slane %v2012, 5
    %v2015 = vsel %vm1903, %v2010, %v2014
    %v2017 = vshrl.u32 %v1865, 16
    %v2019 = vrot.slane %v2017, 4
    %v2020 = vshll.u32 %v1865, 16
    %v2022 = vrot.slane %v2020, 5
    %v2023 = vor.u32 %v2019, %v2022
    %v2024 = vrot.slane %v2023, 4
    %v2026 = vshll.u32 %v1866, 16
    %v2028 = vrot.slane %v2026, 5
    %v2029 = vsel %vm1903, %v2024, %v2028
    %v2031 = vshrl.u32 %v1867, 16
    %v2033 = vrot.slane %v2031, 4
    %v2034 = vshll.u32 %v1867, 16
    %v2036 = vrot.slane %v2034, 5
    %v2037 = vor.u32 %v2033, %v2036
    %v2038 = vrot.slane %v2037, 4
    %v2040 = vshll.u32 %v1868, 16
    %v2042 = vrot.slane %v2040, 5
    %v2043 = vsel %vm1903, %v2038, %v2042
    %v2045 = vshrl.u32 %v1869, 16
    %v2047 = vrot.slane %v2045, 4
    %v2048 = vshll.u32 %v1869, 16
    %v2050 = vrot.slane %v2048, 5
    %v2051 = vor.u32 %v2047, %v2050
    %v2052 = vrot.slane %v2051, 4
    %v2054 = vshll.u32 %v1870, 16
    %v2056 = vrot.slane %v2054, 5
    %v2057 = vsel %vm1903, %v2052, %v2056
    %v2059 = vshrl.u32 %v1871, 16
    %v2061 = vrot.slane %v2059, 4
    %v2062 = vshll.u32 %v1871, 16
    %v2064 = vrot.slane %v2062, 5
    %v2065 = vor.u32 %v2061, %v2064
    %v2066 = vrot.slane %v2065, 4
    %v2068 = vshll.u32 %v1872, 16
    %v2070 = vrot.slane %v2068, 5
    %v2071 = vsel %vm1903, %v2066, %v2070
    %v2073 = vshrl.u32 %v1873, 16
    %v2075 = vrot.slane %v2073, 4
    %v2076 = vshll.u32 %v1873, 16
    %v2078 = vrot.slane %v2076, 5
    %v2079 = vor.u32 %v2075, %v2078
    %v2080 = vrot.slane %v2079, 4
    %v2082 = vshll.u32 %v1874, 16
    %v2084 = vrot.slane %v2082, 5
    %v2085 = vsel %vm1903, %v2080, %v2084
    %v2087 = vshrl.u32 %v1875, 16
    %v2089 = vrot.slane %v2087, 4
    %v2090 = vshll.u32 %v1875, 16
    %v2092 = vrot.slane %v2090, 5
    %v2093 = vor.u32 %v2089, %v2092
    %v2094 = vrot.slane %v2093, 4
    %v2096 = vshll.u32 %v1876, 16
    %v2098 = vrot.slane %v2096, 5
    %v2099 = vsel %vm1903, %v2094, %v2098
    %v2101 = vshrl.u32 %v1877, 16
    %v2103 = vrot.slane %v2101, 4
    %v2104 = vshll.u32 %v1877, 16
    %v2106 = vrot.slane %v2104, 5
    %v2107 = vor.u32 %v2103, %v2106
    %v2108 = vrot.slane %v2107, 4
    %v2110 = vshll.u32 %v1878, 16
    %v2112 = vrot.slane %v2110, 5
    %v2113 = vsel %vm1903, %v2108, %v2112
    %v2115 = vshrl.u32 %v1879, 16
    %v2117 = vrot.slane %v2115, 4
    %v2118 = vshll.u32 %v1879, 16
    %v2120 = vrot.slane %v2118, 5
    %v2121 = vor.u32 %v2117, %v2120
    %v2122 = vrot.slane %v2121, 4
    %v2124 = vshll.u32 %v1880, 16
    %v2126 = vrot.slane %v2124, 5
    %v2127 = vsel %vm1903, %v2122, %v2126
    %v2128 = vld [vmem:[#allocation6 + $0x40] sm:$0xf]
    %v2129 = vld [vmem:[#allocation6 + $0x44] sm:$0xf]
    %v2130 = vld [vmem:[#allocation6 + $0x48] sm:$0xf]
    %v2131 = vld [vmem:[#allocation6 + $0x4c] sm:$0xf]
    %v2132 = vld [vmem:[#allocation6 + $0x50] sm:$0xf]
    %v2133 = vld [vmem:[#allocation6 + $0x54] sm:$0xf]
    %v2134 = vld [vmem:[#allocation6 + $0x58] sm:$0xf]
    %v2135 = vld [vmem:[#allocation6 + $0x5c] sm:$0xf]
    %v2136 = vld [vmem:[#allocation6 + $0x60] sm:$0xf]
    %v2137 = vld [vmem:[#allocation6 + $0x64] sm:$0xf]
    %v2138 = vld [vmem:[#allocation6 + $0x68] sm:$0xf]
    %v2139 = vld [vmem:[#allocation6 + $0x6c] sm:$0xf]
    %v2140 = vld [vmem:[#allocation6 + $0x70] sm:$0xf]
    %v2141 = vld [vmem:[#allocation6 + $0x74] sm:$0xf]
    %v2142 = vld [vmem:[#allocation6 + $0x78] sm:$0xf]
    %v2143 = vld [vmem:[#allocation6 + $0x7c] sm:$0xf]
    %v2144 = vunpack.c.l.b16 %v1917
    %v2145 = vunpack.c.l.b16 %v1931
    %v2146 = vunpack.c.l.b16 %v1945
    %v2147 = vunpack.c.l.b16 %v1959
    %v2148 = vunpack.c.l.b16 %v1973
    %v2149 = vunpack.c.l.b16 %v1987
    %v2150 = vunpack.c.l.b16 %v2001
    %v2151 = vunpack.c.l.b16 %v2015
    %v2152 = vunpack.c.l.b16 %v2029
    %v2153 = vunpack.c.l.b16 %v2043
    %v2154 = vunpack.c.l.b16 %v2057
    %v2155 = vunpack.c.l.b16 %v2071
    %v2156 = vunpack.c.l.b16 %v2085
    %v2157 = vunpack.c.l.b16 %v2099
    %v2158 = vunpack.c.l.b16 %v2113
    %v2159 = vunpack.c.l.b16 %v2127
    %v2160 = vpack.c.b16 %v2145, %v2144
    %v2161 = vpack.c.b16 %v2147, %v2146
    %v2162 = vpack.c.b16 %v2149, %v2148
    %v2163 = vpack.c.b16 %v2151, %v2150
    %v2164 = vpack.c.b16 %v2153, %v2152
    %v2165 = vpack.c.b16 %v2155, %v2154
    %v2166 = vpack.c.b16 %v2157, %v2156
    %v2167 = vpack.c.b16 %v2159, %v2158
    %v2192 = vunpack.c.l.b16 %v2128
    %v2193 = vunpack.c.l.b16 %v2129
    %v2194 = vunpack.c.l.b16 %v2130
    %v2195 = vunpack.c.l.b16 %v2131
    %v2196 = vunpack.c.l.b16 %v2132
    %v2197 = vunpack.c.l.b16 %v2133
    %v2198 = vunpack.c.l.b16 %v2134
    %v2199 = vunpack.c.l.b16 %v2135
    %v2200 = vunpack.c.l.b16 %v2136
    %v2201 = vunpack.c.l.b16 %v2137
    %v2202 = vunpack.c.l.b16 %v2138
    %v2203 = vunpack.c.l.b16 %v2139
    %v2204 = vunpack.c.l.b16 %v2140
    %v2205 = vunpack.c.l.b16 %v2141
    %v2206 = vunpack.c.l.b16 %v2142
    %v2207 = vunpack.c.l.b16 %v2143
    %v2208 = vpack.c.b16 %v2193, %v2192
    %v2209 = vpack.c.b16 %v2195, %v2194
    %v2210 = vpack.c.b16 %v2197, %v2196
    %v2211 = vpack.c.b16 %v2199, %v2198
    %v2212 = vpack.c.b16 %v2201, %v2200
    %v2213 = vpack.c.b16 %v2203, %v2202
    %v2214 = vpack.c.b16 %v2205, %v2204
    %v2215 = vpack.c.b16 %v2207, %v2206
    %2224 = vmatprep.subr.bf16.mxu0 0
    %2225 = vmatpush1.bf16.msra.mxu0 %v2215
    %2226 = vmatprep.subr.bf16.mxu0 0
    %2227 = vmatpush1.bf16.msra.mxu0 %v2214
    %2228 = vmatprep.subr.bf16.mxu0 0
    %2229 = vmatpush1.bf16.msra.mxu0 %v2213
    %2230 = vmatprep.subr.bf16.mxu0 0
    %2231 = vmatpush1.bf16.msra.mxu0 %v2212
    %2232 = vmatprep.subr.bf16.mxu0 0
    %2233 = vmatpush1.bf16.msra.mxu0 %v2211
    %2234 = vmatprep.subr.bf16.mxu0 0
    %2235 = vmatpush1.bf16.msra.mxu0 %v2210
    %2236 = vmatprep.subr.bf16.mxu0 0
    %2237 = vmatpush1.bf16.msra.mxu0 %v2209
    %2238 = vmatprep.subr.bf16.mxu0 0
    %2239 = vmatpush1.bf16.msra.mxu0 %v2208
    %2240 = vmatprep.subr.bf16.mxu0 0
    %2241 = vmatpush2.bf16.msra.mxu0 0
    %2242 = vmatprep.subr.bf16.mxu0 0
    %2243 = vmatpush2.bf16.msra.mxu0 0
    %2244 = vmatprep.subr.bf16.mxu0 0
    %2245 = vmatpush2.bf16.msra.mxu0 0
    %2246 = vmatprep.subr.bf16.mxu0 0
    %2247 = vmatpush2.bf16.msra.mxu0 0
    %2248 = vmatprep.subr.bf16.mxu0 0
    %2249 = vmatpush2.bf16.msra.mxu0 0
    %2250 = vmatprep.subr.bf16.mxu0 0
    %2251 = vmatpush2.bf16.msra.mxu0 0
    %2252 = vmatprep.subr.bf16.mxu0 0
    %2253 = vmatpush2.bf16.msra.mxu0 0
    %2254 = vmatprep.subr.bf16.mxu0 0
    %2255 = vmatpush2.bf16.msra.mxu0 0
    %2256 = vmatprep.mubr.bf16.mxu0 0
    %2257 = vmatmul.mubr.bf16.gmra.mxu0 %v2160
    %v2258 = vpop.f32.mrf.mxu0
    %v2259 = vadd.f32 0.0, %v2258
    %v2260 = vpop.f32.mrf.mxu0
    %v2261 = vpop.f32.mrf.mxu0
    %v2262 = vadd.f32 0.0, %v2261
    %v2263 = vpop.f32.mrf.mxu0
    %2264 = vmatprep.mubr.bf16.mxu0 0
    %2265 = vmatmul.mubr.bf16.gmra.mxu0 %v2161
    %v2266 = vpop.f32.mrf.mxu0
    %v2267 = vadd.f32 0.0, %v2266
    %v2268 = vpop.f32.mrf.mxu0
    %v2269 = vpop.f32.mrf.mxu0
    %v2270 = vadd.f32 0.0, %v2269
    %v2271 = vpop.f32.mrf.mxu0
    %2272 = vmatprep.mubr.bf16.mxu0 0
    %2273 = vmatmul.mubr.bf16.gmra.mxu0 %v2162
    %v2274 = vpop.f32.mrf.mxu0
    %v2275 = vadd.f32 0.0, %v2274
    %v2276 = vpop.f32.mrf.mxu0
    %v2277 = vpop.f32.mrf.mxu0
    %v2278 = vadd.f32 0.0, %v2277
    %v2279 = vpop.f32.mrf.mxu0
    %2280 = vmatprep.mubr.bf16.mxu0 0
    %2281 = vmatmul.mubr.bf16.gmra.mxu0 %v2163
    %v2282 = vpop.f32.mrf.mxu0
    %v2283 = vadd.f32 0.0, %v2282
    %v2284 = vpop.f32.mrf.mxu0
    %v2285 = vpop.f32.mrf.mxu0
    %v2286 = vadd.f32 0.0, %v2285
    %v2287 = vpop.f32.mrf.mxu0
    %2288 = vmatprep.mubr.bf16.mxu0 0
    %2289 = vmatmul.mubr.bf16.gmra.mxu0 %v2164
    %v2290 = vpop.f32.mrf.mxu0
    %v2291 = vadd.f32 0.0, %v2290
    %v2292 = vpop.f32.mrf.mxu0
    %v2293 = vpop.f32.mrf.mxu0
    %v2294 = vadd.f32 0.0, %v2293
    %v2295 = vpop.f32.mrf.mxu0
    %2296 = vmatprep.mubr.bf16.mxu0 0
    %2297 = vmatmul.mubr.bf16.gmra.mxu0 %v2165
    %v2298 = vpop.f32.mrf.mxu0
    %v2299 = vadd.f32 0.0, %v2298
    %v2300 = vpop.f32.mrf.mxu0
    %v2301 = vpop.f32.mrf.mxu0
    %v2302 = vadd.f32 0.0, %v2301
    %v2303 = vpop.f32.mrf.mxu0
    %2304 = vmatprep.mubr.bf16.mxu0 0
    %2305 = vmatmul.mubr.bf16.gmra.mxu0 %v2166
    %v2306 = vpop.f32.mrf.mxu0
    %v2307 = vadd.f32 0.0, %v2306
    %v2308 = vpop.f32.mrf.mxu0
    %v2309 = vpop.f32.mrf.mxu0
    %v2310 = vadd.f32 0.0, %v2309
    %v2311 = vpop.f32.mrf.mxu0
    %2312 = vmatprep.mubr.bf16.mxu0 0
    %2313 = vmatmul.mubr.bf16.gmra.mxu0 %v2167
    %v2314 = vpop.f32.mrf.mxu0
    %v2315 = vadd.f32 0.0, %v2314
    %v2316 = vpop.f32.mrf.mxu0
    %v2317 = vpop.f32.mrf.mxu0
    %v2318 = vadd.f32 0.0, %v2317
    %v2319 = vpop.f32.mrf.mxu0
    %2320 = vdwg.mxu0
    %v2337 = vunpack.c.l.b16 %v1845
    %v2338 = vunpack.c.l.b16 %v1847
    %v2339 = vunpack.c.l.b16 %v1849
    %v2340 = vunpack.c.l.b16 %v1851
    %v2341 = vunpack.c.l.b16 %v1853
    %v2342 = vunpack.c.l.b16 %v1855
    %v2343 = vunpack.c.l.b16 %v1857
    %v2344 = vunpack.c.l.b16 %v1859
    %v2345 = vunpack.c.l.b16 %v1865
    %v2346 = vunpack.c.l.b16 %v1867
    %v2347 = vunpack.c.l.b16 %v1869
    %v2348 = vunpack.c.l.b16 %v1871
    %v2349 = vunpack.c.l.b16 %v1873
    %v2350 = vunpack.c.l.b16 %v1875
    %v2351 = vunpack.c.l.b16 %v1877
    %v2352 = vunpack.c.l.b16 %v1879
    %v2353 = vpack.c.b16 %v2338, %v2337
    %v2354 = vpack.c.b16 %v2340, %v2339
    %v2355 = vpack.c.b16 %v2342, %v2341
    %v2356 = vpack.c.b16 %v2344, %v2343
    %v2357 = vpack.c.b16 %v2346, %v2345
    %v2358 = vpack.c.b16 %v2348, %v2347
    %v2359 = vpack.c.b16 %v2350, %v2349
    %v2360 = vpack.c.b16 %v2352, %v2351
    %v2385 = vunpack.c.l.b16 %v1885
    %v2386 = vunpack.c.l.b16 %v1886
    %v2387 = vunpack.c.l.b16 %v1887
    %v2388 = vunpack.c.l.b16 %v1888
    %v2389 = vunpack.c.l.b16 %v1889
    %v2390 = vunpack.c.l.b16 %v1890
    %v2391 = vunpack.c.l.b16 %v1891
    %v2392 = vunpack.c.l.b16 %v1892
    %v2393 = vunpack.c.l.b16 %v1893
    %v2394 = vunpack.c.l.b16 %v1894
    %v2395 = vunpack.c.l.b16 %v1895
    %v2396 = vunpack.c.l.b16 %v1896
    %v2397 = vunpack.c.l.b16 %v1897
    %v2398 = vunpack.c.l.b16 %v1898
    %v2399 = vunpack.c.l.b16 %v1899
    %v2400 = vunpack.c.l.b16 %v1900
    %v2401 = vpack.c.b16 %v2386, %v2385
    %v2402 = vpack.c.b16 %v2388, %v2387
    %v2403 = vpack.c.b16 %v2390, %v2389
    %v2404 = vpack.c.b16 %v2392, %v2391
    %v2405 = vpack.c.b16 %v2394, %v2393
    %v2406 = vpack.c.b16 %v2396, %v2395
    %v2407 = vpack.c.b16 %v2398, %v2397
    %v2408 = vpack.c.b16 %v2400, %v2399
    %2417 = vmatprep.subr.bf16.mxu0 0
    %2418 = vmatpush1.bf16.msra.mxu0 %v2408
    %2419 = vmatprep.subr.bf16.mxu0 0
    %2420 = vmatpush1.bf16.msra.mxu0 %v2407
    %2421 = vmatprep.subr.bf16.mxu0 0
    %2422 = vmatpush1.bf16.msra.mxu0 %v2406
    %2423 = vmatprep.subr.bf16.mxu0 0
    %2424 = vmatpush1.bf16.msra.mxu0 %v2405
    %2425 = vmatprep.subr.bf16.mxu0 0
    %2426 = vmatpush1.bf16.msra.mxu0 %v2404
    %2427 = vmatprep.subr.bf16.mxu0 0
    %2428 = vmatpush1.bf16.msra.mxu0 %v2403
    %2429 = vmatprep.subr.bf16.mxu0 0
    %2430 = vmatpush1.bf16.msra.mxu0 %v2402
    %2431 = vmatprep.subr.bf16.mxu0 0
    %2432 = vmatpush1.bf16.msra.mxu0 %v2401
    %2433 = vmatprep.subr.bf16.mxu0 0
    %2434 = vmatpush2.bf16.msra.mxu0 0
    %2435 = vmatprep.subr.bf16.mxu0 0
    %2436 = vmatpush2.bf16.msra.mxu0 0
    %2437 = vmatprep.subr.bf16.mxu0 0
    %2438 = vmatpush2.bf16.msra.mxu0 0
    %2439 = vmatprep.subr.bf16.mxu0 0
    %2440 = vmatpush2.bf16.msra.mxu0 0
    %2441 = vmatprep.subr.bf16.mxu0 0
    %2442 = vmatpush2.bf16.msra.mxu0 0
    %2443 = vmatprep.subr.bf16.mxu0 0
    %2444 = vmatpush2.bf16.msra.mxu0 0
    %2445 = vmatprep.subr.bf16.mxu0 0
    %2446 = vmatpush2.bf16.msra.mxu0 0
    %2447 = vmatprep.subr.bf16.mxu0 0
    %2448 = vmatpush2.bf16.msra.mxu0 0
    %2449 = vmatprep.mubr.bf16.mxu0 0
    %2450 = vmatmul.mubr.bf16.gmra.mxu0 %v2353
    %v2451 = vpop.f32.mrf.mxu0
    %v2452 = vadd.f32 %v2259, %v2451
    %v2453 = vpop.f32.mrf.mxu0
    %v2454 = vpop.f32.mrf.mxu0
    %v2455 = vadd.f32 %v2262, %v2454
    %v2456 = vpop.f32.mrf.mxu0
    %2457 = vmatprep.mubr.bf16.mxu0 0
    %2458 = vmatmul.mubr.bf16.gmra.mxu0 %v2354
    %v2459 = vpop.f32.mrf.mxu0
    %v2460 = vadd.f32 %v2267, %v2459
    %v2461 = vpop.f32.mrf.mxu0
    %v2462 = vpop.f32.mrf.mxu0
    %v2463 = vadd.f32 %v2270, %v2462
    %v2464 = vpop.f32.mrf.mxu0
    %2465 = vmatprep.mubr.bf16.mxu0 0
    %2466 = vmatmul.mubr.bf16.gmra.mxu0 %v2355
    %v2467 = vpop.f32.mrf.mxu0
    %v2468 = vadd.f32 %v2275, %v2467
    %v2469 = vpop.f32.mrf.mxu0
    %v2470 = vpop.f32.mrf.mxu0
    %v2471 = vadd.f32 %v2278, %v2470
    %v2472 = vpop.f32.mrf.mxu0
    %2473 = vmatprep.mubr.bf16.mxu0 0
    %2474 = vmatmul.mubr.bf16.gmra.mxu0 %v2356
    %v2475 = vpop.f32.mrf.mxu0
    %v2476 = vadd.f32 %v2283, %v2475
    %v2477 = vpop.f32.mrf.mxu0
    %v2478 = vpop.f32.mrf.mxu0
    %v2479 = vadd.f32 %v2286, %v2478
    %v2480 = vpop.f32.mrf.mxu0
    %2481 = vmatprep.mubr.bf16.mxu0 0
    %2482 = vmatmul.mubr.bf16.gmra.mxu0 %v2357
    %v2483 = vpop.f32.mrf.mxu0
    %v2484 = vadd.f32 %v2291, %v2483
    %v2485 = vpop.f32.mrf.mxu0
    %v2486 = vpop.f32.mrf.mxu0
    %v2487 = vadd.f32 %v2294, %v2486
    %v2488 = vpop.f32.mrf.mxu0
    %2489 = vmatprep.mubr.bf16.mxu0 0
    %2490 = vmatmul.mubr.bf16.gmra.mxu0 %v2358
    %v2491 = vpop.f32.mrf.mxu0
    %v2492 = vadd.f32 %v2299, %v2491
    %v2493 = vpop.f32.mrf.mxu0
    %v2494 = vpop.f32.mrf.mxu0
    %v2495 = vadd.f32 %v2302, %v2494
    %v2496 = vpop.f32.mrf.mxu0
    %2497 = vmatprep.mubr.bf16.mxu0 0
    %2498 = vmatmul.mubr.bf16.gmra.mxu0 %v2359
    %v2499 = vpop.f32.mrf.mxu0
    %v2500 = vadd.f32 %v2307, %v2499
    %v2501 = vpop.f32.mrf.mxu0
    %v2502 = vpop.f32.mrf.mxu0
    %v2503 = vadd.f32 %v2310, %v2502
    %v2504 = vpop.f32.mrf.mxu0
    %2505 = vmatprep.mubr.bf16.mxu0 0
    %2506 = vmatmul.mubr.bf16.gmra.mxu0 %v2360
    %v2507 = vpop.f32.mrf.mxu0
    %v2508 = vadd.f32 %v2315, %v2507
    %v2509 = vpop.f32.mrf.mxu0
    %v2510 = vpop.f32.mrf.mxu0
    %v2511 = vadd.f32 %v2318, %v2510
    %v2512 = vpop.f32.mrf.mxu0
    %2513 = vdwg.mxu0
    %vm2530 = vcmask 1042432
    %vm2531 = vcmask 1046532
    %vm2532 = vmor %vm2530, %vm2531
    %v2533 = vrot.slane %v1845, 5
    %v2534 = vrot.slane %v2533, 4
    %v2535 = vrot.slane %v1846, 5
    %v2536 = vsel %vm2532, %v2534, %v2535
    %v2537 = vrot.slane %v1847, 5
    %v2538 = vrot.slane %v2537, 4
    %v2539 = vrot.slane %v1848, 5
    %v2540 = vsel %vm2532, %v2538, %v2539
    %v2541 = vrot.slane %v1849, 5
    %v2542 = vrot.slane %v2541, 4
    %v2543 = vrot.slane %v1850, 5
    %v2544 = vsel %vm2532, %v2542, %v2543
    %v2545 = vrot.slane %v1851, 5
    %v2546 = vrot.slane %v2545, 4
    %v2547 = vrot.slane %v1852, 5
    %v2548 = vsel %vm2532, %v2546, %v2547
    %v2549 = vrot.slane %v1853, 5
    %v2550 = vrot.slane %v2549, 4
    %v2551 = vrot.slane %v1854, 5
    %v2552 = vsel %vm2532, %v2550, %v2551
    %v2553 = vrot.slane %v1855, 5
    %v2554 = vrot.slane %v2553, 4
    %v2555 = vrot.slane %v1856, 5
    %v2556 = vsel %vm2532, %v2554, %v2555
    %v2557 = vrot.slane %v1857, 5
    %v2558 = vrot.slane %v2557, 4
    %v2559 = vrot.slane %v1858, 5
    %v2560 = vsel %vm2532, %v2558, %v2559
    %v2561 = vrot.slane %v1859, 5
    %v2562 = vrot.slane %v2561, 4
    %v2563 = vrot.slane %v1860, 5
    %v2564 = vsel %vm2532, %v2562, %v2563
    %v2565 = vrot.slane %v1865, 5
    %v2566 = vrot.slane %v2565, 4
    %v2567 = vrot.slane %v1866, 5
    %v2568 = vsel %vm2532, %v2566, %v2567
    %v2569 = vrot.slane %v1867, 5
    %v2570 = vrot.slane %v2569, 4
    %v2571 = vrot.slane %v1868, 5
    %v2572 = vsel %vm2532, %v2570, %v2571
    %v2573 = vrot.slane %v1869, 5
    %v2574 = vrot.slane %v2573, 4
    %v2575 = vrot.slane %v1870, 5
    %v2576 = vsel %vm2532, %v2574, %v2575
    %v2577 = vrot.slane %v1871, 5
    %v2578 = vrot.slane %v2577, 4
    %v2579 = vrot.slane %v1872, 5
    %v2580 = vsel %vm2532, %v2578, %v2579
    %v2581 = vrot.slane %v1873, 5
    %v2582 = vrot.slane %v2581, 4
    %v2583 = vrot.slane %v1874, 5
    %v2584 = vsel %vm2532, %v2582, %v2583
    %v2585 = vrot.slane %v1875, 5
    %v2586 = vrot.slane %v2585, 4
    %v2587 = vrot.slane %v1876, 5
    %v2588 = vsel %vm2532, %v2586, %v2587
    %v2589 = vrot.slane %v1877, 5
    %v2590 = vrot.slane %v2589, 4
    %v2591 = vrot.slane %v1878, 5
    %v2592 = vsel %vm2532, %v2590, %v2591
    %v2593 = vrot.slane %v1879, 5
    %v2594 = vrot.slane %v2593, 4
    %v2595 = vrot.slane %v1880, 5
    %v2596 = vsel %vm2532, %v2594, %v2595
    %v2597 = vld [vmem:[#allocation6 + $0x80] sm:$0xf]
    %v2598 = vld [vmem:[#allocation6 + $0x84] sm:$0xf]
    %v2599 = vld [vmem:[#allocation6 + $0x88] sm:$0xf]
    %v2600 = vld [vmem:[#allocation6 + $0x8c] sm:$0xf]
    %v2601 = vld [vmem:[#allocation6 + $0x90] sm:$0xf]
    %v2602 = vld [vmem:[#allocation6 + $0x94] sm:$0xf]
    %v2603 = vld [vmem:[#allocation6 + $0x98] sm:$0xf]
    %v2604 = vld [vmem:[#allocation6 + $0x9c] sm:$0xf]
    %v2605 = vld [vmem:[#allocation6 + $0xa0] sm:$0xf]
    %v2606 = vld [vmem:[#allocation6 + $0xa4] sm:$0xf]
    %v2607 = vld [vmem:[#allocation6 + $0xa8] sm:$0xf]
    %v2608 = vld [vmem:[#allocation6 + $0xac] sm:$0xf]
    %v2609 = vld [vmem:[#allocation6 + $0xb0] sm:$0xf]
    %v2610 = vld [vmem:[#allocation6 + $0xb4] sm:$0xf]
    %v2611 = vld [vmem:[#allocation6 + $0xb8] sm:$0xf]
    %v2612 = vld [vmem:[#allocation6 + $0xbc] sm:$0xf]
    %v2613 = vunpack.c.l.b16 %v2536
    %v2614 = vunpack.c.l.b16 %v2540
    %v2615 = vunpack.c.l.b16 %v2544
    %v2616 = vunpack.c.l.b16 %v2548
    %v2617 = vunpack.c.l.b16 %v2552
    %v2618 = vunpack.c.l.b16 %v2556
    %v2619 = vunpack.c.l.b16 %v2560
    %v2620 = vunpack.c.l.b16 %v2564
    %v2621 = vunpack.c.l.b16 %v2568
    %v2622 = vunpack.c.l.b16 %v2572
    %v2623 = vunpack.c.l.b16 %v2576
    %v2624 = vunpack.c.l.b16 %v2580
    %v2625 = vunpack.c.l.b16 %v2584
    %v2626 = vunpack.c.l.b16 %v2588
    %v2627 = vunpack.c.l.b16 %v2592
    %v2628 = vunpack.c.l.b16 %v2596
    %v2629 = vpack.c.b16 %v2614, %v2613
    %v2630 = vpack.c.b16 %v2616, %v2615
    %v2631 = vpack.c.b16 %v2618, %v2617
    %v2632 = vpack.c.b16 %v2620, %v2619
    %v2633 = vpack.c.b16 %v2622, %v2621
    %v2634 = vpack.c.b16 %v2624, %v2623
    %v2635 = vpack.c.b16 %v2626, %v2625
    %v2636 = vpack.c.b16 %v2628, %v2627
    %v2661 = vunpack.c.l.b16 %v2597
    %v2662 = vunpack.c.l.b16 %v2598
    %v2663 = vunpack.c.l.b16 %v2599
    %v2664 = vunpack.c.l.b16 %v2600
    %v2665 = vunpack.c.l.b16 %v2601
    %v2666 = vunpack.c.l.b16 %v2602
    %v2667 = vunpack.c.l.b16 %v2603
    %v2668 = vunpack.c.l.b16 %v2604
    %v2669 = vunpack.c.l.b16 %v2605
    %v2670 = vunpack.c.l.b16 %v2606
    %v2671 = vunpack.c.l.b16 %v2607
    %v2672 = vunpack.c.l.b16 %v2608
    %v2673 = vunpack.c.l.b16 %v2609
    %v2674 = vunpack.c.l.b16 %v2610
    %v2675 = vunpack.c.l.b16 %v2611
    %v2676 = vunpack.c.l.b16 %v2612
    %v2677 = vpack.c.b16 %v2662, %v2661
    %v2678 = vpack.c.b16 %v2664, %v2663
    %v2679 = vpack.c.b16 %v2666, %v2665
    %v2680 = vpack.c.b16 %v2668, %v2667
    %v2681 = vpack.c.b16 %v2670, %v2669
    %v2682 = vpack.c.b16 %v2672, %v2671
    %v2683 = vpack.c.b16 %v2674, %v2673
    %v2684 = vpack.c.b16 %v2676, %v2675
    %2693 = vmatprep.subr.bf16.mxu0 0
    %2694 = vmatpush1.bf16.msra.mxu0 %v2684
    %2695 = vmatprep.subr.bf16.mxu0 0
    %2696 = vmatpush1.bf16.msra.mxu0 %v2683
    %2697 = vmatprep.subr.bf16.mxu0 0
    %2698 = vmatpush1.bf16.msra.mxu0 %v2682
    %2699 = vmatprep.subr.bf16.mxu0 0
    %2700 = vmatpush1.bf16.msra.mxu0 %v2681
    %2701 = vmatprep.subr.bf16.mxu0 0
    %2702 = vmatpush1.bf16.msra.mxu0 %v2680
    %2703 = vmatprep.subr.bf16.mxu0 0
    %2704 = vmatpush1.bf16.msra.mxu0 %v2679
    %2705 = vmatprep.subr.bf16.mxu0 0
    %2706 = vmatpush1.bf16.msra.mxu0 %v2678
    %2707 = vmatprep.subr.bf16.mxu0 0
    %2708 = vmatpush1.bf16.msra.mxu0 %v2677
    %2709 = vmatprep.subr.bf16.mxu0 0
    %2710 = vmatpush2.bf16.msra.mxu0 0
    %2711 = vmatprep.subr.bf16.mxu0 0
    %2712 = vmatpush2.bf16.msra.mxu0 0
    %2713 = vmatprep.subr.bf16.mxu0 0
    %2714 = vmatpush2.bf16.msra.mxu0 0
    %2715 = vmatprep.subr.bf16.mxu0 0
    %2716 = vmatpush2.bf16.msra.mxu0 0
    %2717 = vmatprep.subr.bf16.mxu0 0
    %2718 = vmatpush2.bf16.msra.mxu0 0
    %2719 = vmatprep.subr.bf16.mxu0 0
    %2720 = vmatpush2.bf16.msra.mxu0 0
    %2721 = vmatprep.subr.bf16.mxu0 0
    %2722 = vmatpush2.bf16.msra.mxu0 0
    %2723 = vmatprep.subr.bf16.mxu0 0
    %2724 = vmatpush2.bf16.msra.mxu0 0
    %2725 = vmatprep.mubr.bf16.mxu0 0
    %2726 = vmatmul.mubr.bf16.gmra.mxu0 %v2629
    %v2727 = vpop.f32.mrf.mxu0
    %v2728 = vadd.f32 0.0, %v2727
    %v2729 = vpop.f32.mrf.mxu0
    %v2730 = vpop.f32.mrf.mxu0
    %v2731 = vadd.f32 0.0, %v2730
    %v2732 = vpop.f32.mrf.mxu0
    %2733 = vmatprep.mubr.bf16.mxu0 0
    %2734 = vmatmul.mubr.bf16.gmra.mxu0 %v2630
    %v2735 = vpop.f32.mrf.mxu0
    %v2736 = vadd.f32 0.0, %v2735
    %v2737 = vpop.f32.mrf.mxu0
    %v2738 = vpop.f32.mrf.mxu0
    %v2739 = vadd.f32 0.0, %v2738
    %v2740 = vpop.f32.mrf.mxu0
    %2741 = vmatprep.mubr.bf16.mxu0 0
    %2742 = vmatmul.mubr.bf16.gmra.mxu0 %v2631
    %v2743 = vpop.f32.mrf.mxu0
    %v2744 = vadd.f32 0.0, %v2743
    %v2745 = vpop.f32.mrf.mxu0
    %v2746 = vpop.f32.mrf.mxu0
    %v2747 = vadd.f32 0.0, %v2746
    %v2748 = vpop.f32.mrf.mxu0
    %2749 = vmatprep.mubr.bf16.mxu0 0
    %2750 = vmatmul.mubr.bf16.gmra.mxu0 %v2632
    %v2751 = vpop.f32.mrf.mxu0
    %v2752 = vadd.f32 0.0, %v2751
    %v2753 = vpop.f32.mrf.mxu0
    %v2754 = vpop.f32.mrf.mxu0
    %v2755 = vadd.f32 0.0, %v2754
    %v2756 = vpop.f32.mrf.mxu0
    %2757 = vmatprep.mubr.bf16.mxu0 0
    %2758 = vmatmul.mubr.bf16.gmra.mxu0 %v2633
    %v2759 = vpop.f32.mrf.mxu0
    %v2760 = vadd.f32 0.0, %v2759
    %v2761 = vpop.f32.mrf.mxu0
    %v2762 = vpop.f32.mrf.mxu0
    %v2763 = vadd.f32 0.0, %v2762
    %v2764 = vpop.f32.mrf.mxu0
    %2765 = vmatprep.mubr.bf16.mxu0 0
    %2766 = vmatmul.mubr.bf16.gmra.mxu0 %v2634
    %v2767 = vpop.f32.mrf.mxu0
    %v2768 = vadd.f32 0.0, %v2767
    %v2769 = vpop.f32.mrf.mxu0
    %v2770 = vpop.f32.mrf.mxu0
    %v2771 = vadd.f32 0.0, %v2770
    %v2772 = vpop.f32.mrf.mxu0
    %2773 = vmatprep.mubr.bf16.mxu0 0
    %2774 = vmatmul.mubr.bf16.gmra.mxu0 %v2635
    %v2775 = vpop.f32.mrf.mxu0
    %v2776 = vadd.f32 0.0, %v2775
    %v2777 = vpop.f32.mrf.mxu0
    %v2778 = vpop.f32.mrf.mxu0
    %v2779 = vadd.f32 0.0, %v2778
    %v2780 = vpop.f32.mrf.mxu0
    %2781 = vmatprep.mubr.bf16.mxu0 0
    %2782 = vmatmul.mubr.bf16.gmra.mxu0 %v2636
    %v2783 = vpop.f32.mrf.mxu0
    %v2784 = vadd.f32 0.0, %v2783
    %v2785 = vpop.f32.mrf.mxu0
    %v2786 = vpop.f32.mrf.mxu0
    %v2787 = vadd.f32 0.0, %v2786
    %v2788 = vpop.f32.mrf.mxu0
    %2789 = vdwg.mxu0
    %v2790 = vadd.f32 %v2452, %v2728
    %v2791 = vadd.f32 %v2455, %v2731
    %v2792 = vadd.f32 %v2460, %v2736
    %v2793 = vadd.f32 %v2463, %v2739
    %v2794 = vadd.f32 %v2468, %v2744
    %v2795 = vadd.f32 %v2471, %v2747
    %v2796 = vadd.f32 %v2476, %v2752
    %v2797 = vadd.f32 %v2479, %v2755
    %v2798 = vadd.f32 %v2484, %v2760
    %v2799 = vadd.f32 %v2487, %v2763
    %v2800 = vadd.f32 %v2492, %v2768
    %v2801 = vadd.f32 %v2495, %v2771
    %v2802 = vadd.f32 %v2500, %v2776
    %v2803 = vadd.f32 %v2503, %v2779
    %v2804 = vadd.f32 %v2508, %v2784
    %v2805 = vadd.f32 %v2511, %v2787
    %v2806 = vld [vmem:[#allocation6 + $0xc0] sm:$0xf]
    %v2807 = vld [vmem:[#allocation6 + $0xc4] sm:$0xf]
    %v2808 = vld [vmem:[#allocation6 + $0xc8] sm:$0xf]
    %v2809 = vld [vmem:[#allocation6 + $0xcc] sm:$0xf]
    %v2810 = vld [vmem:[#allocation6 + $0xd0] sm:$0xf]
    %v2811 = vld [vmem:[#allocation6 + $0xd4] sm:$0xf]
    %v2812 = vld [vmem:[#allocation6 + $0xd8] sm:$0xf]
    %v2813 = vld [vmem:[#allocation6 + $0xdc] sm:$0xf]
    %v2814 = vld [vmem:[#allocation6 + $0xe0] sm:$0xf]
    %v2815 = vld [vmem:[#allocation6 + $0xe4] sm:$0xf]
    %v2816 = vld [vmem:[#allocation6 + $0xe8] sm:$0xf]
    %v2817 = vld [vmem:[#allocation6 + $0xec] sm:$0xf]
    %v2818 = vld [vmem:[#allocation6 + $0xf0] sm:$0xf]
    %v2819 = vld [vmem:[#allocation6 + $0xf4] sm:$0xf]
    %v2820 = vld [vmem:[#allocation6 + $0xf8] sm:$0xf]
    %v2821 = vld [vmem:[#allocation6 + $0xfc] sm:$0xf]
    %v2824 = vunpack.c.l.b16 %v1861
    %v2825 = vunpack.c.l.b16 %v1881
    %v2826 = vpack.c.b16 %v2339, %v2338
    %v2827 = vpack.c.b16 %v2341, %v2340
    %v2828 = vpack.c.b16 %v2343, %v2342
    %v2829 = vpack.c.b16 %v2824, %v2344
    %v2830 = vpack.c.b16 %v2347, %v2346
    %v2831 = vpack.c.b16 %v2349, %v2348
    %v2832 = vpack.c.b16 %v2351, %v2350
    %v2833 = vpack.c.b16 %v2825, %v2352
    %v2858 = vunpack.c.l.b16 %v2806
    %v2859 = vunpack.c.l.b16 %v2807
    %v2860 = vunpack.c.l.b16 %v2808
    %v2861 = vunpack.c.l.b16 %v2809
    %v2862 = vunpack.c.l.b16 %v2810
    %v2863 = vunpack.c.l.b16 %v2811
    %v2864 = vunpack.c.l.b16 %v2812
    %v2865 = vunpack.c.l.b16 %v2813
    %v2866 = vunpack.c.l.b16 %v2814
    %v2867 = vunpack.c.l.b16 %v2815
    %v2868 = vunpack.c.l.b16 %v2816
    %v2869 = vunpack.c.l.b16 %v2817
    %v2870 = vunpack.c.l.b16 %v2818
    %v2871 = vunpack.c.l.b16 %v2819
    %v2872 = vunpack.c.l.b16 %v2820
    %v2873 = vunpack.c.l.b16 %v2821
    %v2874 = vpack.c.b16 %v2859, %v2858
    %v2875 = vpack.c.b16 %v2861, %v2860
    %v2876 = vpack.c.b16 %v2863, %v2862
    %v2877 = vpack.c.b16 %v2865, %v2864
    %v2878 = vpack.c.b16 %v2867, %v2866
    %v2879 = vpack.c.b16 %v2869, %v2868
    %v2880 = vpack.c.b16 %v2871, %v2870
    %v2881 = vpack.c.b16 %v2873, %v2872
    %2890 = vmatprep.subr.bf16.mxu0 0
    %2891 = vmatpush1.bf16.msra.mxu0 %v2881
    %2892 = vmatprep.subr.bf16.mxu0 0
    %2893 = vmatpush1.bf16.msra.mxu0 %v2880
    %2894 = vmatprep.subr.bf16.mxu0 0
    %2895 = vmatpush1.bf16.msra.mxu0 %v2879
    %2896 = vmatprep.subr.bf16.mxu0 0
    %2897 = vmatpush1.bf16.msra.mxu0 %v2878
    %2898 = vmatprep.subr.bf16.mxu0 0
    %2899 = vmatpush1.bf16.msra.mxu0 %v2877
    %2900 = vmatprep.subr.bf16.mxu0 0
    %2901 = vmatpush1.bf16.msra.mxu0 %v2876
    %2902 = vmatprep.subr.bf16.mxu0 0
    %2903 = vmatpush1.bf16.msra.mxu0 %v2875
    %2904 = vmatprep.subr.bf16.mxu0 0
    %2905 = vmatpush1.bf16.msra.mxu0 %v2874
    %2906 = vmatprep.subr.bf16.mxu0 0
    %2907 = vmatpush2.bf16.msra.mxu0 0
    %2908 = vmatprep.subr.bf16.mxu0 0
    %2909 = vmatpush2.bf16.msra.mxu0 0
    %2910 = vmatprep.subr.bf16.mxu0 0
    %2911 = vmatpush2.bf16.msra.mxu0 0
    %2912 = vmatprep.subr.bf16.mxu0 0
    %2913 = vmatpush2.bf16.msra.mxu0 0
    %2914 = vmatprep.subr.bf16.mxu0 0
    %2915 = vmatpush2.bf16.msra.mxu0 0
    %2916 = vmatprep.subr.bf16.mxu0 0
    %2917 = vmatpush2.bf16.msra.mxu0 0
    %2918 = vmatprep.subr.bf16.mxu0 0
    %2919 = vmatpush2.bf16.msra.mxu0 0
    %2920 = vmatprep.subr.bf16.mxu0 0
    %2921 = vmatpush2.bf16.msra.mxu0 0
    %2922 = vmatprep.mubr.bf16.mxu0 0
    %2923 = vmatmul.mubr.bf16.gmra.mxu0 %v2826
    %v2924 = vpop.f32.mrf.mxu0
    %v2925 = vadd.f32 0.0, %v2924
    %v2926 = vpop.f32.mrf.mxu0
    %v2927 = vpop.f32.mrf.mxu0
    %v2928 = vadd.f32 0.0, %v2927
    %v2929 = vpop.f32.mrf.mxu0
    %2930 = vmatprep.mubr.bf16.mxu0 0
    %2931 = vmatmul.mubr.bf16.gmra.mxu0 %v2827
    %v2932 = vpop.f32.mrf.mxu0
    %v2933 = vadd.f32 0.0, %v2932
    %v2934 = vpop.f32.mrf.mxu0
    %v2935 = vpop.f32.mrf.mxu0
    %v2936 = vadd.f32 0.0, %v2935
    %v2937 = vpop.f32.mrf.mxu0
    %2938 = vmatprep.mubr.bf16.mxu0 0
    %2939 = vmatmul.mubr.bf16.gmra.mxu0 %v2828
    %v2940 = vpop.f32.mrf.mxu0
    %v2941 = vadd.f32 0.0, %v2940
    %v2942 = vpop.f32.mrf.mxu0
    %v2943 = vpop.f32.mrf.mxu0
    %v2944 = vadd.f32 0.0, %v2943
    %v2945 = vpop.f32.mrf.mxu0
    %2946 = vmatprep.mubr.bf16.mxu0 0
    %2947 = vmatmul.mubr.bf16.gmra.mxu0 %v2829
    %v2948 = vpop.f32.mrf.mxu0
    %v2949 = vadd.f32 0.0, %v2948
    %v2950 = vpop.f32.mrf.mxu0
    %v2951 = vpop.f32.mrf.mxu0
    %v2952 = vadd.f32 0.0, %v2951
    %v2953 = vpop.f32.mrf.mxu0
    %2954 = vmatprep.mubr.bf16.mxu0 0
    %2955 = vmatmul.mubr.bf16.gmra.mxu0 %v2830
    %v2956 = vpop.f32.mrf.mxu0
    %v2957 = vadd.f32 0.0, %v2956
    %v2958 = vpop.f32.mrf.mxu0
    %v2959 = vpop.f32.mrf.mxu0
    %v2960 = vadd.f32 0.0, %v2959
    %v2961 = vpop.f32.mrf.mxu0
    %2962 = vmatprep.mubr.bf16.mxu0 0
    %2963 = vmatmul.mubr.bf16.gmra.mxu0 %v2831
    %v2964 = vpop.f32.mrf.mxu0
    %v2965 = vadd.f32 0.0, %v2964
    %v2966 = vpop.f32.mrf.mxu0
    %v2967 = vpop.f32.mrf.mxu0
    %v2968 = vadd.f32 0.0, %v2967
    %v2969 = vpop.f32.mrf.mxu0
    %2970 = vmatprep.mubr.bf16.mxu0 0
    %2971 = vmatmul.mubr.bf16.gmra.mxu0 %v2832
    %v2972 = vpop.f32.mrf.mxu0
    %v2973 = vadd.f32 0.0, %v2972
    %v2974 = vpop.f32.mrf.mxu0
    %v2975 = vpop.f32.mrf.mxu0
    %v2976 = vadd.f32 0.0, %v2975
    %v2977 = vpop.f32.mrf.mxu0
    %2978 = vmatprep.mubr.bf16.mxu0 0
    %2979 = vmatmul.mubr.bf16.gmra.mxu0 %v2833
    %v2980 = vpop.f32.mrf.mxu0
    %v2981 = vadd.f32 0.0, %v2980
    %v2982 = vpop.f32.mrf.mxu0
    %v2983 = vpop.f32.mrf.mxu0
    %v2984 = vadd.f32 0.0, %v2983
    %v2985 = vpop.f32.mrf.mxu0
    %2986 = vdwg.mxu0
    %v2987 = vadd.f32 %v2790, %v2925
    %v2988 = vadd.f32 %v2791, %v2928
    %v2989 = vadd.f32 %v2792, %v2933
    %v2990 = vadd.f32 %v2793, %v2936
    %v2991 = vadd.f32 %v2794, %v2941
    %v2992 = vadd.f32 %v2795, %v2944
    %v2993 = vadd.f32 %v2796, %v2949
    %v2994 = vadd.f32 %v2797, %v2952
    %v2995 = vadd.f32 %v2798, %v2957
    %v2996 = vadd.f32 %v2799, %v2960
    %v2997 = vadd.f32 %v2800, %v2965
    %v2998 = vadd.f32 %v2801, %v2968
    %v2999 = vadd.f32 %v2802, %v2973
    %v3000 = vadd.f32 %v2803, %v2976
    %v3001 = vadd.f32 %v2804, %v2981
    %v3002 = vadd.f32 %v2805, %v2984
    %v3004 = vshrl.u32 %v1861, 16
    %v3006 = vrot.slane %v3004, 4
    %v3007 = vshll.u32 %v1861, 16
    %v3009 = vrot.slane %v3007, 5
    %v3010 = vor.u32 %v3006, %v3009
    %v3011 = vrot.slane %v3010, 4
    %v3013 = vshll.u32 %v1862, 16
    %v3015 = vrot.slane %v3013, 5
    %v3016 = vsel %vm1903, %v3011, %v3015
    %v3018 = vshrl.u32 %v1881, 16
    %v3020 = vrot.slane %v3018, 4
    %v3021 = vshll.u32 %v1881, 16
    %v3023 = vrot.slane %v3021, 5
    %v3024 = vor.u32 %v3020, %v3023
    %v3025 = vrot.slane %v3024, 4
    %v3027 = vshll.u32 %v1882, 16
    %v3029 = vrot.slane %v3027, 5
    %v3030 = vsel %vm1903, %v3025, %v3029
    %v3031 = vld [vmem:[#allocation6 + $0x100] sm:$0xf]
    %v3032 = vld [vmem:[#allocation6 + $0x104] sm:$0xf]
    %v3033 = vld [vmem:[#allocation6 + $0x108] sm:$0xf]
    %v3034 = vld [vmem:[#allocation6 + $0x10c] sm:$0xf]
    %v3035 = vld [vmem:[#allocation6 + $0x110] sm:$0xf]
    %v3036 = vld [vmem:[#allocation6 + $0x114] sm:$0xf]
    %v3037 = vld [vmem:[#allocation6 + $0x118] sm:$0xf]
    %v3038 = vld [vmem:[#allocation6 + $0x11c] sm:$0xf]
    %v3039 = vld [vmem:[#allocation6 + $0x120] sm:$0xf]
    %v3040 = vld [vmem:[#allocation6 + $0x124] sm:$0xf]
    %v3041 = vld [vmem:[#allocation6 + $0x128] sm:$0xf]
    %v3042 = vld [vmem:[#allocation6 + $0x12c] sm:$0xf]
    %v3043 = vld [vmem:[#allocation6 + $0x130] sm:$0xf]
    %v3044 = vld [vmem:[#allocation6 + $0x134] sm:$0xf]
    %v3045 = vld [vmem:[#allocation6 + $0x138] sm:$0xf]
    %v3046 = vld [vmem:[#allocation6 + $0x13c] sm:$0xf]
    %v3047 = vunpack.c.l.b16 %v3016
    %v3048 = vunpack.c.l.b16 %v3030
    %v3049 = vpack.c.b16 %v2146, %v2145
    %v3050 = vpack.c.b16 %v2148, %v2147
    %v3051 = vpack.c.b16 %v2150, %v2149
    %v3052 = vpack.c.b16 %v3047, %v2151
    %v3053 = vpack.c.b16 %v2154, %v2153
    %v3054 = vpack.c.b16 %v2156, %v2155
    %v3055 = vpack.c.b16 %v2158, %v2157
    %v3056 = vpack.c.b16 %v3048, %v2159
    %v3081 = vunpack.c.l.b16 %v3031
    %v3082 = vunpack.c.l.b16 %v3032
    %v3083 = vunpack.c.l.b16 %v3033
    %v3084 = vunpack.c.l.b16 %v3034
    %v3085 = vunpack.c.l.b16 %v3035
    %v3086 = vunpack.c.l.b16 %v3036
    %v3087 = vunpack.c.l.b16 %v3037
    %v3088 = vunpack.c.l.b16 %v3038
    %v3089 = vunpack.c.l.b16 %v3039
    %v3090 = vunpack.c.l.b16 %v3040
    %v3091 = vunpack.c.l.b16 %v3041
    %v3092 = vunpack.c.l.b16 %v3042
    %v3093 = vunpack.c.l.b16 %v3043
    %v3094 = vunpack.c.l.b16 %v3044
    %v3095 = vunpack.c.l.b16 %v3045
    %v3096 = vunpack.c.l.b16 %v3046
    %v3097 = vpack.c.b16 %v3082, %v3081
    %v3098 = vpack.c.b16 %v3084, %v3083
    %v3099 = vpack.c.b16 %v3086, %v3085
    %v3100 = vpack.c.b16 %v3088, %v3087
    %v3101 = vpack.c.b16 %v3090, %v3089
    %v3102 = vpack.c.b16 %v3092, %v3091
    %v3103 = vpack.c.b16 %v3094, %v3093
    %v3104 = vpack.c.b16 %v3096, %v3095
    %3113 = vmatprep.subr.bf16.mxu0 0
    %3114 = vmatpush1.bf16.msra.mxu0 %v3104
    %3115 = vmatprep.subr.bf16.mxu0 0
    %3116 = vmatpush1.bf16.msra.mxu0 %v3103
    %3117 = vmatprep.subr.bf16.mxu0 0
    %3118 = vmatpush1.bf16.msra.mxu0 %v3102
    %3119 = vmatprep.subr.bf16.mxu0 0
    %3120 = vmatpush1.bf16.msra.mxu0 %v3101
    %3121 = vmatprep.subr.bf16.mxu0 0
    %3122 = vmatpush1.bf16.msra.mxu0 %v3100
    %3123 = vmatprep.subr.bf16.mxu0 0
    %3124 = vmatpush1.bf16.msra.mxu0 %v3099
    %3125 = vmatprep.subr.bf16.mxu0 0
    %3126 = vmatpush1.bf16.msra.mxu0 %v3098
    %3127 = vmatprep.subr.bf16.mxu0 0
    %3128 = vmatpush1.bf16.msra.mxu0 %v3097
    %3129 = vmatprep.subr.bf16.mxu0 0
    %3130 = vmatpush2.bf16.msra.mxu0 0
    %3131 = vmatprep.subr.bf16.mxu0 0
    %3132 = vmatpush2.bf16.msra.mxu0 0
    %3133 = vmatprep.subr.bf16.mxu0 0
    %3134 = vmatpush2.bf16.msra.mxu0 0
    %3135 = vmatprep.subr.bf16.mxu0 0
    %3136 = vmatpush2.bf16.msra.mxu0 0
    %3137 = vmatprep.subr.bf16.mxu0 0
    %3138 = vmatpush2.bf16.msra.mxu0 0
    %3139 = vmatprep.subr.bf16.mxu0 0
    %3140 = vmatpush2.bf16.msra.mxu0 0
    %3141 = vmatprep.subr.bf16.mxu0 0
    %3142 = vmatpush2.bf16.msra.mxu0 0
    %3143 = vmatprep.subr.bf16.mxu0 0
    %3144 = vmatpush2.bf16.msra.mxu0 0
    %3145 = vmatprep.mubr.bf16.mxu0 0
    %3146 = vmatmul.mubr.bf16.gmra.mxu0 %v3049
    %v3147 = vpop.f32.mrf.mxu0
    %v3148 = vadd.f32 0.0, %v3147
    %v3149 = vpop.f32.mrf.mxu0
    %v3150 = vpop.f32.mrf.mxu0
    %v3151 = vadd.f32 0.0, %v3150
    %v3152 = vpop.f32.mrf.mxu0
    %3153 = vmatprep.mubr.bf16.mxu0 0
    %3154 = vmatmul.mubr.bf16.gmra.mxu0 %v3050
    %v3155 = vpop.f32.mrf.mxu0
    %v3156 = vadd.f32 0.0, %v3155
    %v3157 = vpop.f32.mrf.mxu0
    %v3158 = vpop.f32.mrf.mxu0
    %v3159 = vadd.f32 0.0, %v3158
    %v3160 = vpop.f32.mrf.mxu0
    %3161 = vmatprep.mubr.bf16.mxu0 0
    %3162 = vmatmul.mubr.bf16.gmra.mxu0 %v3051
    %v3163 = vpop.f32.mrf.mxu0
    %v3164 = vadd.f32 0.0, %v3163
    %v3165 = vpop.f32.mrf.mxu0
    %v3166 = vpop.f32.mrf.mxu0
    %v3167 = vadd.f32 0.0, %v3166
    %v3168 = vpop.f32.mrf.mxu0
    %3169 = vmatprep.mubr.bf16.mxu0 0
    %3170 = vmatmul.mubr.bf16.gmra.mxu0 %v3052
    %v3171 = vpop.f32.mrf.mxu0
    %v3172 = vadd.f32 0.0, %v3171
    %v3173 = vpop.f32.mrf.mxu0
    %v3174 = vpop.f32.mrf.mxu0
    %v3175 = vadd.f32 0.0, %v3174
    %v3176 = vpop.f32.mrf.mxu0
    %3177 = vmatprep.mubr.bf16.mxu0 0
    %3178 = vmatmul.mubr.bf16.gmra.mxu0 %v3053
    %v3179 = vpop.f32.mrf.mxu0
    %v3180 = vadd.f32 0.0, %v3179
    %v3181 = vpop.f32.mrf.mxu0
    %v3182 = vpop.f32.mrf.mxu0
    %v3183 = vadd.f32 0.0, %v3182
    %v3184 = vpop.f32.mrf.mxu0
    %3185 = vmatprep.mubr.bf16.mxu0 0
    %3186 = vmatmul.mubr.bf16.gmra.mxu0 %v3054
    %v3187 = vpop.f32.mrf.mxu0
    %v3188 = vadd.f32 0.0, %v3187
    %v3189 = vpop.f32.mrf.mxu0
    %v3190 = vpop.f32.mrf.mxu0
    %v3191 = vadd.f32 0.0, %v3190
    %v3192 = vpop.f32.mrf.mxu0
    %3193 = vmatprep.mubr.bf16.mxu0 0
    %3194 = vmatmul.mubr.bf16.gmra.mxu0 %v3055
    %v3195 = vpop.f32.mrf.mxu0
    %v3196 = vadd.f32 0.0, %v3195
    %v3197 = vpop.f32.mrf.mxu0
    %v3198 = vpop.f32.mrf.mxu0
    %v3199 = vadd.f32 0.0, %v3198
    %v3200 = vpop.f32.mrf.mxu0
    %3201 = vmatprep.mubr.bf16.mxu0 0
    %3202 = vmatmul.mubr.bf16.gmra.mxu0 %v3056
    %v3203 = vpop.f32.mrf.mxu0
    %v3204 = vadd.f32 0.0, %v3203
    %v3205 = vpop.f32.mrf.mxu0
    %v3206 = vpop.f32.mrf.mxu0
    %v3207 = vadd.f32 0.0, %v3206
    %v3208 = vpop.f32.mrf.mxu0
    %3209 = vdwg.mxu0
    %v3210 = vadd.f32 %v2987, %v3148
    %v3211 = vadd.f32 %v2988, %v3151
    %v3212 = vadd.f32 %v2989, %v3156
    %v3213 = vadd.f32 %v2990, %v3159
    %v3214 = vadd.f32 %v2991, %v3164
    %v3215 = vadd.f32 %v2992, %v3167
    %v3216 = vadd.f32 %v2993, %v3172
    %v3217 = vadd.f32 %v2994, %v3175
    %v3218 = vadd.f32 %v2995, %v3180
    %v3219 = vadd.f32 %v2996, %v3183
    %v3220 = vadd.f32 %v2997, %v3188
    %v3221 = vadd.f32 %v2998, %v3191
    %v3222 = vadd.f32 %v2999, %v3196
    %v3223 = vadd.f32 %v3000, %v3199
    %v3224 = vadd.f32 %v3001, %v3204
    %v3225 = vadd.f32 %v3002, %v3207
    %v3228 = vrot.slane %v1861, 5
    %v3229 = vrot.slane %v3228, 4
    %v3230 = vrot.slane %v1862, 5
    %v3231 = vsel %vm2532, %v3229, %v3230
    %v3232 = vrot.slane %v1881, 5
    %v3233 = vrot.slane %v3232, 4
    %v3234 = vrot.slane %v1882, 5
    %v3235 = vsel %vm2532, %v3233, %v3234
    %v3236 = vld [vmem:[#allocation6 + $0x140] sm:$0xf]
    %v3237 = vld [vmem:[#allocation6 + $0x144] sm:$0xf]
    %v3238 = vld [vmem:[#allocation6 + $0x148] sm:$0xf]
    %v3239 = vld [vmem:[#allocation6 + $0x14c] sm:$0xf]
    %v3240 = vld [vmem:[#allocation6 + $0x150] sm:$0xf]
    %v3241 = vld [vmem:[#allocation6 + $0x154] sm:$0xf]
    %v3242 = vld [vmem:[#allocation6 + $0x158] sm:$0xf]
    %v3243 = vld [vmem:[#allocation6 + $0x15c] sm:$0xf]
    %v3244 = vld [vmem:[#allocation6 + $0x160] sm:$0xf]
    %v3245 = vld [vmem:[#allocation6 + $0x164] sm:$0xf]
    %v3246 = vld [vmem:[#allocation6 + $0x168] sm:$0xf]
    %v3247 = vld [vmem:[#allocation6 + $0x16c] sm:$0xf]
    %v3248 = vld [vmem:[#allocation6 + $0x170] sm:$0xf]
    %v3249 = vld [vmem:[#allocation6 + $0x174] sm:$0xf]
    %v3250 = vld [vmem:[#allocation6 + $0x178] sm:$0xf]
    %v3251 = vld [vmem:[#allocation6 + $0x17c] sm:$0xf]
    %v3252 = vunpack.c.l.b16 %v3231
    %v3253 = vunpack.c.l.b16 %v3235
    %v3254 = vpack.c.b16 %v2615, %v2614
    %v3255 = vpack.c.b16 %v2617, %v2616
    %v3256 = vpack.c.b16 %v2619, %v2618
    %v3257 = vpack.c.b16 %v3252, %v2620
    %v3258 = vpack.c.b16 %v2623, %v2622
    %v3259 = vpack.c.b16 %v2625, %v2624
    %v3260 = vpack.c.b16 %v2627, %v2626
    %v3261 = vpack.c.b16 %v3253, %v2628
    %v3286 = vunpack.c.l.b16 %v3236
    %v3287 = vunpack.c.l.b16 %v3237
    %v3288 = vunpack.c.l.b16 %v3238
    %v3289 = vunpack.c.l.b16 %v3239
    %v3290 = vunpack.c.l.b16 %v3240
    %v3291 = vunpack.c.l.b16 %v3241
    %v3292 = vunpack.c.l.b16 %v3242
    %v3293 = vunpack.c.l.b16 %v3243
    %v3294 = vunpack.c.l.b16 %v3244
    %v3295 = vunpack.c.l.b16 %v3245
    %v3296 = vunpack.c.l.b16 %v3246
    %v3297 = vunpack.c.l.b16 %v3247
    %v3298 = vunpack.c.l.b16 %v3248
    %v3299 = vunpack.c.l.b16 %v3249
    %v3300 = vunpack.c.l.b16 %v3250
    %v3301 = vunpack.c.l.b16 %v3251
    %v3302 = vpack.c.b16 %v3287, %v3286
    %v3303 = vpack.c.b16 %v3289, %v3288
    %v3304 = vpack.c.b16 %v3291, %v3290
    %v3305 = vpack.c.b16 %v3293, %v3292
    %v3306 = vpack.c.b16 %v3295, %v3294
    %v3307 = vpack.c.b16 %v3297, %v3296
    %v3308 = vpack.c.b16 %v3299, %v3298
    %v3309 = vpack.c.b16 %v3301, %v3300
    %3318 = vmatprep.subr.bf16.mxu0 0
    %3319 = vmatpush1.bf16.msra.mxu0 %v3309
    %3320 = vmatprep.subr.bf16.mxu0 0
    %3321 = vmatpush1.bf16.msra.mxu0 %v3308
    %3322 = vmatprep.subr.bf16.mxu0 0
    %3323 = vmatpush1.bf16.msra.mxu0 %v3307
    %3324 = vmatprep.subr.bf16.mxu0 0
    %3325 = vmatpush1.bf16.msra.mxu0 %v3306
    %3326 = vmatprep.subr.bf16.mxu0 0
    %3327 = vmatpush1.bf16.msra.mxu0 %v3305
    %3328 = vmatprep.subr.bf16.mxu0 0
    %3329 = vmatpush1.bf16.msra.mxu0 %v3304
    %3330 = vmatprep.subr.bf16.mxu0 0
    %3331 = vmatpush1.bf16.msra.mxu0 %v3303
    %3332 = vmatprep.subr.bf16.mxu0 0
    %3333 = vmatpush1.bf16.msra.mxu0 %v3302
    %3334 = vmatprep.subr.bf16.mxu0 0
    %3335 = vmatpush2.bf16.msra.mxu0 0
    %3336 = vmatprep.subr.bf16.mxu0 0
    %3337 = vmatpush2.bf16.msra.mxu0 0
    %3338 = vmatprep.subr.bf16.mxu0 0
    %3339 = vmatpush2.bf16.msra.mxu0 0
    %3340 = vmatprep.subr.bf16.mxu0 0
    %3341 = vmatpush2.bf16.msra.mxu0 0
    %3342 = vmatprep.subr.bf16.mxu0 0
    %3343 = vmatpush2.bf16.msra.mxu0 0
    %3344 = vmatprep.subr.bf16.mxu0 0
    %3345 = vmatpush2.bf16.msra.mxu0 0
    %3346 = vmatprep.subr.bf16.mxu0 0
    %3347 = vmatpush2.bf16.msra.mxu0 0
    %3348 = vmatprep.subr.bf16.mxu0 0
    %3349 = vmatpush2.bf16.msra.mxu0 0
    %3350 = vmatprep.mubr.bf16.mxu0 0
    %3351 = vmatmul.mubr.bf16.gmra.mxu0 %v3254
    %v3352 = vpop.f32.mrf.mxu0
    %v3353 = vadd.f32 0.0, %v3352
    %v3354 = vpop.f32.mrf.mxu0
    %v3355 = vpop.f32.mrf.mxu0
    %v3356 = vadd.f32 0.0, %v3355
    %v3357 = vpop.f32.mrf.mxu0
    %3358 = vmatprep.mubr.bf16.mxu0 0
    %3359 = vmatmul.mubr.bf16.gmra.mxu0 %v3255
    %v3360 = vpop.f32.mrf.mxu0
    %v3361 = vadd.f32 0.0, %v3360
    %v3362 = vpop.f32.mrf.mxu0
    %v3363 = vpop.f32.mrf.mxu0
    %v3364 = vadd.f32 0.0, %v3363
    %v3365 = vpop.f32.mrf.mxu0
    %3366 = vmatprep.mubr.bf16.mxu0 0
    %3367 = vmatmul.mubr.bf16.gmra.mxu0 %v3256
    %v3368 = vpop.f32.mrf.mxu0
    %v3369 = vadd.f32 0.0, %v3368
    %v3370 = vpop.f32.mrf.mxu0
    %v3371 = vpop.f32.mrf.mxu0
    %v3372 = vadd.f32 0.0, %v3371
    %v3373 = vpop.f32.mrf.mxu0
    %3374 = vmatprep.mubr.bf16.mxu0 0
    %3375 = vmatmul.mubr.bf16.gmra.mxu0 %v3257
    %v3376 = vpop.f32.mrf.mxu0
    %v3377 = vadd.f32 0.0, %v3376
    %v3378 = vpop.f32.mrf.mxu0
    %v3379 = vpop.f32.mrf.mxu0
    %v3380 = vadd.f32 0.0, %v3379
    %v3381 = vpop.f32.mrf.mxu0
    %3382 = vmatprep.mubr.bf16.mxu0 0
    %3383 = vmatmul.mubr.bf16.gmra.mxu0 %v3258
    %v3384 = vpop.f32.mrf.mxu0
    %v3385 = vadd.f32 0.0, %v3384
    %v3386 = vpop.f32.mrf.mxu0
    %v3387 = vpop.f32.mrf.mxu0
    %v3388 = vadd.f32 0.0, %v3387
    %v3389 = vpop.f32.mrf.mxu0
    %3390 = vmatprep.mubr.bf16.mxu0 0
    %3391 = vmatmul.mubr.bf16.gmra.mxu0 %v3259
    %v3392 = vpop.f32.mrf.mxu0
    %v3393 = vadd.f32 0.0, %v3392
    %v3394 = vpop.f32.mrf.mxu0
    %v3395 = vpop.f32.mrf.mxu0
    %v3396 = vadd.f32 0.0, %v3395
    %v3397 = vpop.f32.mrf.mxu0
    %3398 = vmatprep.mubr.bf16.mxu0 0
    %3399 = vmatmul.mubr.bf16.gmra.mxu0 %v3260
    %v3400 = vpop.f32.mrf.mxu0
    %v3401 = vadd.f32 0.0, %v3400
    %v3402 = vpop.f32.mrf.mxu0
    %v3403 = vpop.f32.mrf.mxu0
    %v3404 = vadd.f32 0.0, %v3403
    %v3405 = vpop.f32.mrf.mxu0
    %3406 = vmatprep.mubr.bf16.mxu0 0
    %3407 = vmatmul.mubr.bf16.gmra.mxu0 %v3261
    %v3408 = vpop.f32.mrf.mxu0
    %v3409 = vadd.f32 0.0, %v3408
    %v3410 = vpop.f32.mrf.mxu0
    %v3411 = vpop.f32.mrf.mxu0
    %v3412 = vadd.f32 0.0, %v3411
    %v3413 = vpop.f32.mrf.mxu0
    %3414 = vdwg.mxu0
    %v3415 = vadd.f32 %v3210, %v3353
    %v3416 = vadd.f32 %v3211, %v3356
    %v3417 = vadd.f32 %v3212, %v3361
    %v3418 = vadd.f32 %v3213, %v3364
    %v3419 = vadd.f32 %v3214, %v3369
    %v3420 = vadd.f32 %v3215, %v3372
    %v3421 = vadd.f32 %v3216, %v3377
    %v3422 = vadd.f32 %v3217, %v3380
    %v3423 = vadd.f32 %v3218, %v3385
    %v3424 = vadd.f32 %v3219, %v3388
    %v3425 = vadd.f32 %v3220, %v3393
    %v3426 = vadd.f32 %v3221, %v3396
    %v3427 = vadd.f32 %v3222, %v3401
    %v3428 = vadd.f32 %v3223, %v3404
    %v3429 = vadd.f32 %v3224, %v3409
    %v3430 = vadd.f32 %v3225, %v3412
    %v3431 = vld [vmem:[#allocation6 + $0x180] sm:$0xf]
    %v3432 = vld [vmem:[#allocation6 + $0x184] sm:$0xf]
    %v3433 = vld [vmem:[#allocation6 + $0x188] sm:$0xf]
    %v3434 = vld [vmem:[#allocation6 + $0x18c] sm:$0xf]
    %v3435 = vld [vmem:[#allocation6 + $0x190] sm:$0xf]
    %v3436 = vld [vmem:[#allocation6 + $0x194] sm:$0xf]
    %v3437 = vld [vmem:[#allocation6 + $0x198] sm:$0xf]
    %v3438 = vld [vmem:[#allocation6 + $0x19c] sm:$0xf]
    %v3439 = vld [vmem:[#allocation6 + $0x1a0] sm:$0xf]
    %v3440 = vld [vmem:[#allocation6 + $0x1a4] sm:$0xf]
    %v3441 = vld [vmem:[#allocation6 + $0x1a8] sm:$0xf]
    %v3442 = vld [vmem:[#allocation6 + $0x1ac] sm:$0xf]
    %v3443 = vld [vmem:[#allocation6 + $0x1b0] sm:$0xf]
    %v3444 = vld [vmem:[#allocation6 + $0x1b4] sm:$0xf]
    %v3445 = vld [vmem:[#allocation6 + $0x1b8] sm:$0xf]
    %v3446 = vld [vmem:[#allocation6 + $0x1bc] sm:$0xf]
    %v3449 = vunpack.c.l.b16 %v1863
    %v3450 = vunpack.c.l.b16 %v1883
    %v3451 = vpack.c.b16 %v3449, %v2824
    %v3452 = vpack.c.b16 %v3450, %v2825
    %v3471 = vunpack.c.l.b16 %v3431
    %v3472 = vunpack.c.l.b16 %v3432
    %v3473 = vunpack.c.l.b16 %v3433
    %v3474 = vunpack.c.l.b16 %v3434
    %v3475 = vunpack.c.l.b16 %v3435
    %v3476 = vunpack.c.l.b16 %v3436
    %v3477 = vunpack.c.l.b16 %v3437
    %v3478 = vunpack.c.l.b16 %v3438
    %v3479 = vunpack.c.l.b16 %v3439
    %v3480 = vunpack.c.l.b16 %v3440
    %v3481 = vunpack.c.l.b16 %v3441
    %v3482 = vunpack.c.l.b16 %v3442
    %v3483 = vunpack.c.l.b16 %v3443
    %v3484 = vunpack.c.l.b16 %v3444
    %v3485 = vunpack.c.l.b16 %v3445
    %v3486 = vunpack.c.l.b16 %v3446
    %v3487 = vpack.c.b16 %v3472, %v3471
    %v3488 = vpack.c.b16 %v3474, %v3473
    %v3489 = vpack.c.b16 %v3476, %v3475
    %v3490 = vpack.c.b16 %v3478, %v3477
    %v3491 = vpack.c.b16 %v3480, %v3479
    %v3492 = vpack.c.b16 %v3482, %v3481
    %v3493 = vpack.c.b16 %v3484, %v3483
    %v3494 = vpack.c.b16 %v3486, %v3485
    %3503 = vmatprep.subr.bf16.mxu0 0
    %3504 = vmatpush1.bf16.msra.mxu0 %v3494
    %3505 = vmatprep.subr.bf16.mxu0 0
    %3506 = vmatpush1.bf16.msra.mxu0 %v3493
    %3507 = vmatprep.subr.bf16.mxu0 0
    %3508 = vmatpush1.bf16.msra.mxu0 %v3492
    %3509 = vmatprep.subr.bf16.mxu0 0
    %3510 = vmatpush1.bf16.msra.mxu0 %v3491
    %3511 = vmatprep.subr.bf16.mxu0 0
    %3512 = vmatpush1.bf16.msra.mxu0 %v3490
    %3513 = vmatprep.subr.bf16.mxu0 0
    %3514 = vmatpush1.bf16.msra.mxu0 %v3489
    %3515 = vmatprep.subr.bf16.mxu0 0
    %3516 = vmatpush1.bf16.msra.mxu0 %v3488
    %3517 = vmatprep.subr.bf16.mxu0 0
    %3518 = vmatpush1.bf16.msra.mxu0 %v3487
    %3519 = vmatprep.subr.bf16.mxu0 0
    %3520 = vmatpush2.bf16.msra.mxu0 0
    %3521 = vmatprep.subr.bf16.mxu0 0
    %3522 = vmatpush2.bf16.msra.mxu0 0
    %3523 = vmatprep.subr.bf16.mxu0 0
    %3524 = vmatpush2.bf16.msra.mxu0 0
    %3525 = vmatprep.subr.bf16.mxu0 0
    %3526 = vmatpush2.bf16.msra.mxu0 0
    %3527 = vmatprep.subr.bf16.mxu0 0
    %3528 = vmatpush2.bf16.msra.mxu0 0
    %3529 = vmatprep.subr.bf16.mxu0 0
    %3530 = vmatpush2.bf16.msra.mxu0 0
    %3531 = vmatprep.subr.bf16.mxu0 0
    %3532 = vmatpush2.bf16.msra.mxu0 0
    %3533 = vmatprep.subr.bf16.mxu0 0
    %3534 = vmatpush2.bf16.msra.mxu0 0
    %3535 = vmatprep.mubr.bf16.mxu0 0
    %3536 = vmatmul.mubr.bf16.gmra.mxu0 %v2354
    %v3537 = vpop.f32.mrf.mxu0
    %v3538 = vadd.f32 0.0, %v3537
    %v3539 = vpop.f32.mrf.mxu0
    %v3540 = vpop.f32.mrf.mxu0
    %v3541 = vadd.f32 0.0, %v3540
    %v3542 = vpop.f32.mrf.mxu0
    %3543 = vmatprep.mubr.bf16.mxu0 0
    %3544 = vmatmul.mubr.bf16.gmra.mxu0 %v2355
    %v3545 = vpop.f32.mrf.mxu0
    %v3546 = vadd.f32 0.0, %v3545
    %v3547 = vpop.f32.mrf.mxu0
    %v3548 = vpop.f32.mrf.mxu0
    %v3549 = vadd.f32 0.0, %v3548
    %v3550 = vpop.f32.mrf.mxu0
    %3551 = vmatprep.mubr.bf16.mxu0 0
    %3552 = vmatmul.mubr.bf16.gmra.mxu0 %v2356
    %v3553 = vpop.f32.mrf.mxu0
    %v3554 = vadd.f32 0.0, %v3553
    %v3555 = vpop.f32.mrf.mxu0
    %v3556 = vpop.f32.mrf.mxu0
    %v3557 = vadd.f32 0.0, %v3556
    %v3558 = vpop.f32.mrf.mxu0
    %3559 = vmatprep.mubr.bf16.mxu0 0
    %3560 = vmatmul.mubr.bf16.gmra.mxu0 %v3451
    %v3561 = vpop.f32.mrf.mxu0
    %v3562 = vadd.f32 0.0, %v3561
    %v3563 = vpop.f32.mrf.mxu0
    %v3564 = vpop.f32.mrf.mxu0
    %v3565 = vadd.f32 0.0, %v3564
    %v3566 = vpop.f32.mrf.mxu0
    %3567 = vmatprep.mubr.bf16.mxu0 0
    %3568 = vmatmul.mubr.bf16.gmra.mxu0 %v2358
    %v3569 = vpop.f32.mrf.mxu0
    %v3570 = vadd.f32 0.0, %v3569
    %v3571 = vpop.f32.mrf.mxu0
    %v3572 = vpop.f32.mrf.mxu0
    %v3573 = vadd.f32 0.0, %v3572
    %v3574 = vpop.f32.mrf.mxu0
    %3575 = vmatprep.mubr.bf16.mxu0 0
    %3576 = vmatmul.mubr.bf16.gmra.mxu0 %v2359
    %v3577 = vpop.f32.mrf.mxu0
    %v3578 = vadd.f32 0.0, %v3577
    %v3579 = vpop.f32.mrf.mxu0
    %v3580 = vpop.f32.mrf.mxu0
    %v3581 = vadd.f32 0.0, %v3580
    %v3582 = vpop.f32.mrf.mxu0
    %3583 = vmatprep.mubr.bf16.mxu0 0
    %3584 = vmatmul.mubr.bf16.gmra.mxu0 %v2360
    %v3585 = vpop.f32.mrf.mxu0
    %v3586 = vadd.f32 0.0, %v3585
    %v3587 = vpop.f32.mrf.mxu0
    %v3588 = vpop.f32.mrf.mxu0
    %v3589 = vadd.f32 0.0, %v3588
    %v3590 = vpop.f32.mrf.mxu0
    %3591 = vmatprep.mubr.bf16.mxu0 0
    %3592 = vmatmul.mubr.bf16.gmra.mxu0 %v3452
    %v3593 = vpop.f32.mrf.mxu0
    %v3594 = vadd.f32 0.0, %v3593
    %v3595 = vpop.f32.mrf.mxu0
    %v3596 = vpop.f32.mrf.mxu0
    %v3597 = vadd.f32 0.0, %v3596
    %v3598 = vpop.f32.mrf.mxu0
    %3599 = vdwg.mxu0
    %v3600 = vadd.f32 %v3415, %v3538
    %v3601 = vadd.f32 %v3416, %v3541
    %v3602 = vadd.f32 %v3417, %v3546
    %v3603 = vadd.f32 %v3418, %v3549
    %v3604 = vadd.f32 %v3419, %v3554
    %v3605 = vadd.f32 %v3420, %v3557
    %v3606 = vadd.f32 %v3421, %v3562
    %v3607 = vadd.f32 %v3422, %v3565
    %v3608 = vadd.f32 %v3423, %v3570
    %v3609 = vadd.f32 %v3424, %v3573
    %v3610 = vadd.f32 %v3425, %v3578
    %v3611 = vadd.f32 %v3426, %v3581
    %v3612 = vadd.f32 %v3427, %v3586
    %v3613 = vadd.f32 %v3428, %v3589
    %v3614 = vadd.f32 %v3429, %v3594
    %v3615 = vadd.f32 %v3430, %v3597
    %v3617 = vshrl.u32 %v1863, 16
    %v3619 = vrot.slane %v3617, 4
    %v3620 = vshll.u32 %v1863, 16
    %v3622 = vrot.slane %v3620, 5
    %v3623 = vor.u32 %v3619, %v3622
    %v3624 = vrot.slane %v3623, 4
    %v3626 = vshll.u32 %v1864, 16
    %v3628 = vrot.slane %v3626, 5
    %v3629 = vsel %vm1903, %v3624, %v3628
    %v3631 = vshrl.u32 %v1883, 16
    %v3633 = vrot.slane %v3631, 4
    %v3634 = vshll.u32 %v1883, 16
    %v3636 = vrot.slane %v3634, 5
    %v3637 = vor.u32 %v3633, %v3636
    %v3638 = vrot.slane %v3637, 4
    %v3640 = vshll.u32 %v1884, 16
    %v3642 = vrot.slane %v3640, 5
    %v3643 = vsel %vm1903, %v3638, %v3642
    %v3644 = vld [vmem:[#allocation6 + $0x1c0] sm:$0xf]
    %v3645 = vld [vmem:[#allocation6 + $0x1c4] sm:$0xf]
    %v3646 = vld [vmem:[#allocation6 + $0x1c8] sm:$0xf]
    %v3647 = vld [vmem:[#allocation6 + $0x1cc] sm:$0xf]
    %v3648 = vld [vmem:[#allocation6 + $0x1d0] sm:$0xf]
    %v3649 = vld [vmem:[#allocation6 + $0x1d4] sm:$0xf]
    %v3650 = vld [vmem:[#allocation6 + $0x1d8] sm:$0xf]
    %v3651 = vld [vmem:[#allocation6 + $0x1dc] sm:$0xf]
    %v3652 = vld [vmem:[#allocation6 + $0x1e0] sm:$0xf]
    %v3653 = vld [vmem:[#allocation6 + $0x1e4] sm:$0xf]
    %v3654 = vld [vmem:[#allocation6 + $0x1e8] sm:$0xf]
    %v3655 = vld [vmem:[#allocation6 + $0x1ec] sm:$0xf]
    %v3656 = vld [vmem:[#allocation6 + $0x1f0] sm:$0xf]
    %v3657 = vld [vmem:[#allocation6 + $0x1f4] sm:$0xf]
    %v3658 = vld [vmem:[#allocation6 + $0x1f8] sm:$0xf]
    %v3659 = vld [vmem:[#allocation6 + $0x1fc] sm:$0xf]
    %v3660 = vunpack.c.l.b16 %v3629
    %v3661 = vunpack.c.l.b16 %v3643
    %v3662 = vpack.c.b16 %v3660, %v3047
    %v3663 = vpack.c.b16 %v3661, %v3048
    %v3682 = vunpack.c.l.b16 %v3644
    %v3683 = vunpack.c.l.b16 %v3645
    %v3684 = vunpack.c.l.b16 %v3646
    %v3685 = vunpack.c.l.b16 %v3647
    %v3686 = vunpack.c.l.b16 %v3648
    %v3687 = vunpack.c.l.b16 %v3649
    %v3688 = vunpack.c.l.b16 %v3650
    %v3689 = vunpack.c.l.b16 %v3651
    %v3690 = vunpack.c.l.b16 %v3652
    %v3691 = vunpack.c.l.b16 %v3653
    %v3692 = vunpack.c.l.b16 %v3654
    %v3693 = vunpack.c.l.b16 %v3655
    %v3694 = vunpack.c.l.b16 %v3656
    %v3695 = vunpack.c.l.b16 %v3657
    %v3696 = vunpack.c.l.b16 %v3658
    %v3697 = vunpack.c.l.b16 %v3659
    %v3698 = vpack.c.b16 %v3683, %v3682
    %v3699 = vpack.c.b16 %v3685, %v3684
    %v3700 = vpack.c.b16 %v3687, %v3686
    %v3701 = vpack.c.b16 %v3689, %v3688
    %v3702 = vpack.c.b16 %v3691, %v3690
    %v3703 = vpack.c.b16 %v3693, %v3692
    %v3704 = vpack.c.b16 %v3695, %v3694
    %v3705 = vpack.c.b16 %v3697, %v3696
    %3714 = vmatprep.subr.bf16.mxu0 0
    %3715 = vmatpush1.bf16.msra.mxu0 %v3705
    %3716 = vmatprep.subr.bf16.mxu0 0
    %3717 = vmatpush1.bf16.msra.mxu0 %v3704
    %3718 = vmatprep.subr.bf16.mxu0 0
    %3719 = vmatpush1.bf16.msra.mxu0 %v3703
    %3720 = vmatprep.subr.bf16.mxu0 0
    %3721 = vmatpush1.bf16.msra.mxu0 %v3702
    %3722 = vmatprep.subr.bf16.mxu0 0
    %3723 = vmatpush1.bf16.msra.mxu0 %v3701
    %3724 = vmatprep.subr.bf16.mxu0 0
    %3725 = vmatpush1.bf16.msra.mxu0 %v3700
    %3726 = vmatprep.subr.bf16.mxu0 0
    %3727 = vmatpush1.bf16.msra.mxu0 %v3699
    %3728 = vmatprep.subr.bf16.mxu0 0
    %3729 = vmatpush1.bf16.msra.mxu0 %v3698
    %3730 = vmatprep.subr.bf16.mxu0 0
    %3731 = vmatpush2.bf16.msra.mxu0 0
    %3732 = vmatprep.subr.bf16.mxu0 0
    %3733 = vmatpush2.bf16.msra.mxu0 0
    %3734 = vmatprep.subr.bf16.mxu0 0
    %3735 = vmatpush2.bf16.msra.mxu0 0
    %3736 = vmatprep.subr.bf16.mxu0 0
    %3737 = vmatpush2.bf16.msra.mxu0 0
    %3738 = vmatprep.subr.bf16.mxu0 0
    %3739 = vmatpush2.bf16.msra.mxu0 0
    %3740 = vmatprep.subr.bf16.mxu0 0
    %3741 = vmatpush2.bf16.msra.mxu0 0
    %3742 = vmatprep.subr.bf16.mxu0 0
    %3743 = vmatpush2.bf16.msra.mxu0 0
    %3744 = vmatprep.subr.bf16.mxu0 0
    %3745 = vmatpush2.bf16.msra.mxu0 0
    %3746 = vmatprep.mubr.bf16.mxu0 0
    %3747 = vmatmul.mubr.bf16.gmra.mxu0 %v2161
    %v3748 = vpop.f32.mrf.mxu0
    %v3749 = vadd.f32 0.0, %v3748
    %v3750 = vpop.f32.mrf.mxu0
    %v3751 = vpop.f32.mrf.mxu0
    %v3752 = vadd.f32 0.0, %v3751
    %v3753 = vpop.f32.mrf.mxu0
    %3754 = vmatprep.mubr.bf16.mxu0 0
    %3755 = vmatmul.mubr.bf16.gmra.mxu0 %v2162
    %v3756 = vpop.f32.mrf.mxu0
    %v3757 = vadd.f32 0.0, %v3756
    %v3758 = vpop.f32.mrf.mxu0
    %v3759 = vpop.f32.mrf.mxu0
    %v3760 = vadd.f32 0.0, %v3759
    %v3761 = vpop.f32.mrf.mxu0
    %3762 = vmatprep.mubr.bf16.mxu0 0
    %3763 = vmatmul.mubr.bf16.gmra.mxu0 %v2163
    %v3764 = vpop.f32.mrf.mxu0
    %v3765 = vadd.f32 0.0, %v3764
    %v3766 = vpop.f32.mrf.mxu0
    %v3767 = vpop.f32.mrf.mxu0
    %v3768 = vadd.f32 0.0, %v3767
    %v3769 = vpop.f32.mrf.mxu0
    %3770 = vmatprep.mubr.bf16.mxu0 0
    %3771 = vmatmul.mubr.bf16.gmra.mxu0 %v3662
    %v3772 = vpop.f32.mrf.mxu0
    %v3773 = vadd.f32 0.0, %v3772
    %v3774 = vpop.f32.mrf.mxu0
    %v3775 = vpop.f32.mrf.mxu0
    %v3776 = vadd.f32 0.0, %v3775
    %v3777 = vpop.f32.mrf.mxu0
    %3778 = vmatprep.mubr.bf16.mxu0 0
    %3779 = vmatmul.mubr.bf16.gmra.mxu0 %v2165
    %v3780 = vpop.f32.mrf.mxu0
    %v3781 = vadd.f32 0.0, %v3780
    %v3782 = vpop.f32.mrf.mxu0
    %v3783 = vpop.f32.mrf.mxu0
    %v3784 = vadd.f32 0.0, %v3783
    %v3785 = vpop.f32.mrf.mxu0
    %3786 = vmatprep.mubr.bf16.mxu0 0
    %3787 = vmatmul.mubr.bf16.gmra.mxu0 %v2166
    %v3788 = vpop.f32.mrf.mxu0
    %v3789 = vadd.f32 0.0, %v3788
    %v3790 = vpop.f32.mrf.mxu0
    %v3791 = vpop.f32.mrf.mxu0
    %v3792 = vadd.f32 0.0, %v3791
    %v3793 = vpop.f32.mrf.mxu0
    %3794 = vmatprep.mubr.bf16.mxu0 0
    %3795 = vmatmul.mubr.bf16.gmra.mxu0 %v2167
    %v3796 = vpop.f32.mrf.mxu0
    %v3797 = vadd.f32 0.0, %v3796
    %v3798 = vpop.f32.mrf.mxu0
    %v3799 = vpop.f32.mrf.mxu0
    %v3800 = vadd.f32 0.0, %v3799
    %v3801 = vpop.f32.mrf.mxu0
    %3802 = vmatprep.mubr.bf16.mxu0 0
    %3803 = vmatmul.mubr.bf16.gmra.mxu0 %v3663
    %v3804 = vpop.f32.mrf.mxu0
    %v3805 = vadd.f32 0.0, %v3804
    %v3806 = vpop.f32.mrf.mxu0
    %v3807 = vpop.f32.mrf.mxu0
    %v3808 = vadd.f32 0.0, %v3807
    %v3809 = vpop.f32.mrf.mxu0
    %3810 = vdwg.mxu0
    %v3811 = vadd.f32 %v3600, %v3749
    %v3812 = vadd.f32 %v3601, %v3752
    %v3813 = vadd.f32 %v3602, %v3757
    %v3814 = vadd.f32 %v3603, %v3760
    %v3815 = vadd.f32 %v3604, %v3765
    %v3816 = vadd.f32 %v3605, %v3768
    %v3817 = vadd.f32 %v3606, %v3773
    %v3818 = vadd.f32 %v3607, %v3776
    %v3819 = vadd.f32 %v3608, %v3781
    %v3820 = vadd.f32 %v3609, %v3784
    %v3821 = vadd.f32 %v3610, %v3789
    %v3822 = vadd.f32 %v3611, %v3792
    %v3823 = vadd.f32 %v3612, %v3797
    %v3824 = vadd.f32 %v3613, %v3800
    %v3825 = vadd.f32 %v3614, %v3805
    %v3826 = vadd.f32 %v3615, %v3808
    %v3829 = vrot.slane %v1863, 5
    %v3830 = vrot.slane %v3829, 4
    %v3831 = vrot.slane %v1864, 5
    %v3832 = vsel %vm2532, %v3830, %v3831
    %v3833 = vrot.slane %v1883, 5
    %v3834 = vrot.slane %v3833, 4
    %v3835 = vrot.slane %v1884, 5
    %v3836 = vsel %vm2532, %v3834, %v3835
    %v3837 = vld [vmem:[#allocation6 + $0x200] sm:$0xf]
    %v3838 = vld [vmem:[#allocation6 + $0x204] sm:$0xf]
    %v3839 = vld [vmem:[#allocation6 + $0x208] sm:$0xf]
    %v3840 = vld [vmem:[#allocation6 + $0x20c] sm:$0xf]
    %v3841 = vld [vmem:[#allocation6 + $0x210] sm:$0xf]
    %v3842 = vld [vmem:[#allocation6 + $0x214] sm:$0xf]
    %v3843 = vld [vmem:[#allocation6 + $0x218] sm:$0xf]
    %v3844 = vld [vmem:[#allocation6 + $0x21c] sm:$0xf]
    %v3845 = vld [vmem:[#allocation6 + $0x220] sm:$0xf]
    %v3846 = vld [vmem:[#allocation6 + $0x224] sm:$0xf]
    %v3847 = vld [vmem:[#allocation6 + $0x228] sm:$0xf]
    %v3848 = vld [vmem:[#allocation6 + $0x22c] sm:$0xf]
    %v3849 = vld [vmem:[#allocation6 + $0x230] sm:$0xf]
    %v3850 = vld [vmem:[#allocation6 + $0x234] sm:$0xf]
    %v3851 = vld [vmem:[#allocation6 + $0x238] sm:$0xf]
    %v3852 = vld [vmem:[#allocation6 + $0x23c] sm:$0xf]
    %v3853 = vunpack.c.l.b16 %v3832
    %v3854 = vunpack.c.l.b16 %v3836
    %v3855 = vpack.c.b16 %v3853, %v3252
    %v3856 = vpack.c.b16 %v3854, %v3253
    %v3875 = vunpack.c.l.b16 %v3837
    %v3876 = vunpack.c.l.b16 %v3838
    %v3877 = vunpack.c.l.b16 %v3839
    %v3878 = vunpack.c.l.b16 %v3840
    %v3879 = vunpack.c.l.b16 %v3841
    %v3880 = vunpack.c.l.b16 %v3842
    %v3881 = vunpack.c.l.b16 %v3843
    %v3882 = vunpack.c.l.b16 %v3844
    %v3883 = vunpack.c.l.b16 %v3845
    %v3884 = vunpack.c.l.b16 %v3846
    %v3885 = vunpack.c.l.b16 %v3847
    %v3886 = vunpack.c.l.b16 %v3848
    %v3887 = vunpack.c.l.b16 %v3849
    %v3888 = vunpack.c.l.b16 %v3850
    %v3889 = vunpack.c.l.b16 %v3851
    %v3890 = vunpack.c.l.b16 %v3852
    %v3891 = vpack.c.b16 %v3876, %v3875
    %v3892 = vpack.c.b16 %v3878, %v3877
    %v3893 = vpack.c.b16 %v3880, %v3879
    %v3894 = vpack.c.b16 %v3882, %v3881
    %v3895 = vpack.c.b16 %v3884, %v3883
    %v3896 = vpack.c.b16 %v3886, %v3885
    %v3897 = vpack.c.b16 %v3888, %v3887
    %v3898 = vpack.c.b16 %v3890, %v3889
    %3907 = vmatprep.subr.bf16.mxu0 0
    %3908 = vmatpush1.bf16.msra.mxu0 %v3898
    %3909 = vmatprep.subr.bf16.mxu0 0
    %3910 = vmatpush1.bf16.msra.mxu0 %v3897
    %3911 = vmatprep.subr.bf16.mxu0 0
    %3912 = vmatpush1.bf16.msra.mxu0 %v3896
    %3913 = vmatprep.subr.bf16.mxu0 0
    %3914 = vmatpush1.bf16.msra.mxu0 %v3895
    %3915 = vmatprep.subr.bf16.mxu0 0
    %3916 = vmatpush1.bf16.msra.mxu0 %v3894
    %3917 = vmatprep.subr.bf16.mxu0 0
    %3918 = vmatpush1.bf16.msra.mxu0 %v3893
    %3919 = vmatprep.subr.bf16.mxu0 0
    %3920 = vmatpush1.bf16.msra.mxu0 %v3892
    %3921 = vmatprep.subr.bf16.mxu0 0
    %3922 = vmatpush1.bf16.msra.mxu0 %v3891
    %3923 = vmatprep.subr.bf16.mxu0 0
    %3924 = vmatpush2.bf16.msra.mxu0 0
    %3925 = vmatprep.subr.bf16.mxu0 0
    %3926 = vmatpush2.bf16.msra.mxu0 0
    %3927 = vmatprep.subr.bf16.mxu0 0
    %3928 = vmatpush2.bf16.msra.mxu0 0
    %3929 = vmatprep.subr.bf16.mxu0 0
    %3930 = vmatpush2.bf16.msra.mxu0 0
    %3931 = vmatprep.subr.bf16.mxu0 0
    %3932 = vmatpush2.bf16.msra.mxu0 0
    %3933 = vmatprep.subr.bf16.mxu0 0
    %3934 = vmatpush2.bf16.msra.mxu0 0
    %3935 = vmatprep.subr.bf16.mxu0 0
    %3936 = vmatpush2.bf16.msra.mxu0 0
    %3937 = vmatprep.subr.bf16.mxu0 0
    %3938 = vmatpush2.bf16.msra.mxu0 0
    %3939 = vmatprep.mubr.bf16.mxu0 0
    %3940 = vmatmul.mubr.bf16.gmra.mxu0 %v2630
    %v3941 = vpop.f32.mrf.mxu0
    %v3942 = vadd.f32 0.0, %v3941
    %v3943 = vpop.f32.mrf.mxu0
    %v3944 = vpop.f32.mrf.mxu0
    %v3945 = vadd.f32 0.0, %v3944
    %v3946 = vpop.f32.mrf.mxu0
    %3947 = vmatprep.mubr.bf16.mxu0 0
    %3948 = vmatmul.mubr.bf16.gmra.mxu0 %v2631
    %v3949 = vpop.f32.mrf.mxu0
    %v3950 = vadd.f32 0.0, %v3949
    %v3951 = vpop.f32.mrf.mxu0
    %v3952 = vpop.f32.mrf.mxu0
    %v3953 = vadd.f32 0.0, %v3952
    %v3954 = vpop.f32.mrf.mxu0
    %3955 = vmatprep.mubr.bf16.mxu0 0
    %3956 = vmatmul.mubr.bf16.gmra.mxu0 %v2632
    %v3957 = vpop.f32.mrf.mxu0
    %v3958 = vadd.f32 0.0, %v3957
    %v3959 = vpop.f32.mrf.mxu0
    %v3960 = vpop.f32.mrf.mxu0
    %v3961 = vadd.f32 0.0, %v3960
    %v3962 = vpop.f32.mrf.mxu0
    %3963 = vmatprep.mubr.bf16.mxu0 0
    %3964 = vmatmul.mubr.bf16.gmra.mxu0 %v3855
    %v3965 = vpop.f32.mrf.mxu0
    %v3966 = vadd.f32 0.0, %v3965
    %v3967 = vpop.f32.mrf.mxu0
    %v3968 = vpop.f32.mrf.mxu0
    %v3969 = vadd.f32 0.0, %v3968
    %v3970 = vpop.f32.mrf.mxu0
    %3971 = vmatprep.mubr.bf16.mxu0 0
    %3972 = vmatmul.mubr.bf16.gmra.mxu0 %v2634
    %v3973 = vpop.f32.mrf.mxu0
    %v3974 = vadd.f32 0.0, %v3973
    %v3975 = vpop.f32.mrf.mxu0
    %v3976 = vpop.f32.mrf.mxu0
    %v3977 = vadd.f32 0.0, %v3976
    %v3978 = vpop.f32.mrf.mxu0
    %3979 = vmatprep.mubr.bf16.mxu0 0
    %3980 = vmatmul.mubr.bf16.gmra.mxu0 %v2635
    %v3981 = vpop.f32.mrf.mxu0
    %v3982 = vadd.f32 0.0, %v3981
    %v3983 = vpop.f32.mrf.mxu0
    %v3984 = vpop.f32.mrf.mxu0
    %v3985 = vadd.f32 0.0, %v3984
    %v3986 = vpop.f32.mrf.mxu0
    %3987 = vmatprep.mubr.bf16.mxu0 0
    %3988 = vmatmul.mubr.bf16.gmra.mxu0 %v2636
    %v3989 = vpop.f32.mrf.mxu0
    %v3990 = vadd.f32 0.0, %v3989
    %v3991 = vpop.f32.mrf.mxu0
    %v3992 = vpop.f32.mrf.mxu0
    %v3993 = vadd.f32 0.0, %v3992
    %v3994 = vpop.f32.mrf.mxu0
    %3995 = vmatprep.mubr.bf16.mxu0 0
    %3996 = vmatmul.mubr.bf16.gmra.mxu0 %v3856
    %v3997 = vpop.f32.mrf.mxu0
    %v3998 = vadd.f32 0.0, %v3997
    %v3999 = vpop.f32.mrf.mxu0
    %v4000 = vpop.f32.mrf.mxu0
    %v4001 = vadd.f32 0.0, %v4000
    %v4002 = vpop.f32.mrf.mxu0
    %4003 = vdwg.mxu0
    %v4004 = vadd.f32 %v3811, %v3942
    %v4005 = vadd.f32 %v3812, %v3945
    %v4006 = vadd.f32 %v3813, %v3950
    %v4007 = vadd.f32 %v3814, %v3953
    %v4008 = vadd.f32 %v3815, %v3958
    %v4009 = vadd.f32 %v3816, %v3961
    %v4010 = vadd.f32 %v3817, %v3966
    %v4011 = vadd.f32 %v3818, %v3969
    %v4012 = vadd.f32 %v3819, %v3974
    %v4013 = vadd.f32 %v3820, %v3977
    %v4014 = vadd.f32 %v3821, %v3982
    %v4015 = vadd.f32 %v3822, %v3985
    %v4016 = vadd.f32 %v3823, %v3990
    %v4017 = vadd.f32 %v3824, %v3993
    %v4018 = vadd.f32 %v3825, %v3998
    %v4019 = vadd.f32 %v3826, %v4001
    %v4020 = vld [vmem:[%s5] sm:$0x1]
    %v4022 = vlaneseq
    %v4023 = vshrl.u32 %v4022, 7
    %v4024 = vsub.s32 0, %v4023
    %v4025 = vrot.slane %v4020, %v4024
    %v4027 = vmul.f32 %v4004, %v4025
    %v4028 = vmul.f32 %v4005, %v4025
    %v4029 = vmul.f32 %v4006, %v4025
    %v4030 = vmul.f32 %v4007, %v4025
    %v4031 = vmul.f32 %v4008, %v4025
    %v4032 = vmul.f32 %v4009, %v4025
    %v4033 = vmul.f32 %v4010, %v4025
    %v4034 = vmul.f32 %v4011, %v4025
    %v4035 = vmul.f32 %v4012, %v4025
    %v4036 = vmul.f32 %v4013, %v4025
    %v4037 = vmul.f32 %v4014, %v4025
    %v4038 = vmul.f32 %v4015, %v4025
    %v4039 = vmul.f32 %v4016, %v4025
    %v4040 = vmul.f32 %v4017, %v4025
    %v4041 = vmul.f32 %v4018, %v4025
    %v4042 = vmul.f32 %v4019, %v4025
    %v4043 = vld [vmem:[%s6] sm:$0x1]
    %v4045 = vlaneseq
    %v4046 = vshrl.u32 %v4045, 7
    %v4047 = vsub.s32 0, %v4046
    %v4048 = vrot.slane %v4043, %v4047
    %v4050 = vadd.f32 %v4027, %v4048
    %v4051 = vadd.f32 %v4028, %v4048
    %v4052 = vadd.f32 %v4029, %v4048
    %v4053 = vadd.f32 %v4030, %v4048
    %v4054 = vadd.f32 %v4031, %v4048
    %v4055 = vadd.f32 %v4032, %v4048
    %v4056 = vadd.f32 %v4033, %v4048
    %v4057 = vadd.f32 %v4034, %v4048
    %v4058 = vadd.f32 %v4035, %v4048
    %v4059 = vadd.f32 %v4036, %v4048
    %v4060 = vadd.f32 %v4037, %v4048
    %v4061 = vadd.f32 %v4038, %v4048
    %v4062 = vadd.f32 %v4039, %v4048
    %v4063 = vadd.f32 %v4040, %v4048
    %v4064 = vadd.f32 %v4041, %v4048
    %v4065 = vadd.f32 %v4042, %v4048
    %v4066 = vmax.f32 %v4050, 0.0
    %v4067 = vmax.f32 %v4051, 0.0
    %v4068 = vmax.f32 %v4052, 0.0
    %v4069 = vmax.f32 %v4053, 0.0
    %v4070 = vmax.f32 %v4054, 0.0
    %v4071 = vmax.f32 %v4055, 0.0
    %v4072 = vmax.f32 %v4056, 0.0
    %v4073 = vmax.f32 %v4057, 0.0
    %v4074 = vmax.f32 %v4058, 0.0
    %v4075 = vmax.f32 %v4059, 0.0
    %v4076 = vmax.f32 %v4060, 0.0
    %v4077 = vmax.f32 %v4061, 0.0
    %v4078 = vmax.f32 %v4062, 0.0
    %v4079 = vmax.f32 %v4063, 0.0
    %v4080 = vmax.f32 %v4064, 0.0
    %v4081 = vmax.f32 %v4065, 0.0
    %v4082 = vmax.f32 %v4066, %v4067
    %v4083 = vmax.f32 %v4068, %v4069
    %v4084 = vmax.f32 %v4070, %v4071
    %v4085 = vmax.f32 %v4072, %v4073
    %v4086 = vmax.f32 %v4074, %v4075
    %v4087 = vmax.f32 %v4076, %v4077
    %v4088 = vmax.f32 %v4078, %v4079
    %v4089 = vmax.f32 %v4080, %v4081
    %v4098 = vcombine.high %v4082, %v4082
    %v4100 = vunpack.c.l.s4 1983009808
    %v4101 = vunpack.c.0.s8 %v4100
    %v4102 = vlaneseq
    %v4103 = vshrl.u32 %v4102, 7
    %v4104 = vsub.s32 %v4101, %v4103
    %v4105 = vrot.slane %v4082, %v4104
    %v4107 = vunpack.c.l.s4 1983009808
    %v4108 = vunpack.c.0.s8 %v4107
    %v4109 = vlaneseq
    %v4110 = vshrl.u32 %v4109, 7
    %v4111 = vsub.s32 %v4108, %v4110
    %v4112 = vrot.slane %v4098, %v4111
    %v4113 = vcombine.high %v4105, %v4105
    %v4114 = vcombine.high %v4112, %v4112
    %v4115 = vcombine.high %v4083, %v4083
    %v4117 = vunpack.c.l.s4 1983009808
    %v4118 = vunpack.c.0.s8 %v4117
    %v4119 = vlaneseq
    %v4120 = vshrl.u32 %v4119, 7
    %v4121 = vsub.s32 %v4118, %v4120
    %v4122 = vrot.slane %v4083, %v4121
    %v4124 = vunpack.c.l.s4 1983009808
    %v4125 = vunpack.c.0.s8 %v4124
    %v4126 = vlaneseq
    %v4127 = vshrl.u32 %v4126, 7
    %v4128 = vsub.s32 %v4125, %v4127
    %v4129 = vrot.slane %v4115, %v4128
    %v4130 = vcombine.high %v4122, %v4122
    %v4131 = vcombine.high %v4129, %v4129
    %v4132 = vcombine.high %v4084, %v4084
    %v4134 = vunpack.c.l.s4 1983009808
    %v4135 = vunpack.c.0.s8 %v4134
    %v4136 = vlaneseq
    %v4137 = vshrl.u32 %v4136, 7
    %v4138 = vsub.s32 %v4135, %v4137
    %v4139 = vrot.slane %v4084, %v4138
    %v4141 = vunpack.c.l.s4 1983009808
    %v4142 = vunpack.c.0.s8 %v4141
    %v4143 = vlaneseq
    %v4144 = vshrl.u32 %v4143, 7
    %v4145 = vsub.s32 %v4142, %v4144
    %v4146 = vrot.slane %v4132, %v4145
    %v4147 = vcombine.high %v4139, %v4139
    %v4148 = vcombine.high %v4146, %v4146
    %v4149 = vcombine.high %v4085, %v4085
    %v4151 = vunpack.c.l.s4 1983009808
    %v4152 = vunpack.c.0.s8 %v4151
    %v4153 = vlaneseq
    %v4154 = vshrl.u32 %v4153, 7
    %v4155 = vsub.s32 %v4152, %v4154
    %v4156 = vrot.slane %v4085, %v4155
    %v4158 = vunpack.c.l.s4 1983009808
    %v4159 = vunpack.c.0.s8 %v4158
    %v4160 = vlaneseq
    %v4161 = vshrl.u32 %v4160, 7
    %v4162 = vsub.s32 %v4159, %v4161
    %v4163 = vrot.slane %v4149, %v4162
    %v4164 = vcombine.high %v4156, %v4156
    %v4165 = vcombine.high %v4163, %v4163
    %v4166 = vcombine.high %v4086, %v4086
    %v4168 = vunpack.c.l.s4 1983009808
    %v4169 = vunpack.c.0.s8 %v4168
    %v4170 = vlaneseq
    %v4171 = vshrl.u32 %v4170, 7
    %v4172 = vsub.s32 %v4169, %v4171
    %v4173 = vrot.slane %v4086, %v4172
    %v4175 = vunpack.c.l.s4 1983009808
    %v4176 = vunpack.c.0.s8 %v4175
    %v4177 = vlaneseq
    %v4178 = vshrl.u32 %v4177, 7
    %v4179 = vsub.s32 %v4176, %v4178
    %v4180 = vrot.slane %v4166, %v4179
    %v4181 = vcombine.high %v4173, %v4173
    %v4182 = vcombine.high %v4180, %v4180
    %v4183 = vcombine.high %v4087, %v4087
    %v4185 = vunpack.c.l.s4 1983009808
    %v4186 = vunpack.c.0.s8 %v4185
    %v4187 = vlaneseq
    %v4188 = vshrl.u32 %v4187, 7
    %v4189 = vsub.s32 %v4186, %v4188
    %v4190 = vrot.slane %v4087, %v4189
    %v4192 = vunpack.c.l.s4 1983009808
    %v4193 = vunpack.c.0.s8 %v4192
    %v4194 = vlaneseq
    %v4195 = vshrl.u32 %v4194, 7
    %v4196 = vsub.s32 %v4193, %v4195
    %v4197 = vrot.slane %v4183, %v4196
    %v4198 = vcombine.high %v4190, %v4190
    %v4199 = vcombine.high %v4197, %v4197
    %v4200 = vcombine.high %v4088, %v4088
    %v4202 = vunpack.c.l.s4 1983009808
    %v4203 = vunpack.c.0.s8 %v4202
    %v4204 = vlaneseq
    %v4205 = vshrl.u32 %v4204, 7
    %v4206 = vsub.s32 %v4203, %v4205
    %v4207 = vrot.slane %v4088, %v4206
    %v4209 = vunpack.c.l.s4 1983009808
    %v4210 = vunpack.c.0.s8 %v4209
    %v4211 = vlaneseq
    %v4212 = vshrl.u32 %v4211, 7
    %v4213 = vsub.s32 %v4210, %v4212
    %v4214 = vrot.slane %v4200, %v4213
    %v4215 = vcombine.high %v4207, %v4207
    %v4216 = vcombine.high %v4214, %v4214
    %v4217 = vcombine.high %v4089, %v4089
    %v4219 = vunpack.c.l.s4 1983009808
    %v4220 = vunpack.c.0.s8 %v4219
    %v4221 = vlaneseq
    %v4222 = vshrl.u32 %v4221, 7
    %v4223 = vsub.s32 %v4220, %v4222
    %v4224 = vrot.slane %v4089, %v4223
    %v4226 = vunpack.c.l.s4 1983009808
    %v4227 = vunpack.c.0.s8 %v4226
    %v4228 = vlaneseq
    %v4229 = vshrl.u32 %v4228, 7
    %v4230 = vsub.s32 %v4227, %v4229
    %v4231 = vrot.slane %v4217, %v4230
    %v4232 = vcombine.high %v4224, %v4224
    %v4233 = vcombine.high %v4231, %v4231
    %v4266 = vrot.slane %v4105, 7
    %v4267 = vrot.slane %v4266, 2
    %v4268 = vrot.slane %v4113, 7
    %v4269 = vrot.slane %v4268, 2
    %v4270 = vrot.slane %v4112, 7
    %v4271 = vrot.slane %v4270, 2
    %v4272 = vrot.slane %v4114, 7
    %v4273 = vrot.slane %v4272, 2
    %v4274 = vrot.slane %v4122, 7
    %v4275 = vrot.slane %v4274, 2
    %v4276 = vrot.slane %v4130, 7
    %v4277 = vrot.slane %v4276, 2
    %v4278 = vrot.slane %v4129, 7
    %v4279 = vrot.slane %v4278, 2
    %v4280 = vrot.slane %v4131, 7
    %v4281 = vrot.slane %v4280, 2
    %v4282 = vrot.slane %v4139, 7
    %v4283 = vrot.slane %v4282, 2
    %v4284 = vrot.slane %v4147, 7
    %v4285 = vrot.slane %v4284, 2
    %v4286 = vrot.slane %v4146, 7
    %v4287 = vrot.slane %v4286, 2
    %v4288 = vrot.slane %v4148, 7
    %v4289 = vrot.slane %v4288, 2
    %v4290 = vrot.slane %v4156, 7
    %v4291 = vrot.slane %v4290, 2
    %v4292 = vrot.slane %v4164, 7
    %v4293 = vrot.slane %v4292, 2
    %v4294 = vrot.slane %v4163, 7
    %v4295 = vrot.slane %v4294, 2
    %v4296 = vrot.slane %v4165, 7
    %v4297 = vrot.slane %v4296, 2
    %v4298 = vrot.slane %v4173, 7
    %v4299 = vrot.slane %v4298, 2
    %v4300 = vrot.slane %v4181, 7
    %v4301 = vrot.slane %v4300, 2
    %v4302 = vrot.slane %v4180, 7
    %v4303 = vrot.slane %v4302, 2
    %v4304 = vrot.slane %v4182, 7
    %v4305 = vrot.slane %v4304, 2
    %v4306 = vrot.slane %v4190, 7
    %v4307 = vrot.slane %v4306, 2
    %v4308 = vrot.slane %v4198, 7
    %v4309 = vrot.slane %v4308, 2
    %v4310 = vrot.slane %v4197, 7
    %v4311 = vrot.slane %v4310, 2
    %v4312 = vrot.slane %v4199, 7
    %v4313 = vrot.slane %v4312, 2
    %v4314 = vrot.slane %v4207, 7
    %v4315 = vrot.slane %v4314, 2
    %v4316 = vrot.slane %v4215, 7
    %v4317 = vrot.slane %v4316, 2
    %v4318 = vrot.slane %v4214, 7
    %v4319 = vrot.slane %v4318, 2
    %v4320 = vrot.slane %v4216, 7
    %v4321 = vrot.slane %v4320, 2
    %v4322 = vrot.slane %v4224, 7
    %v4323 = vrot.slane %v4322, 2
    %v4324 = vrot.slane %v4232, 7
    %v4325 = vrot.slane %v4324, 2
    %v4326 = vrot.slane %v4231, 7
    %v4327 = vrot.slane %v4326, 2
    %v4328 = vrot.slane %v4233, 7
    %v4329 = vrot.slane %v4328, 2
    %v4362 = vmax.f32 %v4105, %v4267
    %v4363 = vmax.f32 %v4113, %v4269
    %v4364 = vmax.f32 %v4112, %v4271
    %v4365 = vmax.f32 %v4114, %v4273
    %v4366 = vmax.f32 %v4122, %v4275
    %v4367 = vmax.f32 %v4130, %v4277
    %v4368 = vmax.f32 %v4129, %v4279
    %v4369 = vmax.f32 %v4131, %v4281
    %v4370 = vmax.f32 %v4139, %v4283
    %v4371 = vmax.f32 %v4147, %v4285
    %v4372 = vmax.f32 %v4146, %v4287
    %v4373 = vmax.f32 %v4148, %v4289
    %v4374 = vmax.f32 %v4156, %v4291
    %v4375 = vmax.f32 %v4164, %v4293
    %v4376 = vmax.f32 %v4163, %v4295
    %v4377 = vmax.f32 %v4165, %v4297
    %v4378 = vmax.f32 %v4173, %v4299
    %v4379 = vmax.f32 %v4181, %v4301
    %v4380 = vmax.f32 %v4180, %v4303
    %v4381 = vmax.f32 %v4182, %v4305
    %v4382 = vmax.f32 %v4190, %v4307
    %v4383 = vmax.f32 %v4198, %v4309
    %v4384 = vmax.f32 %v4197, %v4311
    %v4385 = vmax.f32 %v4199, %v4313
    %v4386 = vmax.f32 %v4207, %v4315
    %v4387 = vmax.f32 %v4215, %v4317
    %v4388 = vmax.f32 %v4214, %v4319
    %v4389 = vmax.f32 %v4216, %v4321
    %v4390 = vmax.f32 %v4224, %v4323
    %v4391 = vmax.f32 %v4232, %v4325
    %v4392 = vmax.f32 %v4231, %v4327
    %v4393 = vmax.f32 %v4233, %v4329
    %v4394 = vpack.c.bf16 %v4362, %v4362
    %v4395 = vpack.c.bf16 %v4363, %v4363
    %v4396 = vpack.c.bf16 %v4364, %v4364
    %v4397 = vpack.c.bf16 %v4365, %v4365
    %v4398 = vpack.c.bf16 %v4366, %v4366
    %v4399 = vpack.c.bf16 %v4367, %v4367
    %v4400 = vpack.c.bf16 %v4368, %v4368
    %v4401 = vpack.c.bf16 %v4369, %v4369
    %v4402 = vpack.c.bf16 %v4370, %v4370
    %v4403 = vpack.c.bf16 %v4371, %v4371
    %v4404 = vpack.c.bf16 %v4372, %v4372
    %v4405 = vpack.c.bf16 %v4373, %v4373
    %v4406 = vpack.c.bf16 %v4374, %v4374
    %v4407 = vpack.c.bf16 %v4375, %v4375
    %v4408 = vpack.c.bf16 %v4376, %v4376
    %v4409 = vpack.c.bf16 %v4377, %v4377
    %v4410 = vpack.c.bf16 %v4378, %v4378
    %v4411 = vpack.c.bf16 %v4379, %v4379
    %v4412 = vpack.c.bf16 %v4380, %v4380
    %v4413 = vpack.c.bf16 %v4381, %v4381
    %v4414 = vpack.c.bf16 %v4382, %v4382
    %v4415 = vpack.c.bf16 %v4383, %v4383
    %v4416 = vpack.c.bf16 %v4384, %v4384
    %v4417 = vpack.c.bf16 %v4385, %v4385
    %v4418 = vpack.c.bf16 %v4386, %v4386
    %v4419 = vpack.c.bf16 %v4387, %v4387
    %v4420 = vpack.c.bf16 %v4388, %v4388
    %v4421 = vpack.c.bf16 %v4389, %v4389
    %v4422 = vpack.c.bf16 %v4390, %v4390
    %v4423 = vpack.c.bf16 %v4391, %v4391
    %v4424 = vpack.c.bf16 %v4392, %v4392
    %v4425 = vpack.c.bf16 %v4393, %v4393
    %v4459 = vunpack.c.l.s4 1983009808
    %v4460 = vunpack.c.0.s8 %v4459
    %v4461 = vlaneseq
    %v4462 = vshrl.u32 %v4461, 7
    %v4463 = vsub.s32 %v4460, %v4462
    %v4464 = vrot.slane %v4394, %v4463
    %v4466 = vunpack.c.l.s4 1983009808
    %v4467 = vunpack.c.0.s8 %v4466
    %v4468 = vlaneseq
    %v4469 = vshrl.u32 %v4468, 7
    %v4470 = vsub.s32 %v4467, %v4469
    %v4471 = vrot.slane %v4395, %v4470
    %v4473 = vunpack.c.l.s4 1983009808
    %v4474 = vunpack.c.0.s8 %v4473
    %v4475 = vlaneseq
    %v4476 = vshrl.u32 %v4475, 7
    %v4477 = vsub.s32 %v4474, %v4476
    %v4478 = vrot.slane %v4396, %v4477
    %v4480 = vunpack.c.l.s4 1983009808
    %v4481 = vunpack.c.0.s8 %v4480
    %v4482 = vlaneseq
    %v4483 = vshrl.u32 %v4482, 7
    %v4484 = vsub.s32 %v4481, %v4483
    %v4485 = vrot.slane %v4397, %v4484
    %v4487 = vunpack.c.l.s4 1983009808
    %v4488 = vunpack.c.0.s8 %v4487
    %v4489 = vlaneseq
    %v4490 = vshrl.u32 %v4489, 7
    %v4491 = vsub.s32 %v4488, %v4490
    %v4492 = vrot.slane %v4398, %v4491
    %v4494 = vunpack.c.l.s4 1983009808
    %v4495 = vunpack.c.0.s8 %v4494
    %v4496 = vlaneseq
    %v4497 = vshrl.u32 %v4496, 7
    %v4498 = vsub.s32 %v4495, %v4497
    %v4499 = vrot.slane %v4399, %v4498
    %v4501 = vunpack.c.l.s4 1983009808
    %v4502 = vunpack.c.0.s8 %v4501
    %v4503 = vlaneseq
    %v4504 = vshrl.u32 %v4503, 7
    %v4505 = vsub.s32 %v4502, %v4504
    %v4506 = vrot.slane %v4400, %v4505
    %v4508 = vunpack.c.l.s4 1983009808
    %v4509 = vunpack.c.0.s8 %v4508
    %v4510 = vlaneseq
    %v4511 = vshrl.u32 %v4510, 7
    %v4512 = vsub.s32 %v4509, %v4511
    %v4513 = vrot.slane %v4401, %v4512
    %v4515 = vunpack.c.l.s4 1983009808
    %v4516 = vunpack.c.0.s8 %v4515
    %v4517 = vlaneseq
    %v4518 = vshrl.u32 %v4517, 7
    %v4519 = vsub.s32 %v4516, %v4518
    %v4520 = vrot.slane %v4402, %v4519
    %v4522 = vunpack.c.l.s4 1983009808
    %v4523 = vunpack.c.0.s8 %v4522
    %v4524 = vlaneseq
    %v4525 = vshrl.u32 %v4524, 7
    %v4526 = vsub.s32 %v4523, %v4525
    %v4527 = vrot.slane %v4403, %v4526
    %v4529 = vunpack.c.l.s4 1983009808
    %v4530 = vunpack.c.0.s8 %v4529
    %v4531 = vlaneseq
    %v4532 = vshrl.u32 %v4531, 7
    %v4533 = vsub.s32 %v4530, %v4532
    %v4534 = vrot.slane %v4404, %v4533
    %v4536 = vunpack.c.l.s4 1983009808
    %v4537 = vunpack.c.0.s8 %v4536
    %v4538 = vlaneseq
    %v4539 = vshrl.u32 %v4538, 7
    %v4540 = vsub.s32 %v4537, %v4539
    %v4541 = vrot.slane %v4405, %v4540
    %v4543 = vunpack.c.l.s4 1983009808
    %v4544 = vunpack.c.0.s8 %v4543
    %v4545 = vlaneseq
    %v4546 = vshrl.u32 %v4545, 7
    %v4547 = vsub.s32 %v4544, %v4546
    %v4548 = vrot.slane %v4406, %v4547
    %v4550 = vunpack.c.l.s4 1983009808
    %v4551 = vunpack.c.0.s8 %v4550
    %v4552 = vlaneseq
    %v4553 = vshrl.u32 %v4552, 7
    %v4554 = vsub.s32 %v4551, %v4553
    %v4555 = vrot.slane %v4407, %v4554
    %v4557 = vunpack.c.l.s4 1983009808
    %v4558 = vunpack.c.0.s8 %v4557
    %v4559 = vlaneseq
    %v4560 = vshrl.u32 %v4559, 7
    %v4561 = vsub.s32 %v4558, %v4560
    %v4562 = vrot.slane %v4408, %v4561
    %v4564 = vunpack.c.l.s4 1983009808
    %v4565 = vunpack.c.0.s8 %v4564
    %v4566 = vlaneseq
    %v4567 = vshrl.u32 %v4566, 7
    %v4568 = vsub.s32 %v4565, %v4567
    %v4569 = vrot.slane %v4409, %v4568
    %v4571 = vunpack.c.l.s4 1983009808
    %v4572 = vunpack.c.0.s8 %v4571
    %v4573 = vlaneseq
    %v4574 = vshrl.u32 %v4573, 7
    %v4575 = vsub.s32 %v4572, %v4574
    %v4576 = vrot.slane %v4410, %v4575
    %v4578 = vunpack.c.l.s4 1983009808
    %v4579 = vunpack.c.0.s8 %v4578
    %v4580 = vlaneseq
    %v4581 = vshrl.u32 %v4580, 7
    %v4582 = vsub.s32 %v4579, %v4581
    %v4583 = vrot.slane %v4411, %v4582
    %v4585 = vunpack.c.l.s4 1983009808
    %v4586 = vunpack.c.0.s8 %v4585
    %v4587 = vlaneseq
    %v4588 = vshrl.u32 %v4587, 7
    %v4589 = vsub.s32 %v4586, %v4588
    %v4590 = vrot.slane %v4412, %v4589
    %v4592 = vunpack.c.l.s4 1983009808
    %v4593 = vunpack.c.0.s8 %v4592
    %v4594 = vlaneseq
    %v4595 = vshrl.u32 %v4594, 7
    %v4596 = vsub.s32 %v4593, %v4595
    %v4597 = vrot.slane %v4413, %v4596
    %v4599 = vunpack.c.l.s4 1983009808
    %v4600 = vunpack.c.0.s8 %v4599
    %v4601 = vlaneseq
    %v4602 = vshrl.u32 %v4601, 7
    %v4603 = vsub.s32 %v4600, %v4602
    %v4604 = vrot.slane %v4414, %v4603
    %v4606 = vunpack.c.l.s4 1983009808
    %v4607 = vunpack.c.0.s8 %v4606
    %v4608 = vlaneseq
    %v4609 = vshrl.u32 %v4608, 7
    %v4610 = vsub.s32 %v4607, %v4609
    %v4611 = vrot.slane %v4415, %v4610
    %v4613 = vunpack.c.l.s4 1983009808
    %v4614 = vunpack.c.0.s8 %v4613
    %v4615 = vlaneseq
    %v4616 = vshrl.u32 %v4615, 7
    %v4617 = vsub.s32 %v4614, %v4616
    %v4618 = vrot.slane %v4416, %v4617
    %v4620 = vunpack.c.l.s4 1983009808
    %v4621 = vunpack.c.0.s8 %v4620
    %v4622 = vlaneseq
    %v4623 = vshrl.u32 %v4622, 7
    %v4624 = vsub.s32 %v4621, %v4623
    %v4625 = vrot.slane %v4417, %v4624
    %v4627 = vunpack.c.l.s4 1983009808
    %v4628 = vunpack.c.0.s8 %v4627
    %v4629 = vlaneseq
    %v4630 = vshrl.u32 %v4629, 7
    %v4631 = vsub.s32 %v4628, %v4630
    %v4632 = vrot.slane %v4418, %v4631
    %v4634 = vunpack.c.l.s4 1983009808
    %v4635 = vunpack.c.0.s8 %v4634
    %v4636 = vlaneseq
    %v4637 = vshrl.u32 %v4636, 7
    %v4638 = vsub.s32 %v4635, %v4637
    %v4639 = vrot.slane %v4419, %v4638
    %v4641 = vunpack.c.l.s4 1983009808
    %v4642 = vunpack.c.0.s8 %v4641
    %v4643 = vlaneseq
    %v4644 = vshrl.u32 %v4643, 7
    %v4645 = vsub.s32 %v4642, %v4644
    %v4646 = vrot.slane %v4420, %v4645
    %v4648 = vunpack.c.l.s4 1983009808
    %v4649 = vunpack.c.0.s8 %v4648
    %v4650 = vlaneseq
    %v4651 = vshrl.u32 %v4650, 7
    %v4652 = vsub.s32 %v4649, %v4651
    %v4653 = vrot.slane %v4421, %v4652
    %v4655 = vunpack.c.l.s4 1983009808
    %v4656 = vunpack.c.0.s8 %v4655
    %v4657 = vlaneseq
    %v4658 = vshrl.u32 %v4657, 7
    %v4659 = vsub.s32 %v4656, %v4658
    %v4660 = vrot.slane %v4422, %v4659
    %v4662 = vunpack.c.l.s4 1983009808
    %v4663 = vunpack.c.0.s8 %v4662
    %v4664 = vlaneseq
    %v4665 = vshrl.u32 %v4664, 7
    %v4666 = vsub.s32 %v4663, %v4665
    %v4667 = vrot.slane %v4423, %v4666
    %v4669 = vunpack.c.l.s4 1983009808
    %v4670 = vunpack.c.0.s8 %v4669
    %v4671 = vlaneseq
    %v4672 = vshrl.u32 %v4671, 7
    %v4673 = vsub.s32 %v4670, %v4672
    %v4674 = vrot.slane %v4424, %v4673
    %v4676 = vunpack.c.l.s4 1983009808
    %v4677 = vunpack.c.0.s8 %v4676
    %v4678 = vlaneseq
    %v4679 = vshrl.u32 %v4678, 7
    %v4680 = vsub.s32 %v4677, %v4679
    %v4681 = vrot.slane %v4425, %v4680
    %v4683 = vunpack.c.l.s4 1983009808
    %v4684 = vunpack.c.0.s8 %v4683
    %v4685 = vlaneseq
    %v4686 = vshrl.u32 %v4685, 7
    %v4687 = vsub.s32 %v4684, %v4686
    %v4688 = vrot.slane %v4464, %v4687
    %v4690 = vunpack.c.l.s4 1983009808
    %v4691 = vunpack.c.0.s8 %v4690
    %v4692 = vlaneseq
    %v4693 = vshrl.u32 %v4692, 7
    %v4694 = vsub.s32 %v4691, %v4693
    %v4695 = vrot.slane %v4471, %v4694
    %v4697 = vunpack.c.l.s4 1983009808
    %v4698 = vunpack.c.0.s8 %v4697
    %v4699 = vlaneseq
    %v4700 = vshrl.u32 %v4699, 7
    %v4701 = vsub.s32 %v4698, %v4700
    %v4702 = vrot.slane %v4478, %v4701
    %v4704 = vunpack.c.l.s4 1983009808
    %v4705 = vunpack.c.0.s8 %v4704
    %v4706 = vlaneseq
    %v4707 = vshrl.u32 %v4706, 7
    %v4708 = vsub.s32 %v4705, %v4707
    %v4709 = vrot.slane %v4485, %v4708
    %v4711 = vunpack.c.l.s4 1983009808
    %v4712 = vunpack.c.0.s8 %v4711
    %v4713 = vlaneseq
    %v4714 = vshrl.u32 %v4713, 7
    %v4715 = vsub.s32 %v4712, %v4714
    %v4716 = vrot.slane %v4492, %v4715
    %v4718 = vunpack.c.l.s4 1983009808
    %v4719 = vunpack.c.0.s8 %v4718
    %v4720 = vlaneseq
    %v4721 = vshrl.u32 %v4720, 7
    %v4722 = vsub.s32 %v4719, %v4721
    %v4723 = vrot.slane %v4499, %v4722
    %v4725 = vunpack.c.l.s4 1983009808
    %v4726 = vunpack.c.0.s8 %v4725
    %v4727 = vlaneseq
    %v4728 = vshrl.u32 %v4727, 7
    %v4729 = vsub.s32 %v4726, %v4728
    %v4730 = vrot.slane %v4506, %v4729
    %v4732 = vunpack.c.l.s4 1983009808
    %v4733 = vunpack.c.0.s8 %v4732
    %v4734 = vlaneseq
    %v4735 = vshrl.u32 %v4734, 7
    %v4736 = vsub.s32 %v4733, %v4735
    %v4737 = vrot.slane %v4513, %v4736
    %v4739 = vunpack.c.l.s4 1983009808
    %v4740 = vunpack.c.0.s8 %v4739
    %v4741 = vlaneseq
    %v4742 = vshrl.u32 %v4741, 7
    %v4743 = vsub.s32 %v4740, %v4742
    %v4744 = vrot.slane %v4520, %v4743
    %v4746 = vunpack.c.l.s4 1983009808
    %v4747 = vunpack.c.0.s8 %v4746
    %v4748 = vlaneseq
    %v4749 = vshrl.u32 %v4748, 7
    %v4750 = vsub.s32 %v4747, %v4749
    %v4751 = vrot.slane %v4527, %v4750
    %v4753 = vunpack.c.l.s4 1983009808
    %v4754 = vunpack.c.0.s8 %v4753
    %v4755 = vlaneseq
    %v4756 = vshrl.u32 %v4755, 7
    %v4757 = vsub.s32 %v4754, %v4756
    %v4758 = vrot.slane %v4534, %v4757
    %v4760 = vunpack.c.l.s4 1983009808
    %v4761 = vunpack.c.0.s8 %v4760
    %v4762 = vlaneseq
    %v4763 = vshrl.u32 %v4762, 7
    %v4764 = vsub.s32 %v4761, %v4763
    %v4765 = vrot.slane %v4541, %v4764
    %v4767 = vunpack.c.l.s4 1983009808
    %v4768 = vunpack.c.0.s8 %v4767
    %v4769 = vlaneseq
    %v4770 = vshrl.u32 %v4769, 7
    %v4771 = vsub.s32 %v4768, %v4770
    %v4772 = vrot.slane %v4548, %v4771
    %v4774 = vunpack.c.l.s4 1983009808
    %v4775 = vunpack.c.0.s8 %v4774
    %v4776 = vlaneseq
    %v4777 = vshrl.u32 %v4776, 7
    %v4778 = vsub.s32 %v4775, %v4777
    %v4779 = vrot.slane %v4555, %v4778
    %v4781 = vunpack.c.l.s4 1983009808
    %v4782 = vunpack.c.0.s8 %v4781
    %v4783 = vlaneseq
    %v4784 = vshrl.u32 %v4783, 7
    %v4785 = vsub.s32 %v4782, %v4784
    %v4786 = vrot.slane %v4562, %v4785
    %v4788 = vunpack.c.l.s4 1983009808
    %v4789 = vunpack.c.0.s8 %v4788
    %v4790 = vlaneseq
    %v4791 = vshrl.u32 %v4790, 7
    %v4792 = vsub.s32 %v4789, %v4791
    %v4793 = vrot.slane %v4569, %v4792
    %v4795 = vunpack.c.l.s4 1983009808
    %v4796 = vunpack.c.0.s8 %v4795
    %v4797 = vlaneseq
    %v4798 = vshrl.u32 %v4797, 7
    %v4799 = vsub.s32 %v4796, %v4798
    %v4800 = vrot.slane %v4576, %v4799
    %v4802 = vunpack.c.l.s4 1983009808
    %v4803 = vunpack.c.0.s8 %v4802
    %v4804 = vlaneseq
    %v4805 = vshrl.u32 %v4804, 7
    %v4806 = vsub.s32 %v4803, %v4805
    %v4807 = vrot.slane %v4583, %v4806
    %v4809 = vunpack.c.l.s4 1983009808
    %v4810 = vunpack.c.0.s8 %v4809
    %v4811 = vlaneseq
    %v4812 = vshrl.u32 %v4811, 7
    %v4813 = vsub.s32 %v4810, %v4812
    %v4814 = vrot.slane %v4590, %v4813
    %v4816 = vunpack.c.l.s4 1983009808
    %v4817 = vunpack.c.0.s8 %v4816
    %v4818 = vlaneseq
    %v4819 = vshrl.u32 %v4818, 7
    %v4820 = vsub.s32 %v4817, %v4819
    %v4821 = vrot.slane %v4597, %v4820
    %v4823 = vunpack.c.l.s4 1983009808
    %v4824 = vunpack.c.0.s8 %v4823
    %v4825 = vlaneseq
    %v4826 = vshrl.u32 %v4825, 7
    %v4827 = vsub.s32 %v4824, %v4826
    %v4828 = vrot.slane %v4604, %v4827
    %v4830 = vunpack.c.l.s4 1983009808
    %v4831 = vunpack.c.0.s8 %v4830
    %v4832 = vlaneseq
    %v4833 = vshrl.u32 %v4832, 7
    %v4834 = vsub.s32 %v4831, %v4833
    %v4835 = vrot.slane %v4611, %v4834
    %v4837 = vunpack.c.l.s4 1983009808
    %v4838 = vunpack.c.0.s8 %v4837
    %v4839 = vlaneseq
    %v4840 = vshrl.u32 %v4839, 7
    %v4841 = vsub.s32 %v4838, %v4840
    %v4842 = vrot.slane %v4618, %v4841
    %v4844 = vunpack.c.l.s4 1983009808
    %v4845 = vunpack.c.0.s8 %v4844
    %v4846 = vlaneseq
    %v4847 = vshrl.u32 %v4846, 7
    %v4848 = vsub.s32 %v4845, %v4847
    %v4849 = vrot.slane %v4625, %v4848
    %v4851 = vunpack.c.l.s4 1983009808
    %v4852 = vunpack.c.0.s8 %v4851
    %v4853 = vlaneseq
    %v4854 = vshrl.u32 %v4853, 7
    %v4855 = vsub.s32 %v4852, %v4854
    %v4856 = vrot.slane %v4632, %v4855
    %v4858 = vunpack.c.l.s4 1983009808
    %v4859 = vunpack.c.0.s8 %v4858
    %v4860 = vlaneseq
    %v4861 = vshrl.u32 %v4860, 7
    %v4862 = vsub.s32 %v4859, %v4861
    %v4863 = vrot.slane %v4639, %v4862
    %v4865 = vunpack.c.l.s4 1983009808
    %v4866 = vunpack.c.0.s8 %v4865
    %v4867 = vlaneseq
    %v4868 = vshrl.u32 %v4867, 7
    %v4869 = vsub.s32 %v4866, %v4868
    %v4870 = vrot.slane %v4646, %v4869
    %v4872 = vunpack.c.l.s4 1983009808
    %v4873 = vunpack.c.0.s8 %v4872
    %v4874 = vlaneseq
    %v4875 = vshrl.u32 %v4874, 7
    %v4876 = vsub.s32 %v4873, %v4875
    %v4877 = vrot.slane %v4653, %v4876
    %v4879 = vunpack.c.l.s4 1983009808
    %v4880 = vunpack.c.0.s8 %v4879
    %v4881 = vlaneseq
    %v4882 = vshrl.u32 %v4881, 7
    %v4883 = vsub.s32 %v4880, %v4882
    %v4884 = vrot.slane %v4660, %v4883
    %v4886 = vunpack.c.l.s4 1983009808
    %v4887 = vunpack.c.0.s8 %v4886
    %v4888 = vlaneseq
    %v4889 = vshrl.u32 %v4888, 7
    %v4890 = vsub.s32 %v4887, %v4889
    %v4891 = vrot.slane %v4667, %v4890
    %v4893 = vunpack.c.l.s4 1983009808
    %v4894 = vunpack.c.0.s8 %v4893
    %v4895 = vlaneseq
    %v4896 = vshrl.u32 %v4895, 7
    %v4897 = vsub.s32 %v4894, %v4896
    %v4898 = vrot.slane %v4674, %v4897
    %v4900 = vunpack.c.l.s4 1983009808
    %v4901 = vunpack.c.0.s8 %v4900
    %v4902 = vlaneseq
    %v4903 = vshrl.u32 %v4902, 7
    %v4904 = vsub.s32 %v4901, %v4903
    %v4905 = vrot.slane %v4681, %v4904
    %v4906 = vunpack.c.l.b16 %v4688
    %v4907 = vunpack.c.l.b16 %v4695
    %v4908 = vunpack.c.l.b16 %v4702
    %v4909 = vunpack.c.l.b16 %v4709
    %v4910 = vunpack.c.l.b16 %v4716
    %v4911 = vunpack.c.l.b16 %v4723
    %v4912 = vunpack.c.l.b16 %v4730
    %v4913 = vunpack.c.l.b16 %v4737
    %v4914 = vunpack.c.l.b16 %v4744
    %v4915 = vunpack.c.l.b16 %v4751
    %v4916 = vunpack.c.l.b16 %v4758
    %v4917 = vunpack.c.l.b16 %v4765
    %v4918 = vunpack.c.l.b16 %v4772
    %v4919 = vunpack.c.l.b16 %v4779
    %v4920 = vunpack.c.l.b16 %v4786
    %v4921 = vunpack.c.l.b16 %v4793
    %v4922 = vunpack.c.l.b16 %v4800
    %v4923 = vunpack.c.l.b16 %v4807
    %v4924 = vunpack.c.l.b16 %v4814
    %v4925 = vunpack.c.l.b16 %v4821
    %v4926 = vunpack.c.l.b16 %v4828
    %v4927 = vunpack.c.l.b16 %v4835
    %v4928 = vunpack.c.l.b16 %v4842
    %v4929 = vunpack.c.l.b16 %v4849
    %v4930 = vunpack.c.l.b16 %v4856
    %v4931 = vunpack.c.l.b16 %v4863
    %v4932 = vunpack.c.l.b16 %v4870
    %v4933 = vunpack.c.l.b16 %v4877
    %v4934 = vunpack.c.l.b16 %v4884
    %v4935 = vunpack.c.l.b16 %v4891
    %v4936 = vunpack.c.l.b16 %v4898
    %v4937 = vunpack.c.l.b16 %v4905
    %v4938 = vrot.slane %v4907, 7
    %vm4939 = vcmask 1041409
    %v4940 = vsel %vm4939, %v4938, %v4906
    %v4941 = vrot.slane %v4908, 6
    %vm4942 = vcmask 1042434
    %v4943 = vsel %vm4942, %v4941, %v4940
    %v4944 = vrot.slane %v4909, 5
    %vm4945 = vcmask 1043459
    %v4946 = vsel %vm4945, %v4944, %v4943
    %v4947 = vrot.slane %v4911, 7
    %v4948 = vsel %vm4939, %v4947, %v4910
    %v4949 = vrot.slane %v4912, 6
    %v4950 = vsel %vm4942, %v4949, %v4948
    %v4951 = vrot.slane %v4913, 5
    %v4952 = vsel %vm4945, %v4951, %v4950
    %v4953 = vrot.slane %v4915, 7
    %v4954 = vsel %vm4939, %v4953, %v4914
    %v4955 = vrot.slane %v4916, 6
    %v4956 = vsel %vm4942, %v4955, %v4954
    %v4957 = vrot.slane %v4917, 5
    %v4958 = vsel %vm4945, %v4957, %v4956
    %v4959 = vrot.slane %v4919, 7
    %v4960 = vsel %vm4939, %v4959, %v4918
    %v4961 = vrot.slane %v4920, 6
    %v4962 = vsel %vm4942, %v4961, %v4960
    %v4963 = vrot.slane %v4921, 5
    %v4964 = vsel %vm4945, %v4963, %v4962
    %v4965 = vrot.slane %v4923, 7
    %v4966 = vsel %vm4939, %v4965, %v4922
    %v4967 = vrot.slane %v4924, 6
    %v4968 = vsel %vm4942, %v4967, %v4966
    %v4969 = vrot.slane %v4925, 5
    %v4970 = vsel %vm4945, %v4969, %v4968
    %v4971 = vrot.slane %v4927, 7
    %v4972 = vsel %vm4939, %v4971, %v4926
    %v4973 = vrot.slane %v4928, 6
    %v4974 = vsel %vm4942, %v4973, %v4972
    %v4975 = vrot.slane %v4929, 5
    %v4976 = vsel %vm4945, %v4975, %v4974
    %v4977 = vrot.slane %v4931, 7
    %v4978 = vsel %vm4939, %v4977, %v4930
    %v4979 = vrot.slane %v4932, 6
    %v4980 = vsel %vm4942, %v4979, %v4978
    %v4981 = vrot.slane %v4933, 5
    %v4982 = vsel %vm4945, %v4981, %v4980
    %v4983 = vrot.slane %v4935, 7
    %v4984 = vsel %vm4939, %v4983, %v4934
    %v4985 = vrot.slane %v4936, 6
    %v4986 = vsel %vm4942, %v4985, %v4984
    %v4987 = vrot.slane %v4937, 5
    %v4988 = vsel %vm4945, %v4987, %v4986
    %v4989 = vpack.c.b16 %v4946, %v4946
    %v4990 = vpack.c.b16 %v4952, %v4952
    %v4991 = vpack.c.b16 %v4958, %v4958
    %v4992 = vpack.c.b16 %v4964, %v4964
    %v4993 = vpack.c.b16 %v4970, %v4970
    %v4994 = vpack.c.b16 %v4976, %v4976
    %v4995 = vpack.c.b16 %v4982, %v4982
    %v4996 = vpack.c.b16 %v4988, %v4988
    %v4998 = vunpack.c.l.s4 1983009808
    %v4999 = vunpack.c.0.s8 %v4998
    %v5000 = vlaneseq
    %v5001 = vshrl.u32 %v5000, 7
    %v5002 = vsub.s32 %v4999, %v5001
    %v5003 = vrot.slane %v4989, %v5002
    %v5005 = vunpack.c.l.s4 1983009808
    %v5006 = vunpack.c.0.s8 %v5005
    %v5007 = vlaneseq
    %v5008 = vshrl.u32 %v5007, 7
    %v5009 = vsub.s32 %v5006, %v5008
    %v5010 = vrot.slane %v4990, %v5009
    %v5012 = vunpack.c.l.s4 1983009808
    %v5013 = vunpack.c.0.s8 %v5012
    %v5014 = vlaneseq
    %v5015 = vshrl.u32 %v5014, 7
    %v5016 = vsub.s32 %v5013, %v5015
    %v5017 = vrot.slane %v4991, %v5016
    %v5019 = vunpack.c.l.s4 1983009808
    %v5020 = vunpack.c.0.s8 %v5019
    %v5021 = vlaneseq
    %v5022 = vshrl.u32 %v5021, 7
    %v5023 = vsub.s32 %v5020, %v5022
    %v5024 = vrot.slane %v4992, %v5023
    %v5026 = vunpack.c.l.s4 1983009808
    %v5027 = vunpack.c.0.s8 %v5026
    %v5028 = vlaneseq
    %v5029 = vshrl.u32 %v5028, 7
    %v5030 = vsub.s32 %v5027, %v5029
    %v5031 = vrot.slane %v4993, %v5030
    %v5033 = vunpack.c.l.s4 1983009808
    %v5034 = vunpack.c.0.s8 %v5033
    %v5035 = vlaneseq
    %v5036 = vshrl.u32 %v5035, 7
    %v5037 = vsub.s32 %v5034, %v5036
    %v5038 = vrot.slane %v4994, %v5037
    %v5040 = vunpack.c.l.s4 1983009808
    %v5041 = vunpack.c.0.s8 %v5040
    %v5042 = vlaneseq
    %v5043 = vshrl.u32 %v5042, 7
    %v5044 = vsub.s32 %v5041, %v5043
    %v5045 = vrot.slane %v4995, %v5044
    %v5047 = vunpack.c.l.s4 1983009808
    %v5048 = vunpack.c.0.s8 %v5047
    %v5049 = vlaneseq
    %v5050 = vshrl.u32 %v5049, 7
    %v5051 = vsub.s32 %v5048, %v5050
    %v5052 = vrot.slane %v4996, %v5051
    %5061 = vst [vmem:[#allocation8] sm:$0x3] %v5003
    %5062 = vst [vmem:[#allocation8 + $0x2] sm:$0x3] %v5010
    %5063 = vst [vmem:[#allocation8 + $0x4] sm:$0x3] %v5017
    %5064 = vst [vmem:[#allocation8 + $0x6] sm:$0x3] %v5024
    %5065 = vst [vmem:[#allocation8 + $0x8] sm:$0x3] %v5031
    %5066 = vst [vmem:[#allocation8 + $0xa] sm:$0x3] %v5038
    %5067 = vst [vmem:[#allocation8 + $0xc] sm:$0x3] %v5045
    %5068 = vst [vmem:[#allocation8 + $0xe] sm:$0x3] %v5052
    // Predicated region
    $region38: #{tpu_custom_call.1} parent=1 // pred_check
      _
    $region39: #{tpu_custom_call.1} parent=1 // pred_check_branch
      %5070 = sbr.rel (0) target = $region41
    $region40: #{tpu_custom_call.1} parent=1 // pred_region
      %s5072 = ssub.s32 256, 256
      %5073 = vsyncadd [#allocation5], %s5072
      %s5074 = sshll.u32 [#allocation8], 4
      %s5075 = int_to_ptr.vmem [resolvable:$true] %s5074
      %5080 = dma.vmem_to_hbm [thread:$0]  %s5075, 256, %s7, [#allocation5], 32, 32, 2
    $region41: #{tpu_custom_call.1} parent=1 // pred_fallthru
      _
    // Predicated region
    $region42: #{tpu_custom_call.1} parent=1 // pred_check
      _
    $region43: #{tpu_custom_call.1} parent=1 // pred_check_branch
      %5082 = sbr.rel (0) target = $region45
    $region44: #{tpu_custom_call.1} parent=1 // pred_region
      %5083 = dma.done [#allocation5], 256
    $region45: #{tpu_custom_call.1} parent=1 // pred_fallthru
      _
    %5084 = vsyncpa [#allocation4], 1
    %5085 = vsyncpa [#allocation7], 1
    %5086 = vsyncpa [#allocation5], 1

</llo_original>
